<compile_context>
chip_gen: v7x
topology: tpu7x:2x2x1
jax: 0.10.0
libtpu: 0.0.40
codegen_flags: <defaults>
</compile_context>

<pallas_src>
import math

import jax
import jax.numpy as jnp
from jax.experimental import pallas as pl
from jax.experimental.pallas import tpu as pltpu

# ----------------------------- static hyper-params -----------------------------
B = 2            # batch
T = 16           # number of notes T_n
BT = B * T       # folded batch*time rows
H = 64           # encoder hidden size
H_OUT = 32       # hparams['hidden_size'] (out_proj target)
OUT_PAD = 128    # lane-dense padded output width (sliced back to H_OUT in wrapper)
L = 2            # enc_layers
HEADS = 2        # num_heads
DH = H // HEADS
K = 9            # enc_ffn_kernel_size (padding='SAME')
PAD = K // 2
FF = 4 * H       # FFN filter size
GLIDE_VOCAB = 3              # len(glide_types)=2, + padding idx 0
GLIDE_SCALE = 11.313708      # glide_embed_scale
EMBED_SCALE = math.sqrt(H)   # FastSpeech2Encoder.embed_scale (midi embed only)
XSCALE = math.sqrt(H)        # legacy RelPositionalEncoding xscale
LN_EPS = 1e-5
NEG_INF = -1e30              # finite mask value (score add happens in f32 -> safe)

# slab-layout invariants (qkv' block and every conv tap are exactly FF=256 lanes wide)
assert FF == 4 * H and 2 * H + HEADS * H == FF
LAYER_W_ROWS = (1 + K) * H   # rows per layer in the bf16 weight slab


# --------------------------------- the kernel ----------------------------------
def melody_encoder_kernel(
    acts_ref,    # (2+K, BT, H) f32: [x0, nonpad_full, tap_mask_0..tap_mask_{K-1}]
    mask_ref,    # (BT, BT)     f32 additive attention mask (0 or NEG_INF)
    ln_ref,      # (5L+2, H)    f32: per layer [ln1_g, ln1_b, ln2_g, ln2_b, ffn2_b]; then lnf_g, lnf_b
    fb_ref,      # (L+1, FF)    f32: conv_b per layer (K**-0.5 folded), last row = padded out_proj bias
    w256_ref,    # (L*(1+K)*H, 256) bf16: per layer [qkv_fold (H,4H), conv tap j=0..K-1 (H,FF)]
    ffn2_ref,    # (L, FF, H)   bf16
    outw_ref,    # (H, OUT_PAD) bf16 (zero-padded out_proj weight)
    o_ref,       # (BT, OUT_PAD) f32
):
  f32 = jnp.float32
  bf16 = jnp.bfloat16

  def layer_norm(v, g, b):
    mu = jnp.mean(v, axis=-1, keepdims=True)
    var = jnp.mean((v - mu) ** 2, axis=-1, keepdims=True)
    return (v - mu) * jax.lax.rsqrt(var + LN_EPS) * g + b

  x = acts_ref[0]          # (BT, H) pre-embedded input (scales/pos folded in wrapper)
  nonpad = acts_ref[1]     # (BT, H) pre-broadcast non-padding mask
  mask = mask_ref[...]     # (BT, BT)

  for l in range(L):
    pbase = l * 5
    wbase = l * LAYER_W_ROWS

    # ======================= EncSALayer: self-attention =======================
    res = x
    xn = layer_norm(x, ln_ref[pbase:pbase + 1, :], ln_ref[pbase + 1:pbase + 2, :])
    # fused projection: [Q | K | V@Wout_h0 | V@Wout_h1]  -> exactly 256 output lanes
    proj = jnp.dot(xn.astype(bf16), w256_ref[wbase:wbase + H, :],
                   preferred_element_type=f32)                       # (BT, 4H)
    projb = proj.astype(bf16)                                        # cast once
    attn = None
    for h in range(HEADS):
      qh = projb[:, h * DH:(h + 1) * DH]                             # (BT, DH), DH**-0.5 folded
      kh = projb[:, H + h * DH:H + (h + 1) * DH]                     # (BT, DH)
      s = jax.lax.dot_general(qh, kh, (((1,), (1,)), ((), ())),
                              preferred_element_type=f32) + mask     # (BT, BT)
      s = s - jnp.max(s, axis=-1, keepdims=True)
      p = jnp.exp(s)
      p = p * pl.reciprocal(jnp.sum(p, axis=-1, keepdims=True), approx=True)
      vh = projb[:, 2 * H + h * H:2 * H + (h + 1) * H]               # (BT, H): V already through out-proj
      c = jnp.dot(p.astype(bf16), vh, preferred_element_type=f32)    # (BT, H)
      attn = c if h == 0 else attn + c
    x = (res + attn) * nonpad

    # ======================= EncSALayer: conv FFN =============================
    res = x
    xn = layer_norm(x, ln_ref[pbase + 2:pbase + 3, :], ln_ref[pbase + 3:pbase + 4, :])
    cbase = wbase + H
    # center tap (always valid, no shift / mask needed)
    acc = jnp.dot(xn.astype(bf16),
                  w256_ref[cbase + PAD * H:cbase + (PAD + 1) * H, :],
                  preferred_element_type=f32)                        # (BT, FF)
    # remaining taps: sublane roll (XLU) + precomputed validity mask, accumulated matmuls
    for j in range(K):
      if j == PAD:
        continue
      shifted = pltpu.roll(xn, (PAD - j) % BT, 0)    # shifted[r] = xn[r + j - PAD]  (wrapped)
      shifted = shifted * acts_ref[2 + j]            # zero SAME-padding / cross-batch rows
      acc = acc + jnp.dot(shifted.astype(bf16),
                          w256_ref[cbase + j * H:cbase + (j + 1) * H, :],
                          preferred_element_type=f32)
    acc = acc + fb_ref[l:l + 1, :]
    # TODO(synk): torch F.gelu is exact erf; tanh-approx GELU used here (erf lowering in
    # Mosaic is not guaranteed) -- accepted tolerance ~1e-3 on the FFN activations.
    acc = jax.nn.gelu(acc, approximate=True)
    y = jnp.dot(acc.astype(bf16), ffn2_ref[l],
                preferred_element_type=f32) + ln_ref[pbase + 4:pbase + 5, :]
    x = (res + y) * nonpad

  # ---- final LayerNorm (use_last_norm=True) + padding mask ----
  x = layer_norm(x, ln_ref[5 * L:5 * L + 1, :], ln_ref[5 * L + 1:5 * L + 2, :]) * nonpad

  # ---- MelodyEncoder.out_proj (lane-padded to 128 for dense stores) ----
  out = jnp.dot(x.astype(bf16), outw_ref[...],
                preferred_element_type=f32) + fb_ref[L:L + 1, 0:OUT_PAD]
  o_ref[...] = out


# --------------------------------- glue / wrapper -------------------------------
def rel_positional_encoding(seq_len, d_model, max_len=5000):
  """Legacy ESPnet RelPositionalEncoding table (reverse=True, built for max_len);
  the module uses pe[:, :seq_len] of that table."""
  position = jnp.arange(max_len - 1, -1, -1.0, dtype=jnp.float32)[:, None]
  div_term = jnp.exp(jnp.arange(0, d_model, 2, dtype=jnp.float32)
                     * -(math.log(10000.0) / d_model))
  pe = jnp.zeros((max_len, d_model), jnp.float32)
  pe = pe.at[:, 0::2].set(jnp.sin(position * div_term))
  pe = pe.at[:, 1::2].set(jnp.cos(position * div_term))
  return pe[:seq_len]


def init_params(key):
  """Raw, module-like parameters (f32, torch-style shapes)."""
  keys = iter(jax.random.split(key, 32))

  def nrm(shape, scale):
    return scale * jax.random.normal(next(keys), shape, jnp.float32)

  p = {}
  p['w_midi'] = nrm((1, H), 0.05)
  p['b_midi'] = jnp.zeros((1, H), jnp.float32)
  p['w_dur'] = nrm((1, H), 0.05)
  p['b_dur'] = jnp.zeros((1, H), jnp.float32)
  glide_tbl = nrm((GLIDE_VOCAB, H), 0.02)
  p['glide_embed'] = glide_tbl.at[0].set(0.0)            # padding_idx = 0
  p['ln1_g'] = jnp.ones((L, 1, H), jnp.float32)
  p['ln1_b'] = jnp.zeros((L, 1, H), jnp.float32)
  p['qkv_w'] = nrm((L, H, 3 * H), 1.0 / math.sqrt(H))    # fairseq MHA, bias=False
  p['attnout_w'] = nrm((L, H, H), 1.0 / math.sqrt(H))    # out_proj, bias=False
  p['ln2_g'] = jnp.ones((L, 1, H), jnp.float32)
  p['ln2_b'] = jnp.zeros((L, 1, H), jnp.float32)
  p['conv_w'] = nrm((L, K, H, FF), 1.0 / math.sqrt(H * K))
  p['conv_b'] = nrm((L, 1, FF), 0.01)
  p['ffn2_w'] = nrm((L, FF, H), 1.0 / math.sqrt(FF))
  p['ffn2_b'] = nrm((L, 1, H), 0.01)
  p['lnf_g'] = jnp.ones((1, H), jnp.float32)
  p['lnf_b'] = jnp.zeros((1, H), jnp.float32)
  p['outw'] = nrm((H, H_OUT), 1.0 / math.sqrt(H))
  p['outb'] = jnp.zeros((1, H_OUT), jnp.float32)
  return p


def prepare_kernel_params(p):
  """One-time param prep: fold scalar scales, fold attention out-proj into the V block,
  pack everything into a few slabs, pre-cast matmul weights to bf16, build the pos table."""
  f32, bf16 = jnp.float32, jnp.bfloat16
  kp = {}

  # ---- wrapper-side (embedding / positional) params, kept f32 ----
  kp['w_midi'], kp['b_midi'] = p['w_midi'], p['b_midi']
  kp['w_dur'], kp['b_dur'] = p['w_dur'], p['b_dur']
  kp['glide_embed'] = p['glide_embed']
  kp['pos'] = rel_positional_encoding(T, H)                       # (T, H), built once

  # ---- f32 LN / narrow-bias slab ----
  rows = []
  for l in range(L):
    rows += [p['ln1_g'][l], p['ln1_b'][l], p['ln2_g'][l], p['ln2_b'][l], p['ffn2_b'][l]]
  rows += [p['lnf_g'], p['lnf_b']]
  kp['ln_slab'] = jnp.concatenate(rows, axis=0).astype(f32)       # (5L+2, H)

  # ---- f32 wide-bias slab: conv biases (K**-0.5 folded) + padded out_proj bias ----
  conv_b = (p['conv_b'] * (K ** -0.5)).astype(f32)                # (L, 1, FF)
  outb_p = jnp.pad(p['outb'], ((0, 0), (0, FF - H_OUT)))          # (1, FF)
  kp['fb_slab'] = jnp.concatenate([conv_b[l] for l in range(L)] + [outb_p], axis=0)

  # ---- bf16 256-lane weight slab: per layer [qkv_fold] + K conv taps ----
  wq = p['qkv_w'][:, :, 0:H] * (DH ** -0.5)                       # Q scaling folded
  wk = p['qkv_w'][:, :, H:2 * H]
  u_blocks = []
  for h in range(HEADS):
    wv_h = p['qkv_w'][:, :, 2 * H + h * DH:2 * H + (h + 1) * DH]  # (L, H, DH)
    wo_h = p['attnout_w'][:, h * DH:(h + 1) * DH, :]              # (L, DH, H)
    u_blocks.append(jnp.einsum('lij,ljk->lik', wv_h, wo_h))       # (L, H, H): V@Wout fold
  qkv_fold = jnp.concatenate([wq, wk] + u_blocks, axis=-1)        # (L, H, 4H)
  conv_w = p['conv_w'] * (K ** -0.5)                              # (L, K, H, FF)
  blocks = []
  for l in range(L):
    blocks.append(qkv_fold[l])
    for j in range(K):
      blocks.append(conv_w[l, j])
  kp['w256'] = jnp.concatenate(blocks, axis=0).astype(bf16)       # (L*(1+K)*H, 256)

  kp['ffn2_w'] = p['ffn2_w'].astype(bf16)                         # (L, FF, H)
  kp['outw_p'] = jnp.pad(p['outw'], ((0, 0), (0, OUT_PAD - H_OUT))).astype(bf16)  # (H, 128)
  return kp


def _melody_encoder_impl(kp, note_midi, note_rest, note_dur, glide):
  """note_midi: f32 [B,T] (-1 = padding); note_rest: bool [B,T];
     note_dur: int [B,T]; glide: int [B,T]  ->  [B, T, H_OUT] f32."""
  f32 = jnp.float32
  padding = note_midi < 0.0                                       # (B, T)
  nonpad = (~padding).astype(f32)
  notrest = (~note_rest).astype(f32)

  # ---- note embeddings + forward_embedding (all scalar scales folded here) ----
  midi_embed = (note_midi.astype(f32)[..., None] * kp['w_midi'] + kp['b_midi']) \
      * notrest[..., None]                                        # (B, T, H)
  dur_embed = note_dur.astype(f32)[..., None] * kp['w_dur'] + kp['b_dur']
  ornament = kp['glide_embed'][glide] * GLIDE_SCALE               # (B, T, H)
  x0 = ((EMBED_SCALE * midi_embed + dur_embed + ornament) * XSCALE
        + kp['pos'][None, :, :]) * nonpad[..., None]              # (B, T, H)
  x0 = x0.reshape(BT, H)
  nonpad_full = jnp.broadcast_to(nonpad.reshape(BT, 1), (BT, H))

  # per-tap conv validity masks (SAME padding + folded-batch boundary), pre-broadcast
  t_idx = jnp.arange(T)[:, None]
  offs = jnp.arange(K)[None, :] - PAD
  tap = (((t_idx + offs) >= 0) & ((t_idx + offs) < T)).astype(f32)   # (T, K)
  tap = jnp.tile(tap, (B, 1))                                        # (BT, K)
  tap_full = jnp.broadcast_to(tap.T[:, :, None], (K, BT, H))         # (K, BT, H)

  acts = jnp.concatenate([x0[None], nonpad_full[None], tap_full], axis=0)  # (2+K, BT, H)

  # additive attention mask: block-diagonal over folded batch + key-padding mask
  batch_id = jnp.repeat(jnp.arange(B), T)
  allow = (batch_id[:, None] == batch_id[None, :]) & (~padding.reshape(BT))[None, :]
  attn_mask = jnp.where(allow, 0.0, NEG_INF).astype(f32)              # (BT, BT)

  kernel_inputs = (acts, attn_mask, kp['ln_slab'], kp['fb_slab'],
                   kp['w256'], kp['ffn2_w'], kp['outw_p'])

  # Single invocation (no grid): whole working set (<1 MiB) is VMEM resident;
  # 7 input DMAs + 1 lane-dense (128-wide) output store.
  out = pl.pallas_call(
      melody_encoder_kernel,
      out_shape=jax.ShapeDtypeStruct((BT, OUT_PAD), jnp.float32),
      in_specs=[pl.BlockSpec(memory_space=pltpu.MemorySpace.VMEM)] * len(kernel_inputs),
      out_specs=pl.BlockSpec(memory_space=pltpu.MemorySpace.VMEM),
  )(*kernel_inputs)
  return out[:, :H_OUT].reshape(B, T, H_OUT)


melody_encoder = jax.jit(_melody_encoder_impl)


# ------------------------------------ main --------------------------------------
if __name__ == "__main__":
  key = jax.random.PRNGKey(0)
  pkey, dkey = jax.random.split(key)
  params = init_params(pkey)
  kparams = prepare_kernel_params(params)   # one-time fold/pack/cast, not a per-call cost

  k1, k2, k3, k4 = jax.random.split(dkey, 4)
  note_midi = jax.random.uniform(k1, (B, T), jnp.float32, 48.0, 72.0)
  note_midi = note_midi.at[1, -4:].set(-1.0)          # padding (-1) at tail of batch 1
  note_rest = jax.random.bernoulli(k2, 0.2, (B, T))
  # torch uses int64 note_dur; int32 stand-in (cast to float before use anyway)
  note_dur = jax.random.randint(k3, (B, T), 1, 20, dtype=jnp.int32)
  glide = jax.random.randint(k4, (B, T), 0, GLIDE_VOCAB, dtype=jnp.int32)

  out = melody_encoder(kparams, note_midi, note_rest, note_dur, glide)
  out = jax.block_until_ready(out)
  assert out.shape == (B, T, H_OUT) and out.dtype == jnp.float32
  assert bool(jnp.all(jnp.isfinite(out)))
  print("KERNEL_OK")
</pallas_src>

<mosaic_0001>
module attributes {stable_mosaic.version = 11 : i64} {
  func.func @melody_encoder_kernel(%arg0: memref<11x32x64xf32, #tpu.memory_space<vmem>>, %arg1: memref<32x32xf32, #tpu.memory_space<vmem>>, %arg2: memref<12x64xf32, #tpu.memory_space<vmem>>, %arg3: memref<3x256xf32, #tpu.memory_space<vmem>>, %arg4: memref<1280x256xbf16, #tpu.memory_space<vmem>>, %arg5: memref<2x256x64xbf16, #tpu.memory_space<vmem>>, %arg6: memref<64x128xbf16, #tpu.memory_space<vmem>>, %arg7: memref<32x128xf32, #tpu.memory_space<vmem>>) attributes {dimension_semantics = [], scalar_prefetch = 0 : i64, scratch_operands = 0 : i64, tpu.core_type = #tpu.core_type<tc>} {
    %c0 = arith.constant 0 : index
    %c0_0 = arith.constant 0 : index
    %c0_1 = arith.constant 0 : index
    %0 = vector.load %arg0[%c0, %c0_0, %c0_1] : memref<11x32x64xf32, #tpu.memory_space<vmem>>, vector<1x32x64xf32>
    %1 = vector.shape_cast %0 : vector<1x32x64xf32> to vector<32x64xf32>
    %c1 = arith.constant 1 : index
    %c0_2 = arith.constant 0 : index
    %c0_3 = arith.constant 0 : index
    %2 = vector.load %arg0[%c1, %c0_2, %c0_3] : memref<11x32x64xf32, #tpu.memory_space<vmem>>, vector<1x32x64xf32>
    %3 = vector.shape_cast %2 : vector<1x32x64xf32> to vector<32x64xf32>
    %c0_4 = arith.constant 0 : index
    %c0_5 = arith.constant 0 : index
    %4 = vector.load %arg1[%c0_4, %c0_5] : memref<32x32xf32, #tpu.memory_space<vmem>>, vector<32x32xf32>
    %c0_6 = arith.constant 0 : index
    %c0_7 = arith.constant 0 : index
    %5 = vector.load %arg2[%c0_6, %c0_7] : memref<12x64xf32, #tpu.memory_space<vmem>>, vector<1x64xf32>
    %c1_8 = arith.constant 1 : index
    %c0_9 = arith.constant 0 : index
    %6 = vector.load %arg2[%c1_8, %c0_9] : memref<12x64xf32, #tpu.memory_space<vmem>>, vector<1x64xf32>
    %cst = arith.constant dense<0.000000e+00> : vector<32xf32>
    %7 = vector.multi_reduction <add>, %1, %cst [1] : vector<32x64xf32> to vector<32xf32>
    %8 = vector.shape_cast %7 : vector<32xf32> to vector<32x1xf32>
    %cst_10 = arith.constant 6.400000e+01 : f32
    %9 = vector.broadcast %cst_10 : f32 to vector<32x1xf32>
    %10 = arith.divf %8, %9 : vector<32x1xf32>
    %11 = vector.broadcast %10 : vector<32x1xf32> to vector<32x64xf32>
    %12 = arith.subf %1, %11 : vector<32x64xf32>
    %13 = arith.mulf %12, %12 : vector<32x64xf32>
    %cst_11 = arith.constant dense<0.000000e+00> : vector<32xf32>
    %14 = vector.multi_reduction <add>, %13, %cst_11 [1] : vector<32x64xf32> to vector<32xf32>
    %15 = vector.shape_cast %14 : vector<32xf32> to vector<32x1xf32>
    %cst_12 = arith.constant 6.400000e+01 : f32
    %16 = vector.broadcast %cst_12 : f32 to vector<32x1xf32>
    %17 = arith.divf %15, %16 : vector<32x1xf32>
    %18 = vector.broadcast %10 : vector<32x1xf32> to vector<32x64xf32>
    %19 = arith.subf %1, %18 : vector<32x64xf32>
    %cst_13 = arith.constant 9.99999974E-6 : f32
    %20 = vector.broadcast %cst_13 : f32 to vector<32x1xf32>
    %21 = arith.addf %17, %20 : vector<32x1xf32>
    %22 = math.rsqrt %21 : vector<32x1xf32>
    %23 = vector.broadcast %22 : vector<32x1xf32> to vector<32x64xf32>
    %24 = arith.mulf %19, %23 : vector<32x64xf32>
    %25 = vector.broadcast %5 : vector<1x64xf32> to vector<32x64xf32>
    %26 = arith.mulf %24, %25 : vector<32x64xf32>
    %27 = vector.broadcast %6 : vector<1x64xf32> to vector<32x64xf32>
    %28 = arith.addf %26, %27 : vector<32x64xf32>
    %29 = arith.truncf %28 : vector<32x64xf32> to vector<32x64xbf16>
    %c0_14 = arith.constant 0 : index
    %c0_15 = arith.constant 0 : index
    %30 = vector.load %arg4[%c0_14, %c0_15] : memref<1280x256xbf16, #tpu.memory_space<vmem>>, vector<64x256xbf16>
    %cst_16 = arith.constant dense<0.000000e+00> : vector<32x256xf32>
    %31 = tpu.matmul %29, %30, %cst_16 {dimension_numbers = #tpu.dot_dimension_numbers<[1], [0], [0], [1], [0, 0, 1, 1], [], []>} : vector<32x64xbf16>, vector<64x256xbf16>, vector<32x256xf32> -> vector<32x256xf32>
    %32 = arith.truncf %31 : vector<32x256xf32> to vector<32x256xbf16>
    %33 = vector.extract_strided_slice %32 {offsets = [0, 0], sizes = [32, 32], strides = [1, 1]} : vector<32x256xbf16> to vector<32x32xbf16>
    %34 = vector.extract_strided_slice %32 {offsets = [0, 64], sizes = [32, 32], strides = [1, 1]} : vector<32x256xbf16> to vector<32x32xbf16>
    %cst_17 = arith.constant dense<0.000000e+00> : vector<32x32xf32>
    %35 = tpu.matmul %33, %34, %cst_17 {dimension_numbers = #tpu.dot_dimension_numbers<[1], [1], [0], [0], [0, 0, 1, 0], [], []>} : vector<32x32xbf16>, vector<32x32xbf16>, vector<32x32xf32> -> vector<32x32xf32>
    %36 = arith.addf %35, %4 : vector<32x32xf32>
    %cst_18 = arith.constant dense<0xFF800000> : vector<32xf32>
    %37 = vector.multi_reduction <maximumf>, %36, %cst_18 [1] : vector<32x32xf32> to vector<32xf32>
    %38 = vector.shape_cast %37 : vector<32xf32> to vector<32x1xf32>
    %39 = vector.broadcast %38 : vector<32x1xf32> to vector<32x32xf32>
    %40 = arith.subf %36, %39 : vector<32x32xf32>
    %41 = math.exp %40 : vector<32x32xf32>
    %cst_19 = arith.constant dense<0.000000e+00> : vector<32xf32>
    %42 = vector.multi_reduction <add>, %41, %cst_19 [1] : vector<32x32xf32> to vector<32xf32>
    %43 = vector.shape_cast %42 : vector<32xf32> to vector<32x1xf32>
    %44 = tpu.reciprocal %43 {approx = true} : vector<32x1xf32> -> vector<32x1xf32>
    %45 = vector.broadcast %44 : vector<32x1xf32> to vector<32x32xf32>
    %46 = arith.mulf %41, %45 : vector<32x32xf32>
    %47 = vector.extract_strided_slice %32 {offsets = [0, 128], sizes = [32, 64], strides = [1, 1]} : vector<32x256xbf16> to vector<32x64xbf16>
    %48 = arith.truncf %46 : vector<32x32xf32> to vector<32x32xbf16>
    %cst_20 = arith.constant dense<0.000000e+00> : vector<32x64xf32>
    %49 = tpu.matmul %48, %47, %cst_20 {dimension_numbers = #tpu.dot_dimension_numbers<[1], [0], [0], [1], [0, 0, 1, 1], [], []>} : vector<32x32xbf16>, vector<32x64xbf16>, vector<32x64xf32> -> vector<32x64xf32>
    %50 = vector.extract_strided_slice %32 {offsets = [0, 32], sizes = [32, 32], strides = [1, 1]} : vector<32x256xbf16> to vector<32x32xbf16>
    %51 = vector.extract_strided_slice %32 {offsets = [0, 96], sizes = [32, 32], strides = [1, 1]} : vector<32x256xbf16> to vector<32x32xbf16>
    %cst_21 = arith.constant dense<0.000000e+00> : vector<32x32xf32>
    %52 = tpu.matmul %50, %51, %cst_21 {dimension_numbers = #tpu.dot_dimension_numbers<[1], [1], [0], [0], [0, 0, 1, 0], [], []>} : vector<32x32xbf16>, vector<32x32xbf16>, vector<32x32xf32> -> vector<32x32xf32>
    %53 = arith.addf %52, %4 : vector<32x32xf32>
    %cst_22 = arith.constant dense<0xFF800000> : vector<32xf32>
    %54 = vector.multi_reduction <maximumf>, %53, %cst_22 [1] : vector<32x32xf32> to vector<32xf32>
    %55 = vector.shape_cast %54 : vector<32xf32> to vector<32x1xf32>
    %56 = vector.broadcast %55 : vector<32x1xf32> to vector<32x32xf32>
    %57 = arith.subf %53, %56 : vector<32x32xf32>
    %58 = math.exp %57 : vector<32x32xf32>
    %cst_23 = arith.constant dense<0.000000e+00> : vector<32xf32>
    %59 = vector.multi_reduction <add>, %58, %cst_23 [1] : vector<32x32xf32> to vector<32xf32>
    %60 = vector.shape_cast %59 : vector<32xf32> to vector<32x1xf32>
    %61 = tpu.reciprocal %60 {approx = true} : vector<32x1xf32> -> vector<32x1xf32>
    %62 = vector.broadcast %61 : vector<32x1xf32> to vector<32x32xf32>
    %63 = arith.mulf %58, %62 : vector<32x32xf32>
    %64 = vector.extract_strided_slice %32 {offsets = [0, 192], sizes = [32, 64], strides = [1, 1]} : vector<32x256xbf16> to vector<32x64xbf16>
    %65 = arith.truncf %63 : vector<32x32xf32> to vector<32x32xbf16>
    %cst_24 = arith.constant dense<0.000000e+00> : vector<32x64xf32>
    %66 = tpu.matmul %65, %64, %cst_24 {dimension_numbers = #tpu.dot_dimension_numbers<[1], [0], [0], [1], [0, 0, 1, 1], [], []>} : vector<32x32xbf16>, vector<32x64xbf16>, vector<32x64xf32> -> vector<32x64xf32>
    %67 = arith.addf %49, %66 : vector<32x64xf32>
    %68 = arith.addf %1, %67 : vector<32x64xf32>
    %69 = arith.mulf %68, %3 : vector<32x64xf32>
    %c2 = arith.constant 2 : index
    %c0_25 = arith.constant 0 : index
    %70 = vector.load %arg2[%c2, %c0_25] : memref<12x64xf32, #tpu.memory_space<vmem>>, vector<1x64xf32>
    %c3 = arith.constant 3 : index
    %c0_26 = arith.constant 0 : index
    %71 = vector.load %arg2[%c3, %c0_26] : memref<12x64xf32, #tpu.memory_space<vmem>>, vector<1x64xf32>
    %cst_27 = arith.constant dense<0.000000e+00> : vector<32xf32>
    %72 = vector.multi_reduction <add>, %69, %cst_27 [1] : vector<32x64xf32> to vector<32xf32>
    %73 = vector.shape_cast %72 : vector<32xf32> to vector<32x1xf32>
    %cst_28 = arith.constant 6.400000e+01 : f32
    %74 = vector.broadcast %cst_28 : f32 to vector<32x1xf32>
    %75 = arith.divf %73, %74 : vector<32x1xf32>
    %76 = vector.broadcast %75 : vector<32x1xf32> to vector<32x64xf32>
    %77 = arith.subf %69, %76 : vector<32x64xf32>
    %78 = arith.mulf %77, %77 : vector<32x64xf32>
    %cst_29 = arith.constant dense<0.000000e+00> : vector<32xf32>
    %79 = vector.multi_reduction <add>, %78, %cst_29 [1] : vector<32x64xf32> to vector<32xf32>
    %80 = vector.shape_cast %79 : vector<32xf32> to vector<32x1xf32>
    %cst_30 = arith.constant 6.400000e+01 : f32
    %81 = vector.broadcast %cst_30 : f32 to vector<32x1xf32>
    %82 = arith.divf %80, %81 : vector<32x1xf32>
    %83 = vector.broadcast %75 : vector<32x1xf32> to vector<32x64xf32>
    %84 = arith.subf %69, %83 : vector<32x64xf32>
    %cst_31 = arith.constant 9.99999974E-6 : f32
    %85 = vector.broadcast %cst_31 : f32 to vector<32x1xf32>
    %86 = arith.addf %82, %85 : vector<32x1xf32>
    %87 = math.rsqrt %86 : vector<32x1xf32>
    %88 = vector.broadcast %87 : vector<32x1xf32> to vector<32x64xf32>
    %89 = arith.mulf %84, %88 : vector<32x64xf32>
    %90 = vector.broadcast %70 : vector<1x64xf32> to vector<32x64xf32>
    %91 = arith.mulf %89, %90 : vector<32x64xf32>
    %92 = vector.broadcast %71 : vector<1x64xf32> to vector<32x64xf32>
    %93 = arith.addf %91, %92 : vector<32x64xf32>
    %94 = arith.truncf %93 : vector<32x64xf32> to vector<32x64xbf16>
    %c320 = arith.constant 320 : index
    %c0_32 = arith.constant 0 : index
    %95 = vector.load %arg4[%c320, %c0_32] : memref<1280x256xbf16, #tpu.memory_space<vmem>>, vector<64x256xbf16>
    %cst_33 = arith.constant dense<0.000000e+00> : vector<32x256xf32>
    %96 = tpu.matmul %94, %95, %cst_33 {dimension_numbers = #tpu.dot_dimension_numbers<[1], [0], [0], [1], [0, 0, 1, 1], [], []>} : vector<32x64xbf16>, vector<64x256xbf16>, vector<32x256xf32> -> vector<32x256xf32>
    %c4_i32 = arith.constant 4 : i32
    %97 = tpu.dynamic_rotate %93 by %c4_i32 dim 0 : vector<32x64xf32>, i32 -> vector<32x64xf32>
    %c2_34 = arith.constant 2 : index
    %c0_35 = arith.constant 0 : index
    %c0_36 = arith.constant 0 : index
    %98 = vector.load %arg0[%c2_34, %c0_35, %c0_36] : memref<11x32x64xf32, #tpu.memory_space<vmem>>, vector<1x32x64xf32>
    %99 = vector.shape_cast %98 : vector<1x32x64xf32> to vector<32x64xf32>
    %100 = arith.mulf %97, %99 : vector<32x64xf32>
    %101 = arith.truncf %100 : vector<32x64xf32> to vector<32x64xbf16>
    %c64 = arith.constant 64 : index
    %c0_37 = arith.constant 0 : index
    %102 = vector.load %arg4[%c64, %c0_37] : memref<1280x256xbf16, #tpu.memory_space<vmem>>, vector<64x256xbf16>
    %cst_38 = arith.constant dense<0.000000e+00> : vector<32x256xf32>
    %103 = tpu.matmul %101, %102, %cst_38 {dimension_numbers = #tpu.dot_dimension_numbers<[1], [0], [0], [1], [0, 0, 1, 1], [], []>} : vector<32x64xbf16>, vector<64x256xbf16>, vector<32x256xf32> -> vector<32x256xf32>
    %104 = arith.addf %96, %103 : vector<32x256xf32>
    %c3_i32 = arith.constant 3 : i32
    %105 = tpu.dynamic_rotate %93 by %c3_i32 dim 0 : vector<32x64xf32>, i32 -> vector<32x64xf32>
    %c3_39 = arith.constant 3 : index
    %c0_40 = arith.constant 0 : index
    %c0_41 = arith.constant 0 : index
    %106 = vector.load %arg0[%c3_39, %c0_40, %c0_41] : memref<11x32x64xf32, #tpu.memory_space<vmem>>, vector<1x32x64xf32>
    %107 = vector.shape_cast %106 : vector<1x32x64xf32> to vector<32x64xf32>
    %108 = arith.mulf %105, %107 : vector<32x64xf32>
    %109 = arith.truncf %108 : vector<32x64xf32> to vector<32x64xbf16>
    %c128 = arith.constant 128 : index
    %c0_42 = arith.constant 0 : index
    %110 = vector.load %arg4[%c128, %c0_42] : memref<1280x256xbf16, #tpu.memory_space<vmem>>, vector<64x256xbf16>
    %cst_43 = arith.constant dense<0.000000e+00> : vector<32x256xf32>
    %111 = tpu.matmul %109, %110, %cst_43 {dimension_numbers = #tpu.dot_dimension_numbers<[1], [0], [0], [1], [0, 0, 1, 1], [], []>} : vector<32x64xbf16>, vector<64x256xbf16>, vector<32x256xf32> -> vector<32x256xf32>
    %112 = arith.addf %104, %111 : vector<32x256xf32>
    %c2_i32 = arith.constant 2 : i32
    %113 = tpu.dynamic_rotate %93 by %c2_i32 dim 0 : vector<32x64xf32>, i32 -> vector<32x64xf32>
    %c4 = arith.constant 4 : index
    %c0_44 = arith.constant 0 : index
    %c0_45 = arith.constant 0 : index
    %114 = vector.load %arg0[%c4, %c0_44, %c0_45] : memref<11x32x64xf32, #tpu.memory_space<vmem>>, vector<1x32x64xf32>
    %115 = vector.shape_cast %114 : vector<1x32x64xf32> to vector<32x64xf32>
    %116 = arith.mulf %113, %115 : vector<32x64xf32>
    %117 = arith.truncf %116 : vector<32x64xf32> to vector<32x64xbf16>
    %c192 = arith.constant 192 : index
    %c0_46 = arith.constant 0 : index
    %118 = vector.load %arg4[%c192, %c0_46] : memref<1280x256xbf16, #tpu.memory_space<vmem>>, vector<64x256xbf16>
    %cst_47 = arith.constant dense<0.000000e+00> : vector<32x256xf32>
    %119 = tpu.matmul %117, %118, %cst_47 {dimension_numbers = #tpu.dot_dimension_numbers<[1], [0], [0], [1], [0, 0, 1, 1], [], []>} : vector<32x64xbf16>, vector<64x256xbf16>, vector<32x256xf32> -> vector<32x256xf32>
    %120 = arith.addf %112, %119 : vector<32x256xf32>
    %c1_i32 = arith.constant 1 : i32
    %121 = tpu.dynamic_rotate %93 by %c1_i32 dim 0 : vector<32x64xf32>, i32 -> vector<32x64xf32>
    %c5 = arith.constant 5 : index
    %c0_48 = arith.constant 0 : index
    %c0_49 = arith.constant 0 : index
    %122 = vector.load %arg0[%c5, %c0_48, %c0_49] : memref<11x32x64xf32, #tpu.memory_space<vmem>>, vector<1x32x64xf32>
    %123 = vector.shape_cast %122 : vector<1x32x64xf32> to vector<32x64xf32>
    %124 = arith.mulf %121, %123 : vector<32x64xf32>
    %125 = arith.truncf %124 : vector<32x64xf32> to vector<32x64xbf16>
    %c256 = arith.constant 256 : index
    %c0_50 = arith.constant 0 : index
    %126 = vector.load %arg4[%c256, %c0_50] : memref<1280x256xbf16, #tpu.memory_space<vmem>>, vector<64x256xbf16>
    %cst_51 = arith.constant dense<0.000000e+00> : vector<32x256xf32>
    %127 = tpu.matmul %125, %126, %cst_51 {dimension_numbers = #tpu.dot_dimension_numbers<[1], [0], [0], [1], [0, 0, 1, 1], [], []>} : vector<32x64xbf16>, vector<64x256xbf16>, vector<32x256xf32> -> vector<32x256xf32>
    %128 = arith.addf %120, %127 : vector<32x256xf32>
    %c31_i32 = arith.constant 31 : i32
    %129 = tpu.dynamic_rotate %93 by %c31_i32 dim 0 : vector<32x64xf32>, i32 -> vector<32x64xf32>
    %c7 = arith.constant 7 : index
    %c0_52 = arith.constant 0 : index
    %c0_53 = arith.constant 0 : index
    %130 = vector.load %arg0[%c7, %c0_52, %c0_53] : memref<11x32x64xf32, #tpu.memory_space<vmem>>, vector<1x32x64xf32>
    %131 = vector.shape_cast %130 : vector<1x32x64xf32> to vector<32x64xf32>
    %132 = arith.mulf %129, %131 : vector<32x64xf32>
    %133 = arith.truncf %132 : vector<32x64xf32> to vector<32x64xbf16>
    %c384 = arith.constant 384 : index
    %c0_54 = arith.constant 0 : index
    %134 = vector.load %arg4[%c384, %c0_54] : memref<1280x256xbf16, #tpu.memory_space<vmem>>, vector<64x256xbf16>
    %cst_55 = arith.constant dense<0.000000e+00> : vector<32x256xf32>
    %135 = tpu.matmul %133, %134, %cst_55 {dimension_numbers = #tpu.dot_dimension_numbers<[1], [0], [0], [1], [0, 0, 1, 1], [], []>} : vector<32x64xbf16>, vector<64x256xbf16>, vector<32x256xf32> -> vector<32x256xf32>
    %136 = arith.addf %128, %135 : vector<32x256xf32>
    %c30_i32 = arith.constant 30 : i32
    %137 = tpu.dynamic_rotate %93 by %c30_i32 dim 0 : vector<32x64xf32>, i32 -> vector<32x64xf32>
    %c8 = arith.constant 8 : index
    %c0_56 = arith.constant 0 : index
    %c0_57 = arith.constant 0 : index
    %138 = vector.load %arg0[%c8, %c0_56, %c0_57] : memref<11x32x64xf32, #tpu.memory_space<vmem>>, vector<1x32x64xf32>
    %139 = vector.shape_cast %138 : vector<1x32x64xf32> to vector<32x64xf32>
    %140 = arith.mulf %137, %139 : vector<32x64xf32>
    %141 = arith.truncf %140 : vector<32x64xf32> to vector<32x64xbf16>
    %c448 = arith.constant 448 : index
    %c0_58 = arith.constant 0 : index
    %142 = vector.load %arg4[%c448, %c0_58] : memref<1280x256xbf16, #tpu.memory_space<vmem>>, vector<64x256xbf16>
    %cst_59 = arith.constant dense<0.000000e+00> : vector<32x256xf32>
    %143 = tpu.matmul %141, %142, %cst_59 {dimension_numbers = #tpu.dot_dimension_numbers<[1], [0], [0], [1], [0, 0, 1, 1], [], []>} : vector<32x64xbf16>, vector<64x256xbf16>, vector<32x256xf32> -> vector<32x256xf32>
    %144 = arith.addf %136, %143 : vector<32x256xf32>
    %c29_i32 = arith.constant 29 : i32
    %145 = tpu.dynamic_rotate %93 by %c29_i32 dim 0 : vector<32x64xf32>, i32 -> vector<32x64xf32>
    %c9 = arith.constant 9 : index
    %c0_60 = arith.constant 0 : index
    %c0_61 = arith.constant 0 : index
    %146 = vector.load %arg0[%c9, %c0_60, %c0_61] : memref<11x32x64xf32, #tpu.memory_space<vmem>>, vector<1x32x64xf32>
    %147 = vector.shape_cast %146 : vector<1x32x64xf32> to vector<32x64xf32>
    %148 = arith.mulf %145, %147 : vector<32x64xf32>
    %149 = arith.truncf %148 : vector<32x64xf32> to vector<32x64xbf16>
    %c512 = arith.constant 512 : index
    %c0_62 = arith.constant 0 : index
    %150 = vector.load %arg4[%c512, %c0_62] : memref<1280x256xbf16, #tpu.memory_space<vmem>>, vector<64x256xbf16>
    %cst_63 = arith.constant dense<0.000000e+00> : vector<32x256xf32>
    %151 = tpu.matmul %149, %150, %cst_63 {dimension_numbers = #tpu.dot_dimension_numbers<[1], [0], [0], [1], [0, 0, 1, 1], [], []>} : vector<32x64xbf16>, vector<64x256xbf16>, vector<32x256xf32> -> vector<32x256xf32>
    %152 = arith.addf %144, %151 : vector<32x256xf32>
    %c28_i32 = arith.constant 28 : i32
    %153 = tpu.dynamic_rotate %93 by %c28_i32 dim 0 : vector<32x64xf32>, i32 -> vector<32x64xf32>
    %c10 = arith.constant 10 : index
    %c0_64 = arith.constant 0 : index
    %c0_65 = arith.constant 0 : index
    %154 = vector.load %arg0[%c10, %c0_64, %c0_65] : memref<11x32x64xf32, #tpu.memory_space<vmem>>, vector<1x32x64xf32>
    %155 = vector.shape_cast %154 : vector<1x32x64xf32> to vector<32x64xf32>
    %156 = arith.mulf %153, %155 : vector<32x64xf32>
    %157 = arith.truncf %156 : vector<32x64xf32> to vector<32x64xbf16>
    %c576 = arith.constant 576 : index
    %c0_66 = arith.constant 0 : index
    %158 = vector.load %arg4[%c576, %c0_66] : memref<1280x256xbf16, #tpu.memory_space<vmem>>, vector<64x256xbf16>
    %cst_67 = arith.constant dense<0.000000e+00> : vector<32x256xf32>
    %159 = tpu.matmul %157, %158, %cst_67 {dimension_numbers = #tpu.dot_dimension_numbers<[1], [0], [0], [1], [0, 0, 1, 1], [], []>} : vector<32x64xbf16>, vector<64x256xbf16>, vector<32x256xf32> -> vector<32x256xf32>
    %160 = arith.addf %152, %159 : vector<32x256xf32>
    %c0_68 = arith.constant 0 : index
    %c0_69 = arith.constant 0 : index
    %161 = vector.load %arg3[%c0_68, %c0_69] : memref<3x256xf32, #tpu.memory_space<vmem>>, vector<1x256xf32>
    %162 = vector.broadcast %161 : vector<1x256xf32> to vector<32x256xf32>
    %163 = arith.addf %160, %162 : vector<32x256xf32>
    %164 = arith.mulf %163, %163 : vector<32x256xf32>
    %165 = arith.mulf %163, %164 : vector<32x256xf32>
    %cst_70 = arith.constant 4.471500e-02 : f32
    %166 = vector.broadcast %cst_70 : f32 to vector<32x256xf32>
    %167 = arith.mulf %166, %165 : vector<32x256xf32>
    %168 = arith.addf %163, %167 : vector<32x256xf32>
    %cst_71 = arith.constant 0.797884583 : f32
    %169 = vector.broadcast %cst_71 : f32 to vector<32x256xf32>
    %170 = arith.mulf %169, %168 : vector<32x256xf32>
    %171 = math.tanh %170 : vector<32x256xf32>
    %cst_72 = arith.constant 1.000000e+00 : f32
    %172 = vector.broadcast %cst_72 : f32 to vector<32x256xf32>
    %173 = arith.addf %172, %171 : vector<32x256xf32>
    %cst_73 = arith.constant 5.000000e-01 : f32
    %174 = vector.broadcast %cst_73 : f32 to vector<32x256xf32>
    %175 = arith.mulf %174, %173 : vector<32x256xf32>
    %176 = arith.mulf %163, %175 : vector<32x256xf32>
    %177 = arith.truncf %176 : vector<32x256xf32> to vector<32x256xbf16>
    %c0_74 = arith.constant 0 : index
    %c0_75 = arith.constant 0 : index
    %c0_76 = arith.constant 0 : index
    %178 = vector.load %arg5[%c0_74, %c0_75, %c0_76] : memref<2x256x64xbf16, #tpu.memory_space<vmem>>, vector<1x256x64xbf16>
    %179 = vector.shape_cast %178 : vector<1x256x64xbf16> to vector<256x64xbf16>
    %cst_77 = arith.constant dense<0.000000e+00> : vector<32x64xf32>
    %180 = tpu.matmul %177, %179, %cst_77 {dimension_numbers = #tpu.dot_dimension_numbers<[1], [0], [0], [1], [0, 0, 1, 1], [], []>} : vector<32x256xbf16>, vector<256x64xbf16>, vector<32x64xf32> -> vector<32x64xf32>
    %c4_78 = arith.constant 4 : index
    %c0_79 = arith.constant 0 : index
    %181 = vector.load %arg2[%c4_78, %c0_79] : memref<12x64xf32, #tpu.memory_space<vmem>>, vector<1x64xf32>
    %182 = vector.broadcast %181 : vector<1x64xf32> to vector<32x64xf32>
    %183 = arith.addf %180, %182 : vector<32x64xf32>
    %184 = arith.addf %69, %183 : vector<32x64xf32>
    %185 = arith.mulf %184, %3 : vector<32x64xf32>
    %c5_80 = arith.constant 5 : index
    %c0_81 = arith.constant 0 : index
    %186 = vector.load %arg2[%c5_80, %c0_81] : memref<12x64xf32, #tpu.memory_space<vmem>>, vector<1x64xf32>
    %c6 = arith.constant 6 : index
    %c0_82 = arith.constant 0 : index
    %187 = vector.load %arg2[%c6, %c0_82] : memref<12x64xf32, #tpu.memory_space<vmem>>, vector<1x64xf32>
    %cst_83 = arith.constant dense<0.000000e+00> : vector<32xf32>
    %188 = vector.multi_reduction <add>, %185, %cst_83 [1] : vector<32x64xf32> to vector<32xf32>
    %189 = vector.shape_cast %188 : vector<32xf32> to vector<32x1xf32>
    %cst_84 = arith.constant 6.400000e+01 : f32
    %190 = vector.broadcast %cst_84 : f32 to vector<32x1xf32>
    %191 = arith.divf %189, %190 : vector<32x1xf32>
    %192 = vector.broadcast %191 : vector<32x1xf32> to vector<32x64xf32>
    %193 = arith.subf %185, %192 : vector<32x64xf32>
    %194 = arith.mulf %193, %193 : vector<32x64xf32>
    %cst_85 = arith.constant dense<0.000000e+00> : vector<32xf32>
    %195 = vector.multi_reduction <add>, %194, %cst_85 [1] : vector<32x64xf32> to vector<32xf32>
    %196 = vector.shape_cast %195 : vector<32xf32> to vector<32x1xf32>
    %cst_86 = arith.constant 6.400000e+01 : f32
    %197 = vector.broadcast %cst_86 : f32 to vector<32x1xf32>
    %198 = arith.divf %196, %197 : vector<32x1xf32>
    %199 = vector.broadcast %191 : vector<32x1xf32> to vector<32x64xf32>
    %200 = arith.subf %185, %199 : vector<32x64xf32>
    %cst_87 = arith.constant 9.99999974E-6 : f32
    %201 = vector.broadcast %cst_87 : f32 to vector<32x1xf32>
    %202 = arith.addf %198, %201 : vector<32x1xf32>
    %203 = math.rsqrt %202 : vector<32x1xf32>
    %204 = vector.broadcast %203 : vector<32x1xf32> to vector<32x64xf32>
    %205 = arith.mulf %200, %204 : vector<32x64xf32>
    %206 = vector.broadcast %186 : vector<1x64xf32> to vector<32x64xf32>
    %207 = arith.mulf %205, %206 : vector<32x64xf32>
    %208 = vector.broadcast %187 : vector<1x64xf32> to vector<32x64xf32>
    %209 = arith.addf %207, %208 : vector<32x64xf32>
    %210 = arith.truncf %209 : vector<32x64xf32> to vector<32x64xbf16>
    %c640 = arith.constant 640 : index
    %c0_88 = arith.constant 0 : index
    %211 = vector.load %arg4[%c640, %c0_88] : memref<1280x256xbf16, #tpu.memory_space<vmem>>, vector<64x256xbf16>
    %cst_89 = arith.constant dense<0.000000e+00> : vector<32x256xf32>
    %212 = tpu.matmul %210, %211, %cst_89 {dimension_numbers = #tpu.dot_dimension_numbers<[1], [0], [0], [1], [0, 0, 1, 1], [], []>} : vector<32x64xbf16>, vector<64x256xbf16>, vector<32x256xf32> -> vector<32x256xf32>
    %213 = arith.truncf %212 : vector<32x256xf32> to vector<32x256xbf16>
    %214 = vector.extract_strided_slice %213 {offsets = [0, 0], sizes = [32, 32], strides = [1, 1]} : vector<32x256xbf16> to vector<32x32xbf16>
    %215 = vector.extract_strided_slice %213 {offsets = [0, 64], sizes = [32, 32], strides = [1, 1]} : vector<32x256xbf16> to vector<32x32xbf16>
    %cst_90 = arith.constant dense<0.000000e+00> : vector<32x32xf32>
    %216 = tpu.matmul %214, %215, %cst_90 {dimension_numbers = #tpu.dot_dimension_numbers<[1], [1], [0], [0], [0, 0, 1, 0], [], []>} : vector<32x32xbf16>, vector<32x32xbf16>, vector<32x32xf32> -> vector<32x32xf32>
    %217 = arith.addf %216, %4 : vector<32x32xf32>
    %cst_91 = arith.constant dense<0xFF800000> : vector<32xf32>
    %218 = vector.multi_reduction <maximumf>, %217, %cst_91 [1] : vector<32x32xf32> to vector<32xf32>
    %219 = vector.shape_cast %218 : vector<32xf32> to vector<32x1xf32>
    %220 = vector.broadcast %219 : vector<32x1xf32> to vector<32x32xf32>
    %221 = arith.subf %217, %220 : vector<32x32xf32>
    %222 = math.exp %221 : vector<32x32xf32>
    %cst_92 = arith.constant dense<0.000000e+00> : vector<32xf32>
    %223 = vector.multi_reduction <add>, %222, %cst_92 [1] : vector<32x32xf32> to vector<32xf32>
    %224 = vector.shape_cast %223 : vector<32xf32> to vector<32x1xf32>
    %225 = tpu.reciprocal %224 {approx = true} : vector<32x1xf32> -> vector<32x1xf32>
    %226 = vector.broadcast %225 : vector<32x1xf32> to vector<32x32xf32>
    %227 = arith.mulf %222, %226 : vector<32x32xf32>
    %228 = vector.extract_strided_slice %213 {offsets = [0, 128], sizes = [32, 64], strides = [1, 1]} : vector<32x256xbf16> to vector<32x64xbf16>
    %229 = arith.truncf %227 : vector<32x32xf32> to vector<32x32xbf16>
    %cst_93 = arith.constant dense<0.000000e+00> : vector<32x64xf32>
    %230 = tpu.matmul %229, %228, %cst_93 {dimension_numbers = #tpu.dot_dimension_numbers<[1], [0], [0], [1], [0, 0, 1, 1], [], []>} : vector<32x32xbf16>, vector<32x64xbf16>, vector<32x64xf32> -> vector<32x64xf32>
    %231 = vector.extract_strided_slice %213 {offsets = [0, 32], sizes = [32, 32], strides = [1, 1]} : vector<32x256xbf16> to vector<32x32xbf16>
    %232 = vector.extract_strided_slice %213 {offsets = [0, 96], sizes = [32, 32], strides = [1, 1]} : vector<32x256xbf16> to vector<32x32xbf16>
    %cst_94 = arith.constant dense<0.000000e+00> : vector<32x32xf32>
    %233 = tpu.matmul %231, %232, %cst_94 {dimension_numbers = #tpu.dot_dimension_numbers<[1], [1], [0], [0], [0, 0, 1, 0], [], []>} : vector<32x32xbf16>, vector<32x32xbf16>, vector<32x32xf32> -> vector<32x32xf32>
    %234 = arith.addf %233, %4 : vector<32x32xf32>
    %cst_95 = arith.constant dense<0xFF800000> : vector<32xf32>
    %235 = vector.multi_reduction <maximumf>, %234, %cst_95 [1] : vector<32x32xf32> to vector<32xf32>
    %236 = vector.shape_cast %235 : vector<32xf32> to vector<32x1xf32>
    %237 = vector.broadcast %236 : vector<32x1xf32> to vector<32x32xf32>
    %238 = arith.subf %234, %237 : vector<32x32xf32>
    %239 = math.exp %238 : vector<32x32xf32>
    %cst_96 = arith.constant dense<0.000000e+00> : vector<32xf32>
    %240 = vector.multi_reduction <add>, %239, %cst_96 [1] : vector<32x32xf32> to vector<32xf32>
    %241 = vector.shape_cast %240 : vector<32xf32> to vector<32x1xf32>
    %242 = tpu.reciprocal %241 {approx = true} : vector<32x1xf32> -> vector<32x1xf32>
    %243 = vector.broadcast %242 : vector<32x1xf32> to vector<32x32xf32>
    %244 = arith.mulf %239, %243 : vector<32x32xf32>
    %245 = vector.extract_strided_slice %213 {offsets = [0, 192], sizes = [32, 64], strides = [1, 1]} : vector<32x256xbf16> to vector<32x64xbf16>
    %246 = arith.truncf %244 : vector<32x32xf32> to vector<32x32xbf16>
    %cst_97 = arith.constant dense<0.000000e+00> : vector<32x64xf32>
    %247 = tpu.matmul %246, %245, %cst_97 {dimension_numbers = #tpu.dot_dimension_numbers<[1], [0], [0], [1], [0, 0, 1, 1], [], []>} : vector<32x32xbf16>, vector<32x64xbf16>, vector<32x64xf32> -> vector<32x64xf32>
    %248 = arith.addf %230, %247 : vector<32x64xf32>
    %249 = arith.addf %185, %248 : vector<32x64xf32>
    %250 = arith.mulf %249, %3 : vector<32x64xf32>
    %c7_98 = arith.constant 7 : index
    %c0_99 = arith.constant 0 : index
    %251 = vector.load %arg2[%c7_98, %c0_99] : memref<12x64xf32, #tpu.memory_space<vmem>>, vector<1x64xf32>
    %c8_100 = arith.constant 8 : index
    %c0_101 = arith.constant 0 : index
    %252 = vector.load %arg2[%c8_100, %c0_101] : memref<12x64xf32, #tpu.memory_space<vmem>>, vector<1x64xf32>
    %cst_102 = arith.constant dense<0.000000e+00> : vector<32xf32>
    %253 = vector.multi_reduction <add>, %250, %cst_102 [1] : vector<32x64xf32> to vector<32xf32>
    %254 = vector.shape_cast %253 : vector<32xf32> to vector<32x1xf32>
    %cst_103 = arith.constant 6.400000e+01 : f32
    %255 = vector.broadcast %cst_103 : f32 to vector<32x1xf32>
    %256 = arith.divf %254, %255 : vector<32x1xf32>
    %257 = vector.broadcast %256 : vector<32x1xf32> to vector<32x64xf32>
    %258 = arith.subf %250, %257 : vector<32x64xf32>
    %259 = arith.mulf %258, %258 : vector<32x64xf32>
    %cst_104 = arith.constant dense<0.000000e+00> : vector<32xf32>
    %260 = vector.multi_reduction <add>, %259, %cst_104 [1] : vector<32x64xf32> to vector<32xf32>
    %261 = vector.shape_cast %260 : vector<32xf32> to vector<32x1xf32>
    %cst_105 = arith.constant 6.400000e+01 : f32
    %262 = vector.broadcast %cst_105 : f32 to vector<32x1xf32>
    %263 = arith.divf %261, %262 : vector<32x1xf32>
    %264 = vector.broadcast %256 : vector<32x1xf32> to vector<32x64xf32>
    %265 = arith.subf %250, %264 : vector<32x64xf32>
    %cst_106 = arith.constant 9.99999974E-6 : f32
    %266 = vector.broadcast %cst_106 : f32 to vector<32x1xf32>
    %267 = arith.addf %263, %266 : vector<32x1xf32>
    %268 = math.rsqrt %267 : vector<32x1xf32>
    %269 = vector.broadcast %268 : vector<32x1xf32> to vector<32x64xf32>
    %270 = arith.mulf %265, %269 : vector<32x64xf32>
    %271 = vector.broadcast %251 : vector<1x64xf32> to vector<32x64xf32>
    %272 = arith.mulf %270, %271 : vector<32x64xf32>
    %273 = vector.broadcast %252 : vector<1x64xf32> to vector<32x64xf32>
    %274 = arith.addf %272, %273 : vector<32x64xf32>
    %275 = arith.truncf %274 : vector<32x64xf32> to vector<32x64xbf16>
    %c960 = arith.constant 960 : index
    %c0_107 = arith.constant 0 : index
    %276 = vector.load %arg4[%c960, %c0_107] : memref<1280x256xbf16, #tpu.memory_space<vmem>>, vector<64x256xbf16>
    %cst_108 = arith.constant dense<0.000000e+00> : vector<32x256xf32>
    %277 = tpu.matmul %275, %276, %cst_108 {dimension_numbers = #tpu.dot_dimension_numbers<[1], [0], [0], [1], [0, 0, 1, 1], [], []>} : vector<32x64xbf16>, vector<64x256xbf16>, vector<32x256xf32> -> vector<32x256xf32>
    %c4_i32_109 = arith.constant 4 : i32
    %278 = tpu.dynamic_rotate %274 by %c4_i32_109 dim 0 : vector<32x64xf32>, i32 -> vector<32x64xf32>
    %c2_110 = arith.constant 2 : index
    %c0_111 = arith.constant 0 : index
    %c0_112 = arith.constant 0 : index
    %279 = vector.load %arg0[%c2_110, %c0_111, %c0_112] : memref<11x32x64xf32, #tpu.memory_space<vmem>>, vector<1x32x64xf32>
    %280 = vector.shape_cast %279 : vector<1x32x64xf32> to vector<32x64xf32>
    %281 = arith.mulf %278, %280 : vector<32x64xf32>
    %282 = arith.truncf %281 : vector<32x64xf32> to vector<32x64xbf16>
    %c704 = arith.constant 704 : index
    %c0_113 = arith.constant 0 : index
    %283 = vector.load %arg4[%c704, %c0_113] : memref<1280x256xbf16, #tpu.memory_space<vmem>>, vector<64x256xbf16>
    %cst_114 = arith.constant dense<0.000000e+00> : vector<32x256xf32>
    %284 = tpu.matmul %282, %283, %cst_114 {dimension_numbers = #tpu.dot_dimension_numbers<[1], [0], [0], [1], [0, 0, 1, 1], [], []>} : vector<32x64xbf16>, vector<64x256xbf16>, vector<32x256xf32> -> vector<32x256xf32>
    %285 = arith.addf %277, %284 : vector<32x256xf32>
    %c3_i32_115 = arith.constant 3 : i32
    %286 = tpu.dynamic_rotate %274 by %c3_i32_115 dim 0 : vector<32x64xf32>, i32 -> vector<32x64xf32>
    %c3_116 = arith.constant 3 : index
    %c0_117 = arith.constant 0 : index
    %c0_118 = arith.constant 0 : index
    %287 = vector.load %arg0[%c3_116, %c0_117, %c0_118] : memref<11x32x64xf32, #tpu.memory_space<vmem>>, vector<1x32x64xf32>
    %288 = vector.shape_cast %287 : vector<1x32x64xf32> to vector<32x64xf32>
    %289 = arith.mulf %286, %288 : vector<32x64xf32>
    %290 = arith.truncf %289 : vector<32x64xf32> to vector<32x64xbf16>
    %c768 = arith.constant 768 : index
    %c0_119 = arith.constant 0 : index
    %291 = vector.load %arg4[%c768, %c0_119] : memref<1280x256xbf16, #tpu.memory_space<vmem>>, vector<64x256xbf16>
    %cst_120 = arith.constant dense<0.000000e+00> : vector<32x256xf32>
    %292 = tpu.matmul %290, %291, %cst_120 {dimension_numbers = #tpu.dot_dimension_numbers<[1], [0], [0], [1], [0, 0, 1, 1], [], []>} : vector<32x64xbf16>, vector<64x256xbf16>, vector<32x256xf32> -> vector<32x256xf32>
    %293 = arith.addf %285, %292 : vector<32x256xf32>
    %c2_i32_121 = arith.constant 2 : i32
    %294 = tpu.dynamic_rotate %274 by %c2_i32_121 dim 0 : vector<32x64xf32>, i32 -> vector<32x64xf32>
    %c4_122 = arith.constant 4 : index
    %c0_123 = arith.constant 0 : index
    %c0_124 = arith.constant 0 : index
    %295 = vector.load %arg0[%c4_122, %c0_123, %c0_124] : memref<11x32x64xf32, #tpu.memory_space<vmem>>, vector<1x32x64xf32>
    %296 = vector.shape_cast %295 : vector<1x32x64xf32> to vector<32x64xf32>
    %297 = arith.mulf %294, %296 : vector<32x64xf32>
    %298 = arith.truncf %297 : vector<32x64xf32> to vector<32x64xbf16>
    %c832 = arith.constant 832 : index
    %c0_125 = arith.constant 0 : index
    %299 = vector.load %arg4[%c832, %c0_125] : memref<1280x256xbf16, #tpu.memory_space<vmem>>, vector<64x256xbf16>
    %cst_126 = arith.constant dense<0.000000e+00> : vector<32x256xf32>
    %300 = tpu.matmul %298, %299, %cst_126 {dimension_numbers = #tpu.dot_dimension_numbers<[1], [0], [0], [1], [0, 0, 1, 1], [], []>} : vector<32x64xbf16>, vector<64x256xbf16>, vector<32x256xf32> -> vector<32x256xf32>
    %301 = arith.addf %293, %300 : vector<32x256xf32>
    %c1_i32_127 = arith.constant 1 : i32
    %302 = tpu.dynamic_rotate %274 by %c1_i32_127 dim 0 : vector<32x64xf32>, i32 -> vector<32x64xf32>
    %c5_128 = arith.constant 5 : index
    %c0_129 = arith.constant 0 : index
    %c0_130 = arith.constant 0 : index
    %303 = vector.load %arg0[%c5_128, %c0_129, %c0_130] : memref<11x32x64xf32, #tpu.memory_space<vmem>>, vector<1x32x64xf32>
    %304 = vector.shape_cast %303 : vector<1x32x64xf32> to vector<32x64xf32>
    %305 = arith.mulf %302, %304 : vector<32x64xf32>
    %306 = arith.truncf %305 : vector<32x64xf32> to vector<32x64xbf16>
    %c896 = arith.constant 896 : index
    %c0_131 = arith.constant 0 : index
    %307 = vector.load %arg4[%c896, %c0_131] : memref<1280x256xbf16, #tpu.memory_space<vmem>>, vector<64x256xbf16>
    %cst_132 = arith.constant dense<0.000000e+00> : vector<32x256xf32>
    %308 = tpu.matmul %306, %307, %cst_132 {dimension_numbers = #tpu.dot_dimension_numbers<[1], [0], [0], [1], [0, 0, 1, 1], [], []>} : vector<32x64xbf16>, vector<64x256xbf16>, vector<32x256xf32> -> vector<32x256xf32>
    %309 = arith.addf %301, %308 : vector<32x256xf32>
    %c31_i32_133 = arith.constant 31 : i32
    %310 = tpu.dynamic_rotate %274 by %c31_i32_133 dim 0 : vector<32x64xf32>, i32 -> vector<32x64xf32>
    %c7_134 = arith.constant 7 : index
    %c0_135 = arith.constant 0 : index
    %c0_136 = arith.constant 0 : index
    %311 = vector.load %arg0[%c7_134, %c0_135, %c0_136] : memref<11x32x64xf32, #tpu.memory_space<vmem>>, vector<1x32x64xf32>
    %312 = vector.shape_cast %311 : vector<1x32x64xf32> to vector<32x64xf32>
    %313 = arith.mulf %310, %312 : vector<32x64xf32>
    %314 = arith.truncf %313 : vector<32x64xf32> to vector<32x64xbf16>
    %c1024 = arith.constant 1024 : index
    %c0_137 = arith.constant 0 : index
    %315 = vector.load %arg4[%c1024, %c0_137] : memref<1280x256xbf16, #tpu.memory_space<vmem>>, vector<64x256xbf16>
    %cst_138 = arith.constant dense<0.000000e+00> : vector<32x256xf32>
    %316 = tpu.matmul %314, %315, %cst_138 {dimension_numbers = #tpu.dot_dimension_numbers<[1], [0], [0], [1], [0, 0, 1, 1], [], []>} : vector<32x64xbf16>, vector<64x256xbf16>, vector<32x256xf32> -> vector<32x256xf32>
    %317 = arith.addf %309, %316 : vector<32x256xf32>
    %c30_i32_139 = arith.constant 30 : i32
    %318 = tpu.dynamic_rotate %274 by %c30_i32_139 dim 0 : vector<32x64xf32>, i32 -> vector<32x64xf32>
    %c8_140 = arith.constant 8 : index
    %c0_141 = arith.constant 0 : index
    %c0_142 = arith.constant 0 : index
    %319 = vector.load %arg0[%c8_140, %c0_141, %c0_142] : memref<11x32x64xf32, #tpu.memory_space<vmem>>, vector<1x32x64xf32>
    %320 = vector.shape_cast %319 : vector<1x32x64xf32> to vector<32x64xf32>
    %321 = arith.mulf %318, %320 : vector<32x64xf32>
    %322 = arith.truncf %321 : vector<32x64xf32> to vector<32x64xbf16>
    %c1088 = arith.constant 1088 : index
    %c0_143 = arith.constant 0 : index
    %323 = vector.load %arg4[%c1088, %c0_143] : memref<1280x256xbf16, #tpu.memory_space<vmem>>, vector<64x256xbf16>
    %cst_144 = arith.constant dense<0.000000e+00> : vector<32x256xf32>
    %324 = tpu.matmul %322, %323, %cst_144 {dimension_numbers = #tpu.dot_dimension_numbers<[1], [0], [0], [1], [0, 0, 1, 1], [], []>} : vector<32x64xbf16>, vector<64x256xbf16>, vector<32x256xf32> -> vector<32x256xf32>
    %325 = arith.addf %317, %324 : vector<32x256xf32>
    %c29_i32_145 = arith.constant 29 : i32
    %326 = tpu.dynamic_rotate %274 by %c29_i32_145 dim 0 : vector<32x64xf32>, i32 -> vector<32x64xf32>
    %c9_146 = arith.constant 9 : index
    %c0_147 = arith.constant 0 : index
    %c0_148 = arith.constant 0 : index
    %327 = vector.load %arg0[%c9_146, %c0_147, %c0_148] : memref<11x32x64xf32, #tpu.memory_space<vmem>>, vector<1x32x64xf32>
    %328 = vector.shape_cast %327 : vector<1x32x64xf32> to vector<32x64xf32>
    %329 = arith.mulf %326, %328 : vector<32x64xf32>
    %330 = arith.truncf %329 : vector<32x64xf32> to vector<32x64xbf16>
    %c1152 = arith.constant 1152 : index
    %c0_149 = arith.constant 0 : index
    %331 = vector.load %arg4[%c1152, %c0_149] : memref<1280x256xbf16, #tpu.memory_space<vmem>>, vector<64x256xbf16>
    %cst_150 = arith.constant dense<0.000000e+00> : vector<32x256xf32>
    %332 = tpu.matmul %330, %331, %cst_150 {dimension_numbers = #tpu.dot_dimension_numbers<[1], [0], [0], [1], [0, 0, 1, 1], [], []>} : vector<32x64xbf16>, vector<64x256xbf16>, vector<32x256xf32> -> vector<32x256xf32>
    %333 = arith.addf %325, %332 : vector<32x256xf32>
    %c28_i32_151 = arith.constant 28 : i32
    %334 = tpu.dynamic_rotate %274 by %c28_i32_151 dim 0 : vector<32x64xf32>, i32 -> vector<32x64xf32>
    %c10_152 = arith.constant 10 : index
    %c0_153 = arith.constant 0 : index
    %c0_154 = arith.constant 0 : index
    %335 = vector.load %arg0[%c10_152, %c0_153, %c0_154] : memref<11x32x64xf32, #tpu.memory_space<vmem>>, vector<1x32x64xf32>
    %336 = vector.shape_cast %335 : vector<1x32x64xf32> to vector<32x64xf32>
    %337 = arith.mulf %334, %336 : vector<32x64xf32>
    %338 = arith.truncf %337 : vector<32x64xf32> to vector<32x64xbf16>
    %c1216 = arith.constant 1216 : index
    %c0_155 = arith.constant 0 : index
    %339 = vector.load %arg4[%c1216, %c0_155] : memref<1280x256xbf16, #tpu.memory_space<vmem>>, vector<64x256xbf16>
    %cst_156 = arith.constant dense<0.000000e+00> : vector<32x256xf32>
    %340 = tpu.matmul %338, %339, %cst_156 {dimension_numbers = #tpu.dot_dimension_numbers<[1], [0], [0], [1], [0, 0, 1, 1], [], []>} : vector<32x64xbf16>, vector<64x256xbf16>, vector<32x256xf32> -> vector<32x256xf32>
    %341 = arith.addf %333, %340 : vector<32x256xf32>
    %c1_157 = arith.constant 1 : index
    %c0_158 = arith.constant 0 : index
    %342 = vector.load %arg3[%c1_157, %c0_158] : memref<3x256xf32, #tpu.memory_space<vmem>>, vector<1x256xf32>
    %343 = vector.broadcast %342 : vector<1x256xf32> to vector<32x256xf32>
    %344 = arith.addf %341, %343 : vector<32x256xf32>
    %345 = arith.mulf %344, %344 : vector<32x256xf32>
    %346 = arith.mulf %344, %345 : vector<32x256xf32>
    %cst_159 = arith.constant 4.471500e-02 : f32
    %347 = vector.broadcast %cst_159 : f32 to vector<32x256xf32>
    %348 = arith.mulf %347, %346 : vector<32x256xf32>
    %349 = arith.addf %344, %348 : vector<32x256xf32>
    %cst_160 = arith.constant 0.797884583 : f32
    %350 = vector.broadcast %cst_160 : f32 to vector<32x256xf32>
    %351 = arith.mulf %350, %349 : vector<32x256xf32>
    %352 = math.tanh %351 : vector<32x256xf32>
    %cst_161 = arith.constant 1.000000e+00 : f32
    %353 = vector.broadcast %cst_161 : f32 to vector<32x256xf32>
    %354 = arith.addf %353, %352 : vector<32x256xf32>
    %cst_162 = arith.constant 5.000000e-01 : f32
    %355 = vector.broadcast %cst_162 : f32 to vector<32x256xf32>
    %356 = arith.mulf %355, %354 : vector<32x256xf32>
    %357 = arith.mulf %344, %356 : vector<32x256xf32>
    %358 = arith.truncf %357 : vector<32x256xf32> to vector<32x256xbf16>
    %c1_163 = arith.constant 1 : index
    %c0_164 = arith.constant 0 : index
    %c0_165 = arith.constant 0 : index
    %359 = vector.load %arg5[%c1_163, %c0_164, %c0_165] : memref<2x256x64xbf16, #tpu.memory_space<vmem>>, vector<1x256x64xbf16>
    %360 = vector.shape_cast %359 : vector<1x256x64xbf16> to vector<256x64xbf16>
    %cst_166 = arith.constant dense<0.000000e+00> : vector<32x64xf32>
    %361 = tpu.matmul %358, %360, %cst_166 {dimension_numbers = #tpu.dot_dimension_numbers<[1], [0], [0], [1], [0, 0, 1, 1], [], []>} : vector<32x256xbf16>, vector<256x64xbf16>, vector<32x64xf32> -> vector<32x64xf32>
    %c9_167 = arith.constant 9 : index
    %c0_168 = arith.constant 0 : index
    %362 = vector.load %arg2[%c9_167, %c0_168] : memref<12x64xf32, #tpu.memory_space<vmem>>, vector<1x64xf32>
    %363 = vector.broadcast %362 : vector<1x64xf32> to vector<32x64xf32>
    %364 = arith.addf %361, %363 : vector<32x64xf32>
    %365 = arith.addf %250, %364 : vector<32x64xf32>
    %366 = arith.mulf %365, %3 : vector<32x64xf32>
    %c10_169 = arith.constant 10 : index
    %c0_170 = arith.constant 0 : index
    %367 = vector.load %arg2[%c10_169, %c0_170] : memref<12x64xf32, #tpu.memory_space<vmem>>, vector<1x64xf32>
    %c11 = arith.constant 11 : index
    %c0_171 = arith.constant 0 : index
    %368 = vector.load %arg2[%c11, %c0_171] : memref<12x64xf32, #tpu.memory_space<vmem>>, vector<1x64xf32>
    %cst_172 = arith.constant dense<0.000000e+00> : vector<32xf32>
    %369 = vector.multi_reduction <add>, %366, %cst_172 [1] : vector<32x64xf32> to vector<32xf32>
    %370 = vector.shape_cast %369 : vector<32xf32> to vector<32x1xf32>
    %cst_173 = arith.constant 6.400000e+01 : f32
    %371 = vector.broadcast %cst_173 : f32 to vector<32x1xf32>
    %372 = arith.divf %370, %371 : vector<32x1xf32>
    %373 = vector.broadcast %372 : vector<32x1xf32> to vector<32x64xf32>
    %374 = arith.subf %366, %373 : vector<32x64xf32>
    %375 = arith.mulf %374, %374 : vector<32x64xf32>
    %cst_174 = arith.constant dense<0.000000e+00> : vector<32xf32>
    %376 = vector.multi_reduction <add>, %375, %cst_174 [1] : vector<32x64xf32> to vector<32xf32>
    %377 = vector.shape_cast %376 : vector<32xf32> to vector<32x1xf32>
    %cst_175 = arith.constant 6.400000e+01 : f32
    %378 = vector.broadcast %cst_175 : f32 to vector<32x1xf32>
    %379 = arith.divf %377, %378 : vector<32x1xf32>
    %380 = vector.broadcast %372 : vector<32x1xf32> to vector<32x64xf32>
    %381 = arith.subf %366, %380 : vector<32x64xf32>
    %cst_176 = arith.constant 9.99999974E-6 : f32
    %382 = vector.broadcast %cst_176 : f32 to vector<32x1xf32>
    %383 = arith.addf %379, %382 : vector<32x1xf32>
    %384 = math.rsqrt %383 : vector<32x1xf32>
    %385 = vector.broadcast %384 : vector<32x1xf32> to vector<32x64xf32>
    %386 = arith.mulf %381, %385 : vector<32x64xf32>
    %387 = vector.broadcast %367 : vector<1x64xf32> to vector<32x64xf32>
    %388 = arith.mulf %386, %387 : vector<32x64xf32>
    %389 = vector.broadcast %368 : vector<1x64xf32> to vector<32x64xf32>
    %390 = arith.addf %388, %389 : vector<32x64xf32>
    %391 = arith.mulf %390, %3 : vector<32x64xf32>
    %392 = arith.truncf %391 : vector<32x64xf32> to vector<32x64xbf16>
    %c0_177 = arith.constant 0 : index
    %c0_178 = arith.constant 0 : index
    %393 = vector.load %arg6[%c0_177, %c0_178] : memref<64x128xbf16, #tpu.memory_space<vmem>>, vector<64x128xbf16>
    %cst_179 = arith.constant dense<0.000000e+00> : vector<32x128xf32>
    %394 = tpu.matmul %392, %393, %cst_179 {dimension_numbers = #tpu.dot_dimension_numbers<[1], [0], [0], [1], [0, 0, 1, 1], [], []>} : vector<32x64xbf16>, vector<64x128xbf16>, vector<32x128xf32> -> vector<32x128xf32>
    %c2_180 = arith.constant 2 : index
    %c0_181 = arith.constant 0 : index
    %395 = vector.load %arg3[%c2_180, %c0_181] : memref<3x256xf32, #tpu.memory_space<vmem>>, vector<1x128xf32>
    %396 = vector.broadcast %395 : vector<1x128xf32> to vector<32x128xf32>
    %397 = arith.addf %394, %396 : vector<32x128xf32>
    %c0_182 = arith.constant 0 : index
    %c0_183 = arith.constant 0 : index
    %398 = vector.load %arg7[%c0_182, %c0_183] : memref<32x128xf32, #tpu.memory_space<vmem>>, vector<32x128xf32>
    tpu.vector_store %arg7[%c0_182, %c0_183], %397 {strides = array<i32>} : memref<32x128xf32, #tpu.memory_space<vmem>>, vector<32x128xf32>,
    return
  }
}

</mosaic_0001>

<llo_original>
// kernel: tile.9
$region0: #{tile.9}
  %s0 = inlined_call_operand.vmem [shape: f32[2,16,9], index: 0, kind: input, shape index: {}]
  %s1 = inlined_call_operand.vmem [shape: f32[32,9], index: 1, kind: output, shape index: {}]
  $region1: #{tile.9} parent=0
    #allocation0 [shape = 'u8[36864]{0}', space=vmem, size = 0x9000, scoped, tag = 'scoped mem for input reshape']
    %s3 = sshllo.u32 0, 2
    %s4 = smul.addr 2, 8
    %s5 = scalar_lea.vmem %s0, %s4
    %v6 = vld [vmem:[%s5] sm:%s3]
    %s7 = scalar_lea.vmem [#allocation0], 64
    %8 = vst [vmem:[%s7] sm:%s3] %v6
    %s9 = smul.addr 2, 7
    %s10 = scalar_lea.vmem %s0, %s9
    %v11 = vld [vmem:[%s10] sm:%s3]
    %s12 = scalar_lea.vmem [#allocation0], 56
    %13 = vst [vmem:[%s12] sm:%s3] %v11
    %s14 = smul.addr 2, 6
    %s15 = scalar_lea.vmem %s0, %s14
    %v16 = vld [vmem:[%s15] sm:%s3]
    %s17 = scalar_lea.vmem [#allocation0], 48
    %18 = vst [vmem:[%s17] sm:%s3] %v16
    %s19 = smul.addr 2, 5
    %s20 = scalar_lea.vmem %s0, %s19
    %v21 = vld [vmem:[%s20] sm:%s3]
    %s22 = scalar_lea.vmem [#allocation0], 40
    %23 = vst [vmem:[%s22] sm:%s3] %v21
    %s24 = smul.addr 2, 4
    %s25 = scalar_lea.vmem %s0, %s24
    %v26 = vld [vmem:[%s25] sm:%s3]
    %s27 = scalar_lea.vmem [#allocation0], 32
    %28 = vst [vmem:[%s27] sm:%s3] %v26
    %s29 = smul.addr 2, 3
    %s30 = scalar_lea.vmem %s0, %s29
    %v31 = vld [vmem:[%s30] sm:%s3]
    %s32 = scalar_lea.vmem [#allocation0], 24
    %33 = vst [vmem:[%s32] sm:%s3] %v31
    %s34 = smul.addr 2, 2
    %s35 = scalar_lea.vmem %s0, %s34
    %v36 = vld [vmem:[%s35] sm:%s3]
    %s37 = scalar_lea.vmem [#allocation0], 16
    %38 = vst [vmem:[%s37] sm:%s3] %v36
    %s39 = scalar_lea.vmem %s0, 2
    %v40 = vld [vmem:[%s39] sm:%s3]
    %s41 = scalar_lea.vmem [#allocation0], 8
    %42 = vst [vmem:[%s41] sm:%s3] %v40
    %v43 = vld [vmem:[%s0] sm:%s3]
    %44 = vst [vmem:[#allocation0] sm:%s3] %v43
    %v45 = vld [vmem:[#allocation0] ss:$8 sm:$0xf]
    %v46 = vld [vmem:[#allocation0] ss:$8 sm:$0xf0]
    %vm47 = vcmask 1047556
    %v48 = vsel %vm47, %v46, %v45
    %vm49 = vcmask 130048
    %50 = vst.msk [vmem:[%s1] sm:$0xff] %vm49, %v48
    %s51 = scalar_lea.vmem [#allocation0], 64
    %v52 = vld [vmem:[%s51] sm:$0x1]
    %vm53 = vcmask 130048
    %s54 = scalar_lea.vmem %s1, 8
    %55 = vst.msk [vmem:[%s54] sm:$0x1] %vm53, %v52
    %s56 = scalar_lea.vmem [#allocation0], 1
    %v57 = vld [vmem:[%s56] ss:$8 sm:$0xf]
    %s58 = scalar_lea.vmem [#allocation0], 1
    %v59 = vld [vmem:[%s58] ss:$8 sm:$0xf0]
    %vm60 = vcmask 1047556
    %v61 = vsel %vm60, %v59, %v57
    %62 = vrot.lane.b32.xlu0 %v61, 16
    %v63 = vpop.permute.xlu0 %62
    %vm64 = vcmask 261248
    %65 = vst.msk [vmem:[%s1] sm:$0xff] %vm64, %v63
    %s66 = scalar_lea.vmem [#allocation0], 65
    %v67 = vld [vmem:[%s66] sm:$0x1]
    %68 = vrot.lane.b32.xlu0 %v67, 16
    %v69 = vpop.permute.xlu0 %68
    %vm70 = vcmask 261248
    %s71 = scalar_lea.vmem %s1, 8
    %72 = vst.msk [vmem:[%s71] sm:$0x1] %vm70, %v69

// kernel: _melody_encoder_impl.1
$region0: #{_melody_encoder_impl.1}
  #allocation0 [shape = 'u32[]', space=smem, size = 0x4, offset = 0x4, fixed_abs, tag = 'smem constant byte address 0x4 - core index']
  #allocation1 [shape = 'u32[144,128]{1,0:T(1,128)}', space=vmem, size = 0x12000, scoped, tag = 'internal scratch']
  %s0 = inlined_call_operand.vmem [shape: f32[11,32,64], index: 0, kind: input, shape index: {}]
  %s1 = inlined_call_operand.vmem [shape: f32[32,32], index: 1, kind: input, shape index: {}]
  %s2 = inlined_call_operand.vmem [shape: f32[12,64], index: 2, kind: input, shape index: {}]
  %s3 = inlined_call_operand.vmem [shape: f32[3,256], index: 3, kind: input, shape index: {}]
  %s4 = inlined_call_operand.vmem [shape: bf16[1280,256], index: 4, kind: input, shape index: {}]
  %s5 = inlined_call_operand.vmem [shape: bf16[2,256,64], index: 5, kind: input, shape index: {}]
  %s6 = inlined_call_operand.vmem [shape: bf16[64,128], index: 6, kind: input, shape index: {}]
  %s7 = inlined_call_operand.hbm [shape: f32[32,128], index: 7, kind: output, shape index: {}]
  %s8 = sld [smem:[#allocation0]]
  $region38: #{_melody_encoder_impl.1} parent=0
    _
  %s10 = ssub.s32 1, %s8
  %s11 = scalar_select 0, %s10, %s8
  $region1: #{_melody_encoder_impl.1} parent=0
    #allocation2 [shape = 'u8[16384]{0}', space=vmem, size = 0x4000, scoped, tag = 'output window, operand 0, single buffered']
    #allocation3 [shape = 's32[1]{0}', space=sflag, size = 0x4, scoped, tag = 'scoped memory for _melody_encoder_impl.1']
    %12 = vsyncpa [#allocation3], 0
    // Predicated region
    $region2: #{_melody_encoder_impl.1} parent=1 // pred_check
      _
    $region3: #{_melody_encoder_impl.1} parent=1 // pred_check_branch
      %14 = sbr.rel (0) target = $region5
    $region4: #{_melody_encoder_impl.1} parent=1 // pred_region
      _
    $region5: #{_melody_encoder_impl.1} parent=1 // pred_fallthru
      _
    // Predicated region
    $region6: #{_melody_encoder_impl.1} parent=1 // pred_check
      _
    $region7: #{_melody_encoder_impl.1} parent=1 // pred_check_branch
      %16 = sbr.rel (0) target = $region9
    $region8: #{_melody_encoder_impl.1} parent=1 // pred_region
      _
    $region9: #{_melody_encoder_impl.1} parent=1 // pred_fallthru
      _
    // Predicated region
    $region10: #{_melody_encoder_impl.1} parent=1 // pred_check
      _
    $region11: #{_melody_encoder_impl.1} parent=1 // pred_check_branch
      %18 = sbr.rel (0) target = $region13
    $region12: #{_melody_encoder_impl.1} parent=1 // pred_region
      _
    $region13: #{_melody_encoder_impl.1} parent=1 // pred_fallthru
      _
    // Predicated region
    $region14: #{_melody_encoder_impl.1} parent=1 // pred_check
      _
    $region15: #{_melody_encoder_impl.1} parent=1 // pred_check_branch
      %20 = sbr.rel (0) target = $region17
    $region16: #{_melody_encoder_impl.1} parent=1 // pred_region
      _
    $region17: #{_melody_encoder_impl.1} parent=1 // pred_fallthru
      _
    // Predicated region
    $region18: #{_melody_encoder_impl.1} parent=1 // pred_check
      _
    $region19: #{_melody_encoder_impl.1} parent=1 // pred_check_branch
      %22 = sbr.rel (0) target = $region21
    $region20: #{_melody_encoder_impl.1} parent=1 // pred_region
      _
    $region21: #{_melody_encoder_impl.1} parent=1 // pred_fallthru
      _
    // Predicated region
    $region22: #{_melody_encoder_impl.1} parent=1 // pred_check
      _
    $region23: #{_melody_encoder_impl.1} parent=1 // pred_check_branch
      %24 = sbr.rel (0) target = $region25
    $region24: #{_melody_encoder_impl.1} parent=1 // pred_region
      _
    $region25: #{_melody_encoder_impl.1} parent=1 // pred_fallthru
      _
    // Predicated region
    $region26: #{_melody_encoder_impl.1} parent=1 // pred_check
      _
    $region27: #{_melody_encoder_impl.1} parent=1 // pred_check_branch
      %26 = sbr.rel (0) target = $region29
    $region28: #{_melody_encoder_impl.1} parent=1 // pred_region
      _
    $region29: #{_melody_encoder_impl.1} parent=1 // pred_fallthru
      _
    %v28 = vld [vmem:[%s0] sm:$0xff]
    %v29 = vld [vmem:[%s0 + $0x8] sm:$0xff]
    %v30 = vld [vmem:[%s0 + $0x10] sm:$0xff]
    %v31 = vld [vmem:[%s0 + $0x18] sm:$0xff]
    %s32 = scalar_lea.vmem %s0, 32
    %v33 = vld [vmem:[%s32] sm:$0xff]
    %v34 = vld [vmem:[%s32 + $0x8] sm:$0xff]
    %v35 = vld [vmem:[%s32 + $0x10] sm:$0xff]
    %v36 = vld [vmem:[%s32 + $0x18] sm:$0xff]
    %v37 = vld [vmem:[%s1] sm:$0xff]
    %v38 = vld [vmem:[%s1 + $0x8] sm:$0xff]
    %v39 = vld [vmem:[%s1 + $0x10] sm:$0xff]
    %v40 = vld [vmem:[%s1 + $0x18] sm:$0xff]
    %v41 = vld [vmem:[%s2] sm:$0x1]
    %v42 = vld [vmem:[%s2 + $0x1] sm:$0x1]
    %vm43 = vcmask 523264
    %v44 = vsel %vm43, %v28, 0.0
    %45 = vadd.xlane.f32.xlu0 %v44
    %v46 = vpop.xlane.xlu0 %45
    %v47 = vsel %vm43, %v29, 0.0
    %48 = vadd.xlane.f32.xlu0 %v47
    %v49 = vpop.xlane.xlu0 %48
    %v50 = vsel %vm43, %v30, 0.0
    %51 = vadd.xlane.f32.xlu0 %v50
    %v52 = vpop.xlane.xlu0 %51
    %v53 = vsel %vm43, %v31, 0.0
    %54 = vadd.xlane.f32.xlu0 %v53
    %v55 = vpop.xlane.xlu0 %54
    %v56 = vrcp.pop 64.0
    %v57 = vmul.f32 %v46, %v56
    %v58 = vmul.f32 %v49, %v56
    %v59 = vmul.f32 %v52, %v56
    %v60 = vmul.f32 %v55, %v56
    %v61 = vsub.f32 %v28, %v57
    %v62 = vsub.f32 %v29, %v58
    %v63 = vsub.f32 %v30, %v59
    %v64 = vsub.f32 %v31, %v60
    %v65 = vmul.f32 %v61, %v61
    %v66 = vmul.f32 %v62, %v62
    %v67 = vmul.f32 %v63, %v63
    %v68 = vmul.f32 %v64, %v64
    %v69 = vsel %vm43, %v65, 0.0
    %70 = vadd.xlane.f32.xlu0 %v69
    %v71 = vpop.xlane.xlu0 %70
    %v72 = vsel %vm43, %v66, 0.0
    %73 = vadd.xlane.f32.xlu0 %v72
    %v74 = vpop.xlane.xlu0 %73
    %v75 = vsel %vm43, %v67, 0.0
    %76 = vadd.xlane.f32.xlu0 %v75
    %v77 = vpop.xlane.xlu0 %76
    %v78 = vsel %vm43, %v68, 0.0
    %79 = vadd.xlane.f32.xlu0 %v78
    %v80 = vpop.xlane.xlu0 %79
    %v81 = vmul.f32 %v71, %v56
    %v82 = vmul.f32 %v74, %v56
    %v83 = vmul.f32 %v77, %v56
    %v84 = vmul.f32 %v80, %v56
    %v85 = vadd.f32 %v81, 1e-05
    %v86 = vadd.f32 %v82, 1e-05
    %v87 = vadd.f32 %v83, 1e-05
    %v88 = vadd.f32 %v84, 1e-05
    %v89 = vrsqrt.pop %v85
    %v90 = vrsqrt.pop %v86
    %v91 = vrsqrt.pop %v87
    %v92 = vrsqrt.pop %v88
    %v93 = vmul.f32 %v61, %v89
    %v94 = vmul.f32 %v62, %v90
    %v95 = vmul.f32 %v63, %v91
    %v96 = vmul.f32 %v64, %v92
    %v97 = vlaneseq
    %v98 = vshrl.u32 %v97, 7
    %v99 = vsub.s32 0, %v98
    %v100 = vrot.slane %v41, %v99
    %v101 = vmul.f32 %v93, %v100
    %v102 = vmul.f32 %v94, %v100
    %v103 = vmul.f32 %v95, %v100
    %v104 = vmul.f32 %v96, %v100
    %v105 = vlaneseq
    %v106 = vshrl.u32 %v105, 7
    %v107 = vsub.s32 0, %v106
    %v108 = vrot.slane %v42, %v107
    %v109 = vadd.f32 %v101, %v108
    %v110 = vadd.f32 %v102, %v108
    %v111 = vadd.f32 %v103, %v108
    %v112 = vadd.f32 %v104, %v108
    %v113 = vpack.c.bf16 %v110, %v109
    %v114 = vpack.c.bf16 %v112, %v111
    %v115 = vld [vmem:[%s4] sm:$0xff]
    %v116 = vld [vmem:[%s4 + $0x8] sm:$0xff]
    %v117 = vld [vmem:[%s4 + $0x10] sm:$0xff]
    %v118 = vld [vmem:[%s4 + $0x18] sm:$0xff]
    %v119 = vld [vmem:[%s4 + $0x20] sm:$0xff]
    %v120 = vld [vmem:[%s4 + $0x28] sm:$0xff]
    %v121 = vld [vmem:[%s4 + $0x30] sm:$0xff]
    %v122 = vld [vmem:[%s4 + $0x38] sm:$0xff]
    %v131 = vunpack.c.l.b16 %v115
    %v132 = vunpack.c.h.b16 %v115
    %v133 = vunpack.c.l.b16 %v116
    %v134 = vunpack.c.h.b16 %v116
    %v135 = vunpack.c.l.b16 %v117
    %v136 = vunpack.c.h.b16 %v117
    %v137 = vunpack.c.l.b16 %v118
    %v138 = vunpack.c.h.b16 %v118
    %v139 = vunpack.c.l.b16 %v119
    %v140 = vunpack.c.h.b16 %v119
    %v141 = vunpack.c.l.b16 %v120
    %v142 = vunpack.c.h.b16 %v120
    %v143 = vunpack.c.l.b16 %v121
    %v144 = vunpack.c.h.b16 %v121
    %v145 = vunpack.c.l.b16 %v122
    %v146 = vunpack.c.h.b16 %v122
    %v147 = vpack.c.b16 %v133, %v131
    %v148 = vpack.c.b16 %v134, %v132
    %v149 = vpack.c.b16 %v137, %v135
    %v150 = vpack.c.b16 %v138, %v136
    %v151 = vpack.c.b16 %v141, %v139
    %v152 = vpack.c.b16 %v142, %v140
    %v153 = vpack.c.b16 %v145, %v143
    %v154 = vpack.c.b16 %v146, %v144
    %v164 = vsel %vm43, %v113, 0
    %v167 = vsel %vm43, %v114, 0
    %169 = vmatprep.subr.bf16.mxu0 %v148
    %170 = vmatpush1.bf16.msra.mxu0 %v147
    %171 = vmatprep.subr.bf16.mxu0 %v150
    %172 = vmatpush1.bf16.msra.mxu0 %v149
    %173 = vmatprep.subr.bf16.mxu0 %v152
    %174 = vmatpush1.bf16.msra.mxu0 %v151
    %175 = vmatprep.subr.bf16.mxu0 %v154
    %176 = vmatpush1.bf16.msra.mxu0 %v153
    %177 = vmatprep.subr.bf16.mxu0 0
    %178 = vmatpush1.bf16.msra.mxu0 0
    %179 = vmatprep.subr.bf16.mxu0 0
    %180 = vmatpush1.bf16.msra.mxu0 0
    %181 = vmatprep.subr.bf16.mxu0 0
    %182 = vmatpush1.bf16.msra.mxu0 0
    %183 = vmatprep.subr.bf16.mxu0 0
    %184 = vmatpush1.bf16.msra.mxu0 0
    %185 = vmatprep.subr.bf16.mxu0 0
    %186 = vmatpush1.bf16.msra.mxu0 0
    %187 = vmatprep.subr.bf16.mxu0 0
    %188 = vmatpush1.bf16.msra.mxu0 0
    %189 = vmatprep.subr.bf16.mxu0 0
    %190 = vmatpush1.bf16.msra.mxu0 0
    %191 = vmatprep.subr.bf16.mxu0 0
    %192 = vmatpush1.bf16.msra.mxu0 0
    %193 = vmatprep.subr.bf16.mxu0 0
    %194 = vmatpush1.bf16.msra.mxu0 0
    %195 = vmatprep.subr.bf16.mxu0 0
    %196 = vmatpush1.bf16.msra.mxu0 0
    %197 = vmatprep.subr.bf16.mxu0 0
    %198 = vmatpush1.bf16.msra.mxu0 0
    %199 = vmatprep.subr.bf16.mxu0 0
    %200 = vmatpush1.bf16.msra.mxu0 0
    %201 = vmatprep.mubr.bf16.mxu0 0
    %202 = vmatmul.mubr.bf16.gmra.mrb[0].mxu0 %v164
    %v203 = vpop.f32.mrb[0].mxu0
    %v204 = vadd.f32 0.0, %v203
    %v205 = vpop.f32.mrb[0].mxu0
    %v206 = vadd.f32 0.0, %v205
    %v207 = vpop.f32.mrb[0].mxu0
    %v208 = vadd.f32 0.0, %v207
    %v209 = vpop.f32.mrb[0].mxu0
    %v210 = vadd.f32 0.0, %v209
    %211 = vmatprep.mubr.bf16.mxu0 0
    %212 = vmatmul.mubr.bf16.gmra.mrb[0].mxu0 %v167
    %v213 = vpop.f32.mrb[0].mxu0
    %v214 = vadd.f32 0.0, %v213
    %v215 = vpop.f32.mrb[0].mxu0
    %v216 = vadd.f32 0.0, %v215
    %v217 = vpop.f32.mrb[0].mxu0
    %v218 = vadd.f32 0.0, %v217
    %v219 = vpop.f32.mrb[0].mxu0
    %v220 = vadd.f32 0.0, %v219
    %221 = vdwg.mxu0
    %v222 = vpack.c.bf16 %v208, %v204
    %v223 = vpack.c.bf16 %v210, %v206
    %v224 = vpack.c.bf16 %v218, %v214
    %v225 = vpack.c.bf16 %v220, %v216
    %228 = vrot.lane.b32.xlu0 %v222, 64
    %v229 = vpop.permute.xlu0 %228
    %230 = vrot.lane.b32.xlu0 %v224, 64
    %v231 = vpop.permute.xlu0 %230
    %vm232 = vcmask 261120
    %v234 = vsel %vm232, %v222, 0
    %v237 = vsel %vm232, %v224, 0
    %v240 = vsel %vm232, %v229, 0
    %v243 = vsel %vm232, %v231, 0
    %245 = vmatprep.subr.bf16.mxu0 0
    %246 = vmatpush1.bf16.xpose.msra.mxu0 %v240
    %247 = vmatprep.subr.bf16.mxu0 0
    %248 = vmatpush1.bf16.xpose.msra.mxu0 %v243
    %249 = vmatprep.subr.bf16.mxu0 0
    %250 = vmatpush1.bf16.xpose.msra.mxu0 0
    %251 = vmatprep.subr.bf16.mxu0 0
    %252 = vmatpush1.bf16.xpose.msra.mxu0 0
    %253 = vmatprep.subr.bf16.mxu0 0
    %254 = vmatpush1.bf16.xpose.msra.mxu0 0
    %255 = vmatprep.subr.bf16.mxu0 0
    %256 = vmatpush1.bf16.xpose.msra.mxu0 0
    %257 = vmatprep.subr.bf16.mxu0 0
    %258 = vmatpush1.bf16.xpose.msra.mxu0 0
    %259 = vmatprep.subr.bf16.mxu0 0
    %260 = vmatpush1.bf16.xpose.msra.mxu0 0
    %261 = vmatprep.subr.bf16.mxu0 0
    %262 = vmatpush1.bf16.xpose.msra.mxu0 0
    %263 = vmatprep.subr.bf16.mxu0 0
    %264 = vmatpush1.bf16.xpose.msra.mxu0 0
    %265 = vmatprep.subr.bf16.mxu0 0
    %266 = vmatpush1.bf16.xpose.msra.mxu0 0
    %267 = vmatprep.subr.bf16.mxu0 0
    %268 = vmatpush1.bf16.xpose.msra.mxu0 0
    %269 = vmatprep.subr.bf16.mxu0 0
    %270 = vmatpush1.bf16.xpose.msra.mxu0 0
    %271 = vmatprep.subr.bf16.mxu0 0
    %272 = vmatpush1.bf16.xpose.msra.mxu0 0
    %273 = vmatprep.subr.bf16.mxu0 0
    %274 = vmatpush1.bf16.xpose.msra.mxu0 0
    %275 = vmatprep.subr.bf16.mxu0 0
    %276 = vmatpush1.bf16.xpose.msra.mxu0 0
    %277 = vmatprep.mubr.bf16.mxu0 0
    %278 = vmatmul.mubr.bf16.gmra.mrb[0].mxu0 %v234
    %v279 = vpop.f32.mrb[0].mxu0
    %v280 = vadd.f32 %v37, %v279
    %v281 = vpop.f32.mrb[0].mxu0
    %v282 = vpop.f32.mrb[0].mxu0
    %v283 = vadd.f32 %v38, %v282
    %v284 = vpop.f32.mrb[0].mxu0
    %285 = vmatprep.mubr.bf16.mxu0 0
    %286 = vmatmul.mubr.bf16.gmra.mrb[0].mxu0 %v237
    %v287 = vpop.f32.mrb[0].mxu0
    %v288 = vadd.f32 %v39, %v287
    %v289 = vpop.f32.mrb[0].mxu0
    %v290 = vpop.f32.mrb[0].mxu0
    %v291 = vadd.f32 %v40, %v290
    %v292 = vpop.f32.mrb[0].mxu0
    %293 = vdwg.mxu0
    %v294 = vsel %vm232, %v280, -inf
    %295 = vmax.xlane.f32.xlu0 %v294
    %v296 = vpop.xlane.xlu0 %295
    %v297 = vsel %vm232, %v283, -inf
    %298 = vmax.xlane.f32.xlu0 %v297
    %v299 = vpop.xlane.xlu0 %298
    %v300 = vsel %vm232, %v288, -inf
    %301 = vmax.xlane.f32.xlu0 %v300
    %v302 = vpop.xlane.xlu0 %301
    %v303 = vsel %vm232, %v291, -inf
    %304 = vmax.xlane.f32.xlu0 %v303
    %v305 = vpop.xlane.xlu0 %304
    %v306 = vsub.f32 %v280, %v296
    %v307 = vsub.f32 %v283, %v299
    %v308 = vsub.f32 %v288, %v302
    %v309 = vsub.f32 %v291, %v305
    %v310 = vmul.f32 %v306, 1.442695
    %v311 = vpow.pop %v310
    %v312 = vmul.f32 %v307, 1.442695
    %v313 = vpow.pop %v312
    %v314 = vmul.f32 %v308, 1.442695
    %v315 = vpow.pop %v314
    %v316 = vmul.f32 %v309, 1.442695
    %v317 = vpow.pop %v316
    %v318 = vsel %vm232, %v311, 0.0
    %319 = vadd.xlane.f32.xlu0 %v318
    %v320 = vpop.xlane.xlu0 %319
    %v321 = vsel %vm232, %v313, 0.0
    %322 = vadd.xlane.f32.xlu0 %v321
    %v323 = vpop.xlane.xlu0 %322
    %v324 = vsel %vm232, %v315, 0.0
    %325 = vadd.xlane.f32.xlu0 %v324
    %v326 = vpop.xlane.xlu0 %325
    %v327 = vsel %vm232, %v317, 0.0
    %328 = vadd.xlane.f32.xlu0 %v327
    %v329 = vpop.xlane.xlu0 %328
    %v330 = vrcp.pop %v320
    %v331 = vrcp.pop %v323
    %v332 = vrcp.pop %v326
    %v333 = vrcp.pop %v329
    %v334 = vmul.f32 %v311, %v330
    %v335 = vmul.f32 %v313, %v331
    %v336 = vmul.f32 %v315, %v332
    %v337 = vmul.f32 %v317, %v333
    %v338 = vpack.c.bf16 %v335, %v334
    %v339 = vpack.c.bf16 %v337, %v336
    %340 = vrot.lane.b32.xlu0 %v222, 96
    %v341 = vpop.permute.xlu0 %340
    %342 = vrot.lane.b32.xlu0 %v224, 96
    %v343 = vpop.permute.xlu0 %342
    %344 = vrot.lane.b32.xlu0 %v222, 32
    %v345 = vpop.permute.xlu0 %344
    %346 = vrot.lane.b32.xlu0 %v224, 32
    %v347 = vpop.permute.xlu0 %346
    %v349 = vsel %vm232, %v341, 0
    %v352 = vsel %vm232, %v343, 0
    %v355 = vsel %vm232, %v345, 0
    %v358 = vsel %vm232, %v347, 0
    %360 = vmatprep.subr.bf16.mxu0 0
    %361 = vmatpush1.bf16.xpose.msra.mxu0 %v355
    %362 = vmatprep.subr.bf16.mxu0 0
    %363 = vmatpush1.bf16.xpose.msra.mxu0 %v358
    %364 = vmatprep.subr.bf16.mxu0 0
    %365 = vmatpush1.bf16.xpose.msra.mxu0 0
    %366 = vmatprep.subr.bf16.mxu0 0
    %367 = vmatpush1.bf16.xpose.msra.mxu0 0
    %368 = vmatprep.subr.bf16.mxu0 0
    %369 = vmatpush1.bf16.xpose.msra.mxu0 0
    %370 = vmatprep.subr.bf16.mxu0 0
    %371 = vmatpush1.bf16.xpose.msra.mxu0 0
    %372 = vmatprep.subr.bf16.mxu0 0
    %373 = vmatpush1.bf16.xpose.msra.mxu0 0
    %374 = vmatprep.subr.bf16.mxu0 0
    %375 = vmatpush1.bf16.xpose.msra.mxu0 0
    %376 = vmatprep.subr.bf16.mxu0 0
    %377 = vmatpush1.bf16.xpose.msra.mxu0 0
    %378 = vmatprep.subr.bf16.mxu0 0
    %379 = vmatpush1.bf16.xpose.msra.mxu0 0
    %380 = vmatprep.subr.bf16.mxu0 0
    %381 = vmatpush1.bf16.xpose.msra.mxu0 0
    %382 = vmatprep.subr.bf16.mxu0 0
    %383 = vmatpush1.bf16.xpose.msra.mxu0 0
    %384 = vmatprep.subr.bf16.mxu0 0
    %385 = vmatpush1.bf16.xpose.msra.mxu0 0
    %386 = vmatprep.subr.bf16.mxu0 0
    %387 = vmatpush1.bf16.xpose.msra.mxu0 0
    %388 = vmatprep.subr.bf16.mxu0 0
    %389 = vmatpush1.bf16.xpose.msra.mxu0 0
    %390 = vmatprep.subr.bf16.mxu0 0
    %391 = vmatpush1.bf16.xpose.msra.mxu0 0
    %392 = vmatprep.mubr.bf16.mxu0 0
    %393 = vmatmul.mubr.bf16.gmra.mrb[0].mxu0 %v349
    %v394 = vpop.f32.mrb[0].mxu0
    %v395 = vadd.f32 %v37, %v394
    %v396 = vpop.f32.mrb[0].mxu0
    %v397 = vpop.f32.mrb[0].mxu0
    %v398 = vadd.f32 %v38, %v397
    %v399 = vpop.f32.mrb[0].mxu0
    %400 = vmatprep.mubr.bf16.mxu0 0
    %401 = vmatmul.mubr.bf16.gmra.mrb[0].mxu0 %v352
    %v402 = vpop.f32.mrb[0].mxu0
    %v403 = vadd.f32 %v39, %v402
    %v404 = vpop.f32.mrb[0].mxu0
    %v405 = vpop.f32.mrb[0].mxu0
    %v406 = vadd.f32 %v40, %v405
    %v407 = vpop.f32.mrb[0].mxu0
    %408 = vdwg.mxu0
    %v409 = vsel %vm232, %v395, -inf
    %410 = vmax.xlane.f32.xlu0 %v409
    %v411 = vpop.xlane.xlu0 %410
    %v412 = vsel %vm232, %v398, -inf
    %413 = vmax.xlane.f32.xlu0 %v412
    %v414 = vpop.xlane.xlu0 %413
    %v415 = vsel %vm232, %v403, -inf
    %416 = vmax.xlane.f32.xlu0 %v415
    %v417 = vpop.xlane.xlu0 %416
    %v418 = vsel %vm232, %v406, -inf
    %419 = vmax.xlane.f32.xlu0 %v418
    %v420 = vpop.xlane.xlu0 %419
    %v421 = vsub.f32 %v395, %v411
    %v422 = vsub.f32 %v398, %v414
    %v423 = vsub.f32 %v403, %v417
    %v424 = vsub.f32 %v406, %v420
    %v425 = vmul.f32 %v421, 1.442695
    %v426 = vpow.pop %v425
    %v427 = vmul.f32 %v422, 1.442695
    %v428 = vpow.pop %v427
    %v429 = vmul.f32 %v423, 1.442695
    %v430 = vpow.pop %v429
    %v431 = vmul.f32 %v424, 1.442695
    %v432 = vpow.pop %v431
    %v433 = vsel %vm232, %v426, 0.0
    %434 = vadd.xlane.f32.xlu0 %v433
    %v435 = vpop.xlane.xlu0 %434
    %v436 = vsel %vm232, %v428, 0.0
    %437 = vadd.xlane.f32.xlu0 %v436
    %v438 = vpop.xlane.xlu0 %437
    %v439 = vsel %vm232, %v430, 0.0
    %440 = vadd.xlane.f32.xlu0 %v439
    %v441 = vpop.xlane.xlu0 %440
    %v442 = vsel %vm232, %v432, 0.0
    %443 = vadd.xlane.f32.xlu0 %v442
    %v444 = vpop.xlane.xlu0 %443
    %v445 = vrcp.pop %v435
    %v446 = vrcp.pop %v438
    %v447 = vrcp.pop %v441
    %v448 = vrcp.pop %v444
    %v449 = vmul.f32 %v426, %v445
    %v450 = vmul.f32 %v428, %v446
    %v451 = vmul.f32 %v430, %v447
    %v452 = vmul.f32 %v432, %v448
    %v453 = vpack.c.bf16 %v450, %v449
    %v454 = vpack.c.bf16 %v452, %v451
    %457 = vrot.lane.b32.xlu0 %v223, 64
    %v458 = vpop.permute.xlu0 %457
    %459 = vrot.lane.b32.xlu0 %v225, 64
    %v460 = vpop.permute.xlu0 %459
    %v464 = vsel %vm232, %v453, 0
    %v467 = vsel %vm232, %v454, 0
    %469 = vmatprep.subr.bf16.mxu0 0
    %470 = vmatpush1.bf16.msra.mxu0 %v458
    %471 = vmatprep.subr.bf16.mxu0 0
    %472 = vmatpush1.bf16.msra.mxu0 %v460
    %473 = vmatprep.subr.bf16.mxu0 0
    %474 = vmatpush1.bf16.msra.mxu0 0
    %475 = vmatprep.subr.bf16.mxu0 0
    %476 = vmatpush1.bf16.msra.mxu0 0
    %477 = vmatprep.subr.bf16.mxu0 0
    %478 = vmatpush1.bf16.msra.mxu0 0
    %479 = vmatprep.subr.bf16.mxu0 0
    %480 = vmatpush1.bf16.msra.mxu0 0
    %481 = vmatprep.subr.bf16.mxu0 0
    %482 = vmatpush1.bf16.msra.mxu0 0
    %483 = vmatprep.subr.bf16.mxu0 0
    %484 = vmatpush1.bf16.msra.mxu0 0
    %485 = vmatprep.subr.bf16.mxu0 0
    %486 = vmatpush1.bf16.msra.mxu0 0
    %487 = vmatprep.subr.bf16.mxu0 0
    %488 = vmatpush1.bf16.msra.mxu0 0
    %489 = vmatprep.subr.bf16.mxu0 0
    %490 = vmatpush1.bf16.msra.mxu0 0
    %491 = vmatprep.subr.bf16.mxu0 0
    %492 = vmatpush1.bf16.msra.mxu0 0
    %493 = vmatprep.subr.bf16.mxu0 0
    %494 = vmatpush1.bf16.msra.mxu0 0
    %495 = vmatprep.subr.bf16.mxu0 0
    %496 = vmatpush1.bf16.msra.mxu0 0
    %497 = vmatprep.subr.bf16.mxu0 0
    %498 = vmatpush1.bf16.msra.mxu0 0
    %499 = vmatprep.subr.bf16.mxu0 0
    %500 = vmatpush1.bf16.msra.mxu0 0
    %501 = vmatprep.mubr.bf16.mxu0 0
    %502 = vmatmul.mubr.bf16.gmra.mrb[0].mxu0 %v464
    %v503 = vpop.f32.mrb[0].mxu0
    %v504 = vadd.f32 0.0, %v503
    %v505 = vpop.f32.mrb[0].mxu0
    %v506 = vpop.f32.mrb[0].mxu0
    %v507 = vadd.f32 0.0, %v506
    %v508 = vpop.f32.mrb[0].mxu0
    %509 = vmatprep.mubr.bf16.mxu0 0
    %510 = vmatmul.mubr.bf16.gmra.mrb[0].mxu0 %v467
    %v511 = vpop.f32.mrb[0].mxu0
    %v512 = vadd.f32 0.0, %v511
    %v513 = vpop.f32.mrb[0].mxu0
    %v514 = vpop.f32.mrb[0].mxu0
    %v515 = vadd.f32 0.0, %v514
    %v516 = vpop.f32.mrb[0].mxu0
    %517 = vdwg.mxu0
    %v519 = vsel %vm232, %v338, 0
    %v522 = vsel %vm232, %v339, 0
    %524 = vmatprep.subr.bf16.mxu0 0
    %525 = vmatpush1.bf16.msra.mxu0 %v223
    %526 = vmatprep.subr.bf16.mxu0 0
    %527 = vmatpush1.bf16.msra.mxu0 %v225
    %528 = vmatprep.subr.bf16.mxu0 0
    %529 = vmatpush1.bf16.msra.mxu0 0
    %530 = vmatprep.subr.bf16.mxu0 0
    %531 = vmatpush1.bf16.msra.mxu0 0
    %532 = vmatprep.subr.bf16.mxu0 0
    %533 = vmatpush1.bf16.msra.mxu0 0
    %534 = vmatprep.subr.bf16.mxu0 0
    %535 = vmatpush1.bf16.msra.mxu0 0
    %536 = vmatprep.subr.bf16.mxu0 0
    %537 = vmatpush1.bf16.msra.mxu0 0
    %538 = vmatprep.subr.bf16.mxu0 0
    %539 = vmatpush1.bf16.msra.mxu0 0
    %540 = vmatprep.subr.bf16.mxu0 0
    %541 = vmatpush1.bf16.msra.mxu0 0
    %542 = vmatprep.subr.bf16.mxu0 0
    %543 = vmatpush1.bf16.msra.mxu0 0
    %544 = vmatprep.subr.bf16.mxu0 0
    %545 = vmatpush1.bf16.msra.mxu0 0
    %546 = vmatprep.subr.bf16.mxu0 0
    %547 = vmatpush1.bf16.msra.mxu0 0
    %548 = vmatprep.subr.bf16.mxu0 0
    %549 = vmatpush1.bf16.msra.mxu0 0
    %550 = vmatprep.subr.bf16.mxu0 0
    %551 = vmatpush1.bf16.msra.mxu0 0
    %552 = vmatprep.subr.bf16.mxu0 0
    %553 = vmatpush1.bf16.msra.mxu0 0
    %554 = vmatprep.subr.bf16.mxu0 0
    %555 = vmatpush1.bf16.msra.mxu0 0
    %556 = vmatprep.mubr.bf16.mxu0 0
    %557 = vmatmul.mubr.bf16.gmra.mrb[0].mxu0 %v519
    %v558 = vpop.f32.mrb[0].mxu0
    %v559 = vadd.f32 %v504, %v558
    %v560 = vpop.f32.mrb[0].mxu0
    %v561 = vpop.f32.mrb[0].mxu0
    %v562 = vadd.f32 %v507, %v561
    %v563 = vpop.f32.mrb[0].mxu0
    %564 = vmatprep.mubr.bf16.mxu0 0
    %565 = vmatmul.mubr.bf16.gmra.mrb[0].mxu0 %v522
    %v566 = vpop.f32.mrb[0].mxu0
    %v567 = vadd.f32 %v512, %v566
    %v568 = vpop.f32.mrb[0].mxu0
    %v569 = vpop.f32.mrb[0].mxu0
    %v570 = vadd.f32 %v515, %v569
    %v571 = vpop.f32.mrb[0].mxu0
    %572 = vdwg.mxu0
    %v573 = vadd.f32 %v28, %v559
    %v574 = vadd.f32 %v29, %v562
    %v575 = vadd.f32 %v30, %v567
    %v576 = vadd.f32 %v31, %v570
    %v577 = vmul.f32 %v573, %v33
    %v578 = vmul.f32 %v574, %v34
    %v579 = vmul.f32 %v575, %v35
    %v580 = vmul.f32 %v576, %v36
    %v581 = vld [vmem:[%s2 + $0x2] sm:$0x1]
    %v582 = vld [vmem:[%s2 + $0x3] sm:$0x1]
    %v583 = vsel %vm43, %v577, 0.0
    %584 = vadd.xlane.f32.xlu0 %v583
    %v585 = vpop.xlane.xlu0 %584
    %v586 = vsel %vm43, %v578, 0.0
    %587 = vadd.xlane.f32.xlu0 %v586
    %v588 = vpop.xlane.xlu0 %587
    %v589 = vsel %vm43, %v579, 0.0
    %590 = vadd.xlane.f32.xlu0 %v589
    %v591 = vpop.xlane.xlu0 %590
    %v592 = vsel %vm43, %v580, 0.0
    %593 = vadd.xlane.f32.xlu0 %v592
    %v594 = vpop.xlane.xlu0 %593
    %v595 = vmul.f32 %v585, %v56
    %v596 = vmul.f32 %v588, %v56
    %v597 = vmul.f32 %v591, %v56
    %v598 = vmul.f32 %v594, %v56
    %v599 = vsub.f32 %v577, %v595
    %v600 = vsub.f32 %v578, %v596
    %v601 = vsub.f32 %v579, %v597
    %v602 = vsub.f32 %v580, %v598
    %v603 = vmul.f32 %v599, %v599
    %v604 = vmul.f32 %v600, %v600
    %v605 = vmul.f32 %v601, %v601
    %v606 = vmul.f32 %v602, %v602
    %v607 = vsel %vm43, %v603, 0.0
    %608 = vadd.xlane.f32.xlu0 %v607
    %v609 = vpop.xlane.xlu0 %608
    %v610 = vsel %vm43, %v604, 0.0
    %611 = vadd.xlane.f32.xlu0 %v610
    %v612 = vpop.xlane.xlu0 %611
    %v613 = vsel %vm43, %v605, 0.0
    %614 = vadd.xlane.f32.xlu0 %v613
    %v615 = vpop.xlane.xlu0 %614
    %v616 = vsel %vm43, %v606, 0.0
    %617 = vadd.xlane.f32.xlu0 %v616
    %v618 = vpop.xlane.xlu0 %617
    %v619 = vmul.f32 %v609, %v56
    %v620 = vmul.f32 %v612, %v56
    %v621 = vmul.f32 %v615, %v56
    %v622 = vmul.f32 %v618, %v56
    %v623 = vadd.f32 %v619, 1e-05
    %v624 = vadd.f32 %v620, 1e-05
    %v625 = vadd.f32 %v621, 1e-05
    %v626 = vadd.f32 %v622, 1e-05
    %v627 = vrsqrt.pop %v623
    %v628 = vrsqrt.pop %v624
    %v629 = vrsqrt.pop %v625
    %v630 = vrsqrt.pop %v626
    %v631 = vmul.f32 %v599, %v627
    %v632 = vmul.f32 %v600, %v628
    %v633 = vmul.f32 %v601, %v629
    %v634 = vmul.f32 %v602, %v630
    %v635 = vlaneseq
    %v636 = vshrl.u32 %v635, 7
    %v637 = vsub.s32 0, %v636
    %v638 = vrot.slane %v581, %v637
    %v639 = vmul.f32 %v631, %v638
    %v640 = vmul.f32 %v632, %v638
    %v641 = vmul.f32 %v633, %v638
    %v642 = vmul.f32 %v634, %v638
    %v643 = vlaneseq
    %v644 = vshrl.u32 %v643, 7
    %v645 = vsub.s32 0, %v644
    %v646 = vrot.slane %v582, %v645
    %v647 = vadd.f32 %v639, %v646
    %v648 = vadd.f32 %v640, %v646
    %v649 = vadd.f32 %v641, %v646
    %v650 = vadd.f32 %v642, %v646
    %v651 = vpack.c.bf16 %v648, %v647
    %v652 = vpack.c.bf16 %v650, %v649
    %v653 = vld [vmem:[%s4 + $0x140] sm:$0xff]
    %v654 = vld [vmem:[%s4 + $0x148] sm:$0xff]
    %v655 = vld [vmem:[%s4 + $0x150] sm:$0xff]
    %v656 = vld [vmem:[%s4 + $0x158] sm:$0xff]
    %v657 = vld [vmem:[%s4 + $0x160] sm:$0xff]
    %v658 = vld [vmem:[%s4 + $0x168] sm:$0xff]
    %v659 = vld [vmem:[%s4 + $0x170] sm:$0xff]
    %v660 = vld [vmem:[%s4 + $0x178] sm:$0xff]
    %v661 = vrot.slane %v647, 4
    %v662 = vrot.slane %v648, 4
    %v663 = vrot.slane %v649, 4
    %v664 = vrot.slane %v650, 4
    %v665 = vlaneseq
    %v666 = vshrl.u32 %v665, 7
    %vm667 = vcmp.lt.s32.totalorder %v666, 4
    %v668 = vsel %vm667, %v663, %v664
    %v669 = vsel %vm667, %v662, %v663
    %v670 = vsel %vm667, %v661, %v662
    %v671 = vsel %vm667, %v664, %v661
    %s672 = scalar_lea.vmem %s0, 64
    %v673 = vld [vmem:[%s672] sm:$0xff]
    %v674 = vld [vmem:[%s672 + $0x8] sm:$0xff]
    %v675 = vld [vmem:[%s672 + $0x10] sm:$0xff]
    %v676 = vld [vmem:[%s672 + $0x18] sm:$0xff]
    %v677 = vmul.f32 %v671, %v673
    %v678 = vmul.f32 %v670, %v674
    %v679 = vmul.f32 %v669, %v675
    %v680 = vmul.f32 %v668, %v676
    %v681 = vpack.c.bf16 %v678, %v677
    %v682 = vpack.c.bf16 %v680, %v679
    %v683 = vld [vmem:[%s4 + $0x40] sm:$0xff]
    %v684 = vld [vmem:[%s4 + $0x48] sm:$0xff]
    %v685 = vld [vmem:[%s4 + $0x50] sm:$0xff]
    %v686 = vld [vmem:[%s4 + $0x58] sm:$0xff]
    %v687 = vld [vmem:[%s4 + $0x60] sm:$0xff]
    %v688 = vld [vmem:[%s4 + $0x68] sm:$0xff]
    %v689 = vld [vmem:[%s4 + $0x70] sm:$0xff]
    %v690 = vld [vmem:[%s4 + $0x78] sm:$0xff]
    %v699 = vunpack.c.l.b16 %v683
    %v700 = vunpack.c.h.b16 %v683
    %v701 = vunpack.c.l.b16 %v684
    %v702 = vunpack.c.h.b16 %v684
    %v703 = vunpack.c.l.b16 %v685
    %v704 = vunpack.c.h.b16 %v685
    %v705 = vunpack.c.l.b16 %v686
    %v706 = vunpack.c.h.b16 %v686
    %v707 = vunpack.c.l.b16 %v687
    %v708 = vunpack.c.h.b16 %v687
    %v709 = vunpack.c.l.b16 %v688
    %v710 = vunpack.c.h.b16 %v688
    %v711 = vunpack.c.l.b16 %v689
    %v712 = vunpack.c.h.b16 %v689
    %v713 = vunpack.c.l.b16 %v690
    %v714 = vunpack.c.h.b16 %v690
    %v715 = vpack.c.b16 %v701, %v699
    %v716 = vpack.c.b16 %v702, %v700
    %v717 = vpack.c.b16 %v705, %v703
    %v718 = vpack.c.b16 %v706, %v704
    %v719 = vpack.c.b16 %v709, %v707
    %v720 = vpack.c.b16 %v710, %v708
    %v721 = vpack.c.b16 %v713, %v711
    %v722 = vpack.c.b16 %v714, %v712
    %v732 = vsel %vm43, %v681, 0
    %v735 = vsel %vm43, %v682, 0
    %737 = vmatprep.subr.bf16.mxu0 %v716
    %738 = vmatpush1.bf16.msra.mxu0 %v715
    %739 = vmatprep.subr.bf16.mxu0 %v718
    %740 = vmatpush1.bf16.msra.mxu0 %v717
    %741 = vmatprep.subr.bf16.mxu0 %v720
    %742 = vmatpush1.bf16.msra.mxu0 %v719
    %743 = vmatprep.subr.bf16.mxu0 %v722
    %744 = vmatpush1.bf16.msra.mxu0 %v721
    %745 = vmatprep.subr.bf16.mxu0 0
    %746 = vmatpush1.bf16.msra.mxu0 0
    %747 = vmatprep.subr.bf16.mxu0 0
    %748 = vmatpush1.bf16.msra.mxu0 0
    %749 = vmatprep.subr.bf16.mxu0 0
    %750 = vmatpush1.bf16.msra.mxu0 0
    %751 = vmatprep.subr.bf16.mxu0 0
    %752 = vmatpush1.bf16.msra.mxu0 0
    %753 = vmatprep.subr.bf16.mxu0 0
    %754 = vmatpush1.bf16.msra.mxu0 0
    %755 = vmatprep.subr.bf16.mxu0 0
    %756 = vmatpush1.bf16.msra.mxu0 0
    %757 = vmatprep.subr.bf16.mxu0 0
    %758 = vmatpush1.bf16.msra.mxu0 0
    %759 = vmatprep.subr.bf16.mxu0 0
    %760 = vmatpush1.bf16.msra.mxu0 0
    %761 = vmatprep.subr.bf16.mxu0 0
    %762 = vmatpush1.bf16.msra.mxu0 0
    %763 = vmatprep.subr.bf16.mxu0 0
    %764 = vmatpush1.bf16.msra.mxu0 0
    %765 = vmatprep.subr.bf16.mxu0 0
    %766 = vmatpush1.bf16.msra.mxu0 0
    %767 = vmatprep.subr.bf16.mxu0 0
    %768 = vmatpush1.bf16.msra.mxu0 0
    %769 = vmatprep.mubr.bf16.mxu0 0
    %770 = vmatmul.mubr.bf16.gmra.mrb[0].mxu0 %v732
    %v771 = vpop.f32.mrb[0].mxu0
    %v772 = vadd.f32 0.0, %v771
    %v773 = vpop.f32.mrb[0].mxu0
    %v774 = vadd.f32 0.0, %v773
    %v775 = vpop.f32.mrb[0].mxu0
    %v776 = vadd.f32 0.0, %v775
    %v777 = vpop.f32.mrb[0].mxu0
    %v778 = vadd.f32 0.0, %v777
    %779 = vmatprep.mubr.bf16.mxu0 0
    %780 = vmatmul.mubr.bf16.gmra.mrb[0].mxu0 %v735
    %v781 = vpop.f32.mrb[0].mxu0
    %v782 = vadd.f32 0.0, %v781
    %v783 = vpop.f32.mrb[0].mxu0
    %v784 = vadd.f32 0.0, %v783
    %v785 = vpop.f32.mrb[0].mxu0
    %v786 = vadd.f32 0.0, %v785
    %v787 = vpop.f32.mrb[0].mxu0
    %v788 = vadd.f32 0.0, %v787
    %789 = vdwg.mxu0
    %v798 = vunpack.c.l.b16 %v653
    %v799 = vunpack.c.h.b16 %v653
    %v800 = vunpack.c.l.b16 %v654
    %v801 = vunpack.c.h.b16 %v654
    %v802 = vunpack.c.l.b16 %v655
    %v803 = vunpack.c.h.b16 %v655
    %v804 = vunpack.c.l.b16 %v656
    %v805 = vunpack.c.h.b16 %v656
    %v806 = vunpack.c.l.b16 %v657
    %v807 = vunpack.c.h.b16 %v657
    %v808 = vunpack.c.l.b16 %v658
    %v809 = vunpack.c.h.b16 %v658
    %v810 = vunpack.c.l.b16 %v659
    %v811 = vunpack.c.h.b16 %v659
    %v812 = vunpack.c.l.b16 %v660
    %v813 = vunpack.c.h.b16 %v660
    %v814 = vpack.c.b16 %v800, %v798
    %v815 = vpack.c.b16 %v801, %v799
    %v816 = vpack.c.b16 %v804, %v802
    %v817 = vpack.c.b16 %v805, %v803
    %v818 = vpack.c.b16 %v808, %v806
    %v819 = vpack.c.b16 %v809, %v807
    %v820 = vpack.c.b16 %v812, %v810
    %v821 = vpack.c.b16 %v813, %v811
    %v831 = vsel %vm43, %v651, 0
    %v834 = vsel %vm43, %v652, 0
    %836 = vmatprep.subr.bf16.mxu0 %v815
    %837 = vmatpush1.bf16.msra.mxu0 %v814
    %838 = vmatprep.subr.bf16.mxu0 %v817
    %839 = vmatpush1.bf16.msra.mxu0 %v816
    %840 = vmatprep.subr.bf16.mxu0 %v819
    %841 = vmatpush1.bf16.msra.mxu0 %v818
    %842 = vmatprep.subr.bf16.mxu0 %v821
    %843 = vmatpush1.bf16.msra.mxu0 %v820
    %844 = vmatprep.subr.bf16.mxu0 0
    %845 = vmatpush1.bf16.msra.mxu0 0
    %846 = vmatprep.subr.bf16.mxu0 0
    %847 = vmatpush1.bf16.msra.mxu0 0
    %848 = vmatprep.subr.bf16.mxu0 0
    %849 = vmatpush1.bf16.msra.mxu0 0
    %850 = vmatprep.subr.bf16.mxu0 0
    %851 = vmatpush1.bf16.msra.mxu0 0
    %852 = vmatprep.subr.bf16.mxu0 0
    %853 = vmatpush1.bf16.msra.mxu0 0
    %854 = vmatprep.subr.bf16.mxu0 0
    %855 = vmatpush1.bf16.msra.mxu0 0
    %856 = vmatprep.subr.bf16.mxu0 0
    %857 = vmatpush1.bf16.msra.mxu0 0
    %858 = vmatprep.subr.bf16.mxu0 0
    %859 = vmatpush1.bf16.msra.mxu0 0
    %860 = vmatprep.subr.bf16.mxu0 0
    %861 = vmatpush1.bf16.msra.mxu0 0
    %862 = vmatprep.subr.bf16.mxu0 0
    %863 = vmatpush1.bf16.msra.mxu0 0
    %864 = vmatprep.subr.bf16.mxu0 0
    %865 = vmatpush1.bf16.msra.mxu0 0
    %866 = vmatprep.subr.bf16.mxu0 0
    %867 = vmatpush1.bf16.msra.mxu0 0
    %868 = vmatprep.mubr.bf16.mxu0 0
    %869 = vmatmul.mubr.bf16.gmra.mrb[0].mxu0 %v831
    %v870 = vpop.f32.mrb[0].mxu0
    %v871 = vadd.f32 %v772, %v870
    %v872 = vpop.f32.mrb[0].mxu0
    %v873 = vadd.f32 %v774, %v872
    %v874 = vpop.f32.mrb[0].mxu0
    %v875 = vadd.f32 %v776, %v874
    %v876 = vpop.f32.mrb[0].mxu0
    %v877 = vadd.f32 %v778, %v876
    %878 = vmatprep.mubr.bf16.mxu0 0
    %879 = vmatmul.mubr.bf16.gmra.mrb[0].mxu0 %v834
    %v880 = vpop.f32.mrb[0].mxu0
    %v881 = vadd.f32 %v782, %v880
    %v882 = vpop.f32.mrb[0].mxu0
    %v883 = vadd.f32 %v784, %v882
    %v884 = vpop.f32.mrb[0].mxu0
    %v885 = vadd.f32 %v786, %v884
    %v886 = vpop.f32.mrb[0].mxu0
    %v887 = vadd.f32 %v788, %v886
    %888 = vdwg.mxu0
    %v889 = vrot.slane %v647, 5
    %v890 = vrot.slane %v648, 5
    %v891 = vrot.slane %v649, 5
    %v892 = vrot.slane %v650, 5
    %vm893 = vcmp.lt.s32.totalorder %v666, 3
    %v894 = vsel %vm893, %v891, %v892
    %v895 = vsel %vm893, %v890, %v891
    %v896 = vsel %vm893, %v889, %v890
    %v897 = vsel %vm893, %v892, %v889
    %s898 = scalar_lea.vmem %s0, 96
    %v899 = vld [vmem:[%s898] sm:$0xff]
    %v900 = vld [vmem:[%s898 + $0x8] sm:$0xff]
    %v901 = vld [vmem:[%s898 + $0x10] sm:$0xff]
    %v902 = vld [vmem:[%s898 + $0x18] sm:$0xff]
    %v903 = vmul.f32 %v897, %v899
    %v904 = vmul.f32 %v896, %v900
    %v905 = vmul.f32 %v895, %v901
    %v906 = vmul.f32 %v894, %v902
    %v907 = vpack.c.bf16 %v904, %v903
    %v908 = vpack.c.bf16 %v906, %v905
    %v909 = vld [vmem:[%s4 + $0x80] sm:$0xff]
    %v910 = vld [vmem:[%s4 + $0x88] sm:$0xff]
    %v911 = vld [vmem:[%s4 + $0x90] sm:$0xff]
    %v912 = vld [vmem:[%s4 + $0x98] sm:$0xff]
    %v913 = vld [vmem:[%s4 + $0xa0] sm:$0xff]
    %v914 = vld [vmem:[%s4 + $0xa8] sm:$0xff]
    %v915 = vld [vmem:[%s4 + $0xb0] sm:$0xff]
    %v916 = vld [vmem:[%s4 + $0xb8] sm:$0xff]
    %v925 = vunpack.c.l.b16 %v909
    %v926 = vunpack.c.h.b16 %v909
    %v927 = vunpack.c.l.b16 %v910
    %v928 = vunpack.c.h.b16 %v910
    %v929 = vunpack.c.l.b16 %v911
    %v930 = vunpack.c.h.b16 %v911
    %v931 = vunpack.c.l.b16 %v912
    %v932 = vunpack.c.h.b16 %v912
    %v933 = vunpack.c.l.b16 %v913
    %v934 = vunpack.c.h.b16 %v913
    %v935 = vunpack.c.l.b16 %v914
    %v936 = vunpack.c.h.b16 %v914
    %v937 = vunpack.c.l.b16 %v915
    %v938 = vunpack.c.h.b16 %v915
    %v939 = vunpack.c.l.b16 %v916
    %v940 = vunpack.c.h.b16 %v916
    %v941 = vpack.c.b16 %v927, %v925
    %v942 = vpack.c.b16 %v928, %v926
    %v943 = vpack.c.b16 %v931, %v929
    %v944 = vpack.c.b16 %v932, %v930
    %v945 = vpack.c.b16 %v935, %v933
    %v946 = vpack.c.b16 %v936, %v934
    %v947 = vpack.c.b16 %v939, %v937
    %v948 = vpack.c.b16 %v940, %v938
    %v958 = vsel %vm43, %v907, 0
    %v961 = vsel %vm43, %v908, 0
    %963 = vmatprep.subr.bf16.mxu0 %v942
    %964 = vmatpush1.bf16.msra.mxu0 %v941
    %965 = vmatprep.subr.bf16.mxu0 %v944
    %966 = vmatpush1.bf16.msra.mxu0 %v943
    %967 = vmatprep.subr.bf16.mxu0 %v946
    %968 = vmatpush1.bf16.msra.mxu0 %v945
    %969 = vmatprep.subr.bf16.mxu0 %v948
    %970 = vmatpush1.bf16.msra.mxu0 %v947
    %971 = vmatprep.subr.bf16.mxu0 0
    %972 = vmatpush1.bf16.msra.mxu0 0
    %973 = vmatprep.subr.bf16.mxu0 0
    %974 = vmatpush1.bf16.msra.mxu0 0
    %975 = vmatprep.subr.bf16.mxu0 0
    %976 = vmatpush1.bf16.msra.mxu0 0
    %977 = vmatprep.subr.bf16.mxu0 0
    %978 = vmatpush1.bf16.msra.mxu0 0
    %979 = vmatprep.subr.bf16.mxu0 0
    %980 = vmatpush1.bf16.msra.mxu0 0
    %981 = vmatprep.subr.bf16.mxu0 0
    %982 = vmatpush1.bf16.msra.mxu0 0
    %983 = vmatprep.subr.bf16.mxu0 0
    %984 = vmatpush1.bf16.msra.mxu0 0
    %985 = vmatprep.subr.bf16.mxu0 0
    %986 = vmatpush1.bf16.msra.mxu0 0
    %987 = vmatprep.subr.bf16.mxu0 0
    %988 = vmatpush1.bf16.msra.mxu0 0
    %989 = vmatprep.subr.bf16.mxu0 0
    %990 = vmatpush1.bf16.msra.mxu0 0
    %991 = vmatprep.subr.bf16.mxu0 0
    %992 = vmatpush1.bf16.msra.mxu0 0
    %993 = vmatprep.subr.bf16.mxu0 0
    %994 = vmatpush1.bf16.msra.mxu0 0
    %995 = vmatprep.mubr.bf16.mxu0 0
    %996 = vmatmul.mubr.bf16.gmra.mrb[0].mxu0 %v958
    %v997 = vpop.f32.mrb[0].mxu0
    %v998 = vadd.f32 0.0, %v997
    %v999 = vpop.f32.mrb[0].mxu0
    %v1000 = vadd.f32 0.0, %v999
    %v1001 = vpop.f32.mrb[0].mxu0
    %v1002 = vadd.f32 0.0, %v1001
    %v1003 = vpop.f32.mrb[0].mxu0
    %v1004 = vadd.f32 0.0, %v1003
    %1005 = vmatprep.mubr.bf16.mxu0 0
    %1006 = vmatmul.mubr.bf16.gmra.mrb[0].mxu0 %v961
    %v1007 = vpop.f32.mrb[0].mxu0
    %v1008 = vadd.f32 0.0, %v1007
    %v1009 = vpop.f32.mrb[0].mxu0
    %v1010 = vadd.f32 0.0, %v1009
    %v1011 = vpop.f32.mrb[0].mxu0
    %v1012 = vadd.f32 0.0, %v1011
    %v1013 = vpop.f32.mrb[0].mxu0
    %v1014 = vadd.f32 0.0, %v1013
    %1015 = vdwg.mxu0
    %v1016 = vadd.f32 %v871, %v998
    %v1017 = vadd.f32 %v873, %v1000
    %v1018 = vadd.f32 %v875, %v1002
    %v1019 = vadd.f32 %v877, %v1004
    %v1020 = vadd.f32 %v881, %v1008
    %v1021 = vadd.f32 %v883, %v1010
    %v1022 = vadd.f32 %v885, %v1012
    %v1023 = vadd.f32 %v887, %v1014
    %v1024 = vrot.slane %v647, 6
    %v1025 = vrot.slane %v648, 6
    %v1026 = vrot.slane %v649, 6
    %v1027 = vrot.slane %v650, 6
    %vm1028 = vcmp.lt.s32.totalorder %v666, 2
    %v1029 = vsel %vm1028, %v1026, %v1027
    %v1030 = vsel %vm1028, %v1025, %v1026
    %v1031 = vsel %vm1028, %v1024, %v1025
    %v1032 = vsel %vm1028, %v1027, %v1024
    %s1033 = scalar_lea.vmem %s0, 128
    %v1034 = vld [vmem:[%s1033] sm:$0xff]
    %v1035 = vld [vmem:[%s1033 + $0x8] sm:$0xff]
    %v1036 = vld [vmem:[%s1033 + $0x10] sm:$0xff]
    %v1037 = vld [vmem:[%s1033 + $0x18] sm:$0xff]
    %v1038 = vmul.f32 %v1032, %v1034
    %v1039 = vmul.f32 %v1031, %v1035
    %v1040 = vmul.f32 %v1030, %v1036
    %v1041 = vmul.f32 %v1029, %v1037
    %v1042 = vpack.c.bf16 %v1039, %v1038
    %v1043 = vpack.c.bf16 %v1041, %v1040
    %v1044 = vld [vmem:[%s4 + $0xc0] sm:$0xff]
    %v1045 = vld [vmem:[%s4 + $0xc8] sm:$0xff]
    %v1046 = vld [vmem:[%s4 + $0xd0] sm:$0xff]
    %v1047 = vld [vmem:[%s4 + $0xd8] sm:$0xff]
    %v1048 = vld [vmem:[%s4 + $0xe0] sm:$0xff]
    %v1049 = vld [vmem:[%s4 + $0xe8] sm:$0xff]
    %v1050 = vld [vmem:[%s4 + $0xf0] sm:$0xff]
    %v1051 = vld [vmem:[%s4 + $0xf8] sm:$0xff]
    %v1060 = vunpack.c.l.b16 %v1044
    %v1061 = vunpack.c.h.b16 %v1044
    %v1062 = vunpack.c.l.b16 %v1045
    %v1063 = vunpack.c.h.b16 %v1045
    %v1064 = vunpack.c.l.b16 %v1046
    %v1065 = vunpack.c.h.b16 %v1046
    %v1066 = vunpack.c.l.b16 %v1047
    %v1067 = vunpack.c.h.b16 %v1047
    %v1068 = vunpack.c.l.b16 %v1048
    %v1069 = vunpack.c.h.b16 %v1048
    %v1070 = vunpack.c.l.b16 %v1049
    %v1071 = vunpack.c.h.b16 %v1049
    %v1072 = vunpack.c.l.b16 %v1050
    %v1073 = vunpack.c.h.b16 %v1050
    %v1074 = vunpack.c.l.b16 %v1051
    %v1075 = vunpack.c.h.b16 %v1051
    %v1076 = vpack.c.b16 %v1062, %v1060
    %v1077 = vpack.c.b16 %v1063, %v1061
    %v1078 = vpack.c.b16 %v1066, %v1064
    %v1079 = vpack.c.b16 %v1067, %v1065
    %v1080 = vpack.c.b16 %v1070, %v1068
    %v1081 = vpack.c.b16 %v1071, %v1069
    %v1082 = vpack.c.b16 %v1074, %v1072
    %v1083 = vpack.c.b16 %v1075, %v1073
    %v1093 = vsel %vm43, %v1042, 0
    %v1096 = vsel %vm43, %v1043, 0
    %1098 = vmatprep.subr.bf16.mxu0 %v1077
    %1099 = vmatpush1.bf16.msra.mxu0 %v1076
    %1100 = vmatprep.subr.bf16.mxu0 %v1079
    %1101 = vmatpush1.bf16.msra.mxu0 %v1078
    %1102 = vmatprep.subr.bf16.mxu0 %v1081
    %1103 = vmatpush1.bf16.msra.mxu0 %v1080
    %1104 = vmatprep.subr.bf16.mxu0 %v1083
    %1105 = vmatpush1.bf16.msra.mxu0 %v1082
    %1106 = vmatprep.subr.bf16.mxu0 0
    %1107 = vmatpush1.bf16.msra.mxu0 0
    %1108 = vmatprep.subr.bf16.mxu0 0
    %1109 = vmatpush1.bf16.msra.mxu0 0
    %1110 = vmatprep.subr.bf16.mxu0 0
    %1111 = vmatpush1.bf16.msra.mxu0 0
    %1112 = vmatprep.subr.bf16.mxu0 0
    %1113 = vmatpush1.bf16.msra.mxu0 0
    %1114 = vmatprep.subr.bf16.mxu0 0
    %1115 = vmatpush1.bf16.msra.mxu0 0
    %1116 = vmatprep.subr.bf16.mxu0 0
    %1117 = vmatpush1.bf16.msra.mxu0 0
    %1118 = vmatprep.subr.bf16.mxu0 0
    %1119 = vmatpush1.bf16.msra.mxu0 0
    %1120 = vmatprep.subr.bf16.mxu0 0
    %1121 = vmatpush1.bf16.msra.mxu0 0
    %1122 = vmatprep.subr.bf16.mxu0 0
    %1123 = vmatpush1.bf16.msra.mxu0 0
    %1124 = vmatprep.subr.bf16.mxu0 0
    %1125 = vmatpush1.bf16.msra.mxu0 0
    %1126 = vmatprep.subr.bf16.mxu0 0
    %1127 = vmatpush1.bf16.msra.mxu0 0
    %1128 = vmatprep.subr.bf16.mxu0 0
    %1129 = vmatpush1.bf16.msra.mxu0 0
    %1130 = vmatprep.mubr.bf16.mxu0 0
    %1131 = vmatmul.mubr.bf16.gmra.mrb[0].mxu0 %v1093
    %v1132 = vpop.f32.mrb[0].mxu0
    %v1133 = vadd.f32 0.0, %v1132
    %v1134 = vpop.f32.mrb[0].mxu0
    %v1135 = vadd.f32 0.0, %v1134
    %v1136 = vpop.f32.mrb[0].mxu0
    %v1137 = vadd.f32 0.0, %v1136
    %v1138 = vpop.f32.mrb[0].mxu0
    %v1139 = vadd.f32 0.0, %v1138
    %1140 = vmatprep.mubr.bf16.mxu0 0
    %1141 = vmatmul.mubr.bf16.gmra.mrb[0].mxu0 %v1096
    %v1142 = vpop.f32.mrb[0].mxu0
    %v1143 = vadd.f32 0.0, %v1142
    %v1144 = vpop.f32.mrb[0].mxu0
    %v1145 = vadd.f32 0.0, %v1144
    %v1146 = vpop.f32.mrb[0].mxu0
    %v1147 = vadd.f32 0.0, %v1146
    %v1148 = vpop.f32.mrb[0].mxu0
    %v1149 = vadd.f32 0.0, %v1148
    %1150 = vdwg.mxu0
    %v1151 = vadd.f32 %v1016, %v1133
    %v1152 = vadd.f32 %v1017, %v1135
    %v1153 = vadd.f32 %v1018, %v1137
    %v1154 = vadd.f32 %v1019, %v1139
    %v1155 = vadd.f32 %v1020, %v1143
    %v1156 = vadd.f32 %v1021, %v1145
    %v1157 = vadd.f32 %v1022, %v1147
    %v1158 = vadd.f32 %v1023, %v1149
    %v1159 = vrot.slane %v647, 7
    %v1160 = vrot.slane %v648, 7
    %v1161 = vrot.slane %v649, 7
    %v1162 = vrot.slane %v650, 7
    %vm1163 = vcmp.lt.s32.totalorder %v666, 1
    %v1164 = vsel %vm1163, %v1161, %v1162
    %v1165 = vsel %vm1163, %v1160, %v1161
    %v1166 = vsel %vm1163, %v1159, %v1160
    %v1167 = vsel %vm1163, %v1162, %v1159
    %s1168 = scalar_lea.vmem %s0, 160
    %v1169 = vld [vmem:[%s1168] sm:$0xff]
    %v1170 = vld [vmem:[%s1168 + $0x8] sm:$0xff]
    %v1171 = vld [vmem:[%s1168 + $0x10] sm:$0xff]
    %v1172 = vld [vmem:[%s1168 + $0x18] sm:$0xff]
    %v1173 = vmul.f32 %v1167, %v1169
    %v1174 = vmul.f32 %v1166, %v1170
    %v1175 = vmul.f32 %v1165, %v1171
    %v1176 = vmul.f32 %v1164, %v1172
    %v1177 = vpack.c.bf16 %v1174, %v1173
    %v1178 = vpack.c.bf16 %v1176, %v1175
    %v1179 = vld [vmem:[%s4 + $0x100] sm:$0xff]
    %v1180 = vld [vmem:[%s4 + $0x108] sm:$0xff]
    %v1181 = vld [vmem:[%s4 + $0x110] sm:$0xff]
    %v1182 = vld [vmem:[%s4 + $0x118] sm:$0xff]
    %v1183 = vld [vmem:[%s4 + $0x120] sm:$0xff]
    %v1184 = vld [vmem:[%s4 + $0x128] sm:$0xff]
    %v1185 = vld [vmem:[%s4 + $0x130] sm:$0xff]
    %v1186 = vld [vmem:[%s4 + $0x138] sm:$0xff]
    %v1195 = vunpack.c.l.b16 %v1179
    %v1196 = vunpack.c.h.b16 %v1179
    %v1197 = vunpack.c.l.b16 %v1180
    %v1198 = vunpack.c.h.b16 %v1180
    %v1199 = vunpack.c.l.b16 %v1181
    %v1200 = vunpack.c.h.b16 %v1181
    %v1201 = vunpack.c.l.b16 %v1182
    %v1202 = vunpack.c.h.b16 %v1182
    %v1203 = vunpack.c.l.b16 %v1183
    %v1204 = vunpack.c.h.b16 %v1183
    %v1205 = vunpack.c.l.b16 %v1184
    %v1206 = vunpack.c.h.b16 %v1184
    %v1207 = vunpack.c.l.b16 %v1185
    %v1208 = vunpack.c.h.b16 %v1185
    %v1209 = vunpack.c.l.b16 %v1186
    %v1210 = vunpack.c.h.b16 %v1186
    %v1211 = vpack.c.b16 %v1197, %v1195
    %v1212 = vpack.c.b16 %v1198, %v1196
    %v1213 = vpack.c.b16 %v1201, %v1199
    %v1214 = vpack.c.b16 %v1202, %v1200
    %v1215 = vpack.c.b16 %v1205, %v1203
    %v1216 = vpack.c.b16 %v1206, %v1204
    %v1217 = vpack.c.b16 %v1209, %v1207
    %v1218 = vpack.c.b16 %v1210, %v1208
    %v1228 = vsel %vm43, %v1177, 0
    %v1231 = vsel %vm43, %v1178, 0
    %1233 = vmatprep.subr.bf16.mxu0 %v1212
    %1234 = vmatpush1.bf16.msra.mxu0 %v1211
    %1235 = vmatprep.subr.bf16.mxu0 %v1214
    %1236 = vmatpush1.bf16.msra.mxu0 %v1213
    %1237 = vmatprep.subr.bf16.mxu0 %v1216
    %1238 = vmatpush1.bf16.msra.mxu0 %v1215
    %1239 = vmatprep.subr.bf16.mxu0 %v1218
    %1240 = vmatpush1.bf16.msra.mxu0 %v1217
    %1241 = vmatprep.subr.bf16.mxu0 0
    %1242 = vmatpush1.bf16.msra.mxu0 0
    %1243 = vmatprep.subr.bf16.mxu0 0
    %1244 = vmatpush1.bf16.msra.mxu0 0
    %1245 = vmatprep.subr.bf16.mxu0 0
    %1246 = vmatpush1.bf16.msra.mxu0 0
    %1247 = vmatprep.subr.bf16.mxu0 0
    %1248 = vmatpush1.bf16.msra.mxu0 0
    %1249 = vmatprep.subr.bf16.mxu0 0
    %1250 = vmatpush1.bf16.msra.mxu0 0
    %1251 = vmatprep.subr.bf16.mxu0 0
    %1252 = vmatpush1.bf16.msra.mxu0 0
    %1253 = vmatprep.subr.bf16.mxu0 0
    %1254 = vmatpush1.bf16.msra.mxu0 0
    %1255 = vmatprep.subr.bf16.mxu0 0
    %1256 = vmatpush1.bf16.msra.mxu0 0
    %1257 = vmatprep.subr.bf16.mxu0 0
    %1258 = vmatpush1.bf16.msra.mxu0 0
    %1259 = vmatprep.subr.bf16.mxu0 0
    %1260 = vmatpush1.bf16.msra.mxu0 0
    %1261 = vmatprep.subr.bf16.mxu0 0
    %1262 = vmatpush1.bf16.msra.mxu0 0
    %1263 = vmatprep.subr.bf16.mxu0 0
    %1264 = vmatpush1.bf16.msra.mxu0 0
    %1265 = vmatprep.mubr.bf16.mxu0 0
    %1266 = vmatmul.mubr.bf16.gmra.mrb[0].mxu0 %v1228
    %v1267 = vpop.f32.mrb[0].mxu0
    %v1268 = vadd.f32 0.0, %v1267
    %v1269 = vpop.f32.mrb[0].mxu0
    %v1270 = vadd.f32 0.0, %v1269
    %v1271 = vpop.f32.mrb[0].mxu0
    %v1272 = vadd.f32 0.0, %v1271
    %v1273 = vpop.f32.mrb[0].mxu0
    %v1274 = vadd.f32 0.0, %v1273
    %1275 = vmatprep.mubr.bf16.mxu0 0
    %1276 = vmatmul.mubr.bf16.gmra.mrb[0].mxu0 %v1231
    %v1277 = vpop.f32.mrb[0].mxu0
    %v1278 = vadd.f32 0.0, %v1277
    %v1279 = vpop.f32.mrb[0].mxu0
    %v1280 = vadd.f32 0.0, %v1279
    %v1281 = vpop.f32.mrb[0].mxu0
    %v1282 = vadd.f32 0.0, %v1281
    %v1283 = vpop.f32.mrb[0].mxu0
    %v1284 = vadd.f32 0.0, %v1283
    %1285 = vdwg.mxu0
    %v1286 = vadd.f32 %v1151, %v1268
    %v1287 = vadd.f32 %v1152, %v1270
    %v1288 = vadd.f32 %v1153, %v1272
    %v1289 = vadd.f32 %v1154, %v1274
    %v1290 = vadd.f32 %v1155, %v1278
    %v1291 = vadd.f32 %v1156, %v1280
    %v1292 = vadd.f32 %v1157, %v1282
    %v1293 = vadd.f32 %v1158, %v1284
    %v1294 = vrot.slane %v647, 1
    %v1295 = vrot.slane %v648, 1
    %v1296 = vrot.slane %v649, 1
    %v1297 = vrot.slane %v650, 1
    %vm1298 = vcmp.lt.s32.totalorder %v666, 7
    %v1299 = vsel %vm1298, %v1296, %v1297
    %v1300 = vsel %vm1298, %v1295, %v1296
    %v1301 = vsel %vm1298, %v1294, %v1295
    %v1302 = vsel %vm1298, %v1297, %v1294
    %s1303 = scalar_lea.vmem %s0, 224
    %v1304 = vld [vmem:[%s1303] sm:$0xff]
    %v1305 = vld [vmem:[%s1303 + $0x8] sm:$0xff]
    %v1306 = vld [vmem:[%s1303 + $0x10] sm:$0xff]
    %v1307 = vld [vmem:[%s1303 + $0x18] sm:$0xff]
    %v1308 = vmul.f32 %v1301, %v1304
    %v1309 = vmul.f32 %v1300, %v1305
    %v1310 = vmul.f32 %v1299, %v1306
    %v1311 = vmul.f32 %v1302, %v1307
    %v1312 = vpack.c.bf16 %v1309, %v1308
    %v1313 = vpack.c.bf16 %v1311, %v1310
    %v1314 = vld [vmem:[%s4 + $0x180] sm:$0xff]
    %v1315 = vld [vmem:[%s4 + $0x188] sm:$0xff]
    %v1316 = vld [vmem:[%s4 + $0x190] sm:$0xff]
    %v1317 = vld [vmem:[%s4 + $0x198] sm:$0xff]
    %v1318 = vld [vmem:[%s4 + $0x1a0] sm:$0xff]
    %v1319 = vld [vmem:[%s4 + $0x1a8] sm:$0xff]
    %v1320 = vld [vmem:[%s4 + $0x1b0] sm:$0xff]
    %v1321 = vld [vmem:[%s4 + $0x1b8] sm:$0xff]
    %v1330 = vunpack.c.l.b16 %v1314
    %v1331 = vunpack.c.h.b16 %v1314
    %v1332 = vunpack.c.l.b16 %v1315
    %v1333 = vunpack.c.h.b16 %v1315
    %v1334 = vunpack.c.l.b16 %v1316
    %v1335 = vunpack.c.h.b16 %v1316
    %v1336 = vunpack.c.l.b16 %v1317
    %v1337 = vunpack.c.h.b16 %v1317
    %v1338 = vunpack.c.l.b16 %v1318
    %v1339 = vunpack.c.h.b16 %v1318
    %v1340 = vunpack.c.l.b16 %v1319
    %v1341 = vunpack.c.h.b16 %v1319
    %v1342 = vunpack.c.l.b16 %v1320
    %v1343 = vunpack.c.h.b16 %v1320
    %v1344 = vunpack.c.l.b16 %v1321
    %v1345 = vunpack.c.h.b16 %v1321
    %v1346 = vpack.c.b16 %v1332, %v1330
    %v1347 = vpack.c.b16 %v1333, %v1331
    %v1348 = vpack.c.b16 %v1336, %v1334
    %v1349 = vpack.c.b16 %v1337, %v1335
    %v1350 = vpack.c.b16 %v1340, %v1338
    %v1351 = vpack.c.b16 %v1341, %v1339
    %v1352 = vpack.c.b16 %v1344, %v1342
    %v1353 = vpack.c.b16 %v1345, %v1343
    %v1363 = vsel %vm43, %v1312, 0
    %v1366 = vsel %vm43, %v1313, 0
    %1368 = vmatprep.subr.bf16.mxu0 %v1347
    %1369 = vmatpush1.bf16.msra.mxu0 %v1346
    %1370 = vmatprep.subr.bf16.mxu0 %v1349
    %1371 = vmatpush1.bf16.msra.mxu0 %v1348
    %1372 = vmatprep.subr.bf16.mxu0 %v1351
    %1373 = vmatpush1.bf16.msra.mxu0 %v1350
    %1374 = vmatprep.subr.bf16.mxu0 %v1353
    %1375 = vmatpush1.bf16.msra.mxu0 %v1352
    %1376 = vmatprep.subr.bf16.mxu0 0
    %1377 = vmatpush1.bf16.msra.mxu0 0
    %1378 = vmatprep.subr.bf16.mxu0 0
    %1379 = vmatpush1.bf16.msra.mxu0 0
    %1380 = vmatprep.subr.bf16.mxu0 0
    %1381 = vmatpush1.bf16.msra.mxu0 0
    %1382 = vmatprep.subr.bf16.mxu0 0
    %1383 = vmatpush1.bf16.msra.mxu0 0
    %1384 = vmatprep.subr.bf16.mxu0 0
    %1385 = vmatpush1.bf16.msra.mxu0 0
    %1386 = vmatprep.subr.bf16.mxu0 0
    %1387 = vmatpush1.bf16.msra.mxu0 0
    %1388 = vmatprep.subr.bf16.mxu0 0
    %1389 = vmatpush1.bf16.msra.mxu0 0
    %1390 = vmatprep.subr.bf16.mxu0 0
    %1391 = vmatpush1.bf16.msra.mxu0 0
    %1392 = vmatprep.subr.bf16.mxu0 0
    %1393 = vmatpush1.bf16.msra.mxu0 0
    %1394 = vmatprep.subr.bf16.mxu0 0
    %1395 = vmatpush1.bf16.msra.mxu0 0
    %1396 = vmatprep.subr.bf16.mxu0 0
    %1397 = vmatpush1.bf16.msra.mxu0 0
    %1398 = vmatprep.subr.bf16.mxu0 0
    %1399 = vmatpush1.bf16.msra.mxu0 0
    %1400 = vmatprep.mubr.bf16.mxu0 0
    %1401 = vmatmul.mubr.bf16.gmra.mrb[0].mxu0 %v1363
    %v1402 = vpop.f32.mrb[0].mxu0
    %v1403 = vadd.f32 0.0, %v1402
    %v1404 = vpop.f32.mrb[0].mxu0
    %v1405 = vadd.f32 0.0, %v1404
    %v1406 = vpop.f32.mrb[0].mxu0
    %v1407 = vadd.f32 0.0, %v1406
    %v1408 = vpop.f32.mrb[0].mxu0
    %v1409 = vadd.f32 0.0, %v1408
    %1410 = vmatprep.mubr.bf16.mxu0 0
    %1411 = vmatmul.mubr.bf16.gmra.mrb[0].mxu0 %v1366
    %v1412 = vpop.f32.mrb[0].mxu0
    %v1413 = vadd.f32 0.0, %v1412
    %v1414 = vpop.f32.mrb[0].mxu0
    %v1415 = vadd.f32 0.0, %v1414
    %v1416 = vpop.f32.mrb[0].mxu0
    %v1417 = vadd.f32 0.0, %v1416
    %v1418 = vpop.f32.mrb[0].mxu0
    %v1419 = vadd.f32 0.0, %v1418
    %1420 = vdwg.mxu0
    %v1421 = vadd.f32 %v1286, %v1403
    %v1422 = vadd.f32 %v1287, %v1405
    %v1423 = vadd.f32 %v1288, %v1407
    %v1424 = vadd.f32 %v1289, %v1409
    %v1425 = vadd.f32 %v1290, %v1413
    %v1426 = vadd.f32 %v1291, %v1415
    %v1427 = vadd.f32 %v1292, %v1417
    %v1428 = vadd.f32 %v1293, %v1419
    %v1429 = vrot.slane %v647, 2
    %v1430 = vrot.slane %v648, 2
    %v1431 = vrot.slane %v649, 2
    %v1432 = vrot.slane %v650, 2
    %vm1433 = vcmp.lt.s32.totalorder %v666, 6
    %v1434 = vsel %vm1433, %v1431, %v1432
    %v1435 = vsel %vm1433, %v1430, %v1431
    %v1436 = vsel %vm1433, %v1429, %v1430
    %v1437 = vsel %vm1433, %v1432, %v1429
    %s1438 = scalar_lea.vmem %s0, 256
    %v1439 = vld [vmem:[%s1438] sm:$0xff]
    %v1440 = vld [vmem:[%s1438 + $0x8] sm:$0xff]
    %v1441 = vld [vmem:[%s1438 + $0x10] sm:$0xff]
    %v1442 = vld [vmem:[%s1438 + $0x18] sm:$0xff]
    %v1443 = vmul.f32 %v1436, %v1439
    %v1444 = vmul.f32 %v1435, %v1440
    %v1445 = vmul.f32 %v1434, %v1441
    %v1446 = vmul.f32 %v1437, %v1442
    %v1447 = vpack.c.bf16 %v1444, %v1443
    %v1448 = vpack.c.bf16 %v1446, %v1445
    %v1449 = vld [vmem:[%s4 + $0x1c0] sm:$0xff]
    %v1450 = vld [vmem:[%s4 + $0x1c8] sm:$0xff]
    %v1451 = vld [vmem:[%s4 + $0x1d0] sm:$0xff]
    %v1452 = vld [vmem:[%s4 + $0x1d8] sm:$0xff]
    %v1453 = vld [vmem:[%s4 + $0x1e0] sm:$0xff]
    %v1454 = vld [vmem:[%s4 + $0x1e8] sm:$0xff]
    %v1455 = vld [vmem:[%s4 + $0x1f0] sm:$0xff]
    %v1456 = vld [vmem:[%s4 + $0x1f8] sm:$0xff]
    %v1465 = vunpack.c.l.b16 %v1449
    %v1466 = vunpack.c.h.b16 %v1449
    %v1467 = vunpack.c.l.b16 %v1450
    %v1468 = vunpack.c.h.b16 %v1450
    %v1469 = vunpack.c.l.b16 %v1451
    %v1470 = vunpack.c.h.b16 %v1451
    %v1471 = vunpack.c.l.b16 %v1452
    %v1472 = vunpack.c.h.b16 %v1452
    %v1473 = vunpack.c.l.b16 %v1453
    %v1474 = vunpack.c.h.b16 %v1453
    %v1475 = vunpack.c.l.b16 %v1454
    %v1476 = vunpack.c.h.b16 %v1454
    %v1477 = vunpack.c.l.b16 %v1455
    %v1478 = vunpack.c.h.b16 %v1455
    %v1479 = vunpack.c.l.b16 %v1456
    %v1480 = vunpack.c.h.b16 %v1456
    %v1481 = vpack.c.b16 %v1467, %v1465
    %v1482 = vpack.c.b16 %v1468, %v1466
    %v1483 = vpack.c.b16 %v1471, %v1469
    %v1484 = vpack.c.b16 %v1472, %v1470
    %v1485 = vpack.c.b16 %v1475, %v1473
    %v1486 = vpack.c.b16 %v1476, %v1474
    %v1487 = vpack.c.b16 %v1479, %v1477
    %v1488 = vpack.c.b16 %v1480, %v1478
    %v1498 = vsel %vm43, %v1447, 0
    %v1501 = vsel %vm43, %v1448, 0
    %1503 = vmatprep.subr.bf16.mxu0 %v1482
    %1504 = vmatpush1.bf16.msra.mxu0 %v1481
    %1505 = vmatprep.subr.bf16.mxu0 %v1484
    %1506 = vmatpush1.bf16.msra.mxu0 %v1483
    %1507 = vmatprep.subr.bf16.mxu0 %v1486
    %1508 = vmatpush1.bf16.msra.mxu0 %v1485
    %1509 = vmatprep.subr.bf16.mxu0 %v1488
    %1510 = vmatpush1.bf16.msra.mxu0 %v1487
    %1511 = vmatprep.subr.bf16.mxu0 0
    %1512 = vmatpush1.bf16.msra.mxu0 0
    %1513 = vmatprep.subr.bf16.mxu0 0
    %1514 = vmatpush1.bf16.msra.mxu0 0
    %1515 = vmatprep.subr.bf16.mxu0 0
    %1516 = vmatpush1.bf16.msra.mxu0 0
    %1517 = vmatprep.subr.bf16.mxu0 0
    %1518 = vmatpush1.bf16.msra.mxu0 0
    %1519 = vmatprep.subr.bf16.mxu0 0
    %1520 = vmatpush1.bf16.msra.mxu0 0
    %1521 = vmatprep.subr.bf16.mxu0 0
    %1522 = vmatpush1.bf16.msra.mxu0 0
    %1523 = vmatprep.subr.bf16.mxu0 0
    %1524 = vmatpush1.bf16.msra.mxu0 0
    %1525 = vmatprep.subr.bf16.mxu0 0
    %1526 = vmatpush1.bf16.msra.mxu0 0
    %1527 = vmatprep.subr.bf16.mxu0 0
    %1528 = vmatpush1.bf16.msra.mxu0 0
    %1529 = vmatprep.subr.bf16.mxu0 0
    %1530 = vmatpush1.bf16.msra.mxu0 0
    %1531 = vmatprep.subr.bf16.mxu0 0
    %1532 = vmatpush1.bf16.msra.mxu0 0
    %1533 = vmatprep.subr.bf16.mxu0 0
    %1534 = vmatpush1.bf16.msra.mxu0 0
    %1535 = vmatprep.mubr.bf16.mxu0 0
    %1536 = vmatmul.mubr.bf16.gmra.mrb[0].mxu0 %v1498
    %v1537 = vpop.f32.mrb[0].mxu0
    %v1538 = vadd.f32 0.0, %v1537
    %v1539 = vpop.f32.mrb[0].mxu0
    %v1540 = vadd.f32 0.0, %v1539
    %v1541 = vpop.f32.mrb[0].mxu0
    %v1542 = vadd.f32 0.0, %v1541
    %v1543 = vpop.f32.mrb[0].mxu0
    %v1544 = vadd.f32 0.0, %v1543
    %1545 = vmatprep.mubr.bf16.mxu0 0
    %1546 = vmatmul.mubr.bf16.gmra.mrb[0].mxu0 %v1501
    %v1547 = vpop.f32.mrb[0].mxu0
    %v1548 = vadd.f32 0.0, %v1547
    %v1549 = vpop.f32.mrb[0].mxu0
    %v1550 = vadd.f32 0.0, %v1549
    %v1551 = vpop.f32.mrb[0].mxu0
    %v1552 = vadd.f32 0.0, %v1551
    %v1553 = vpop.f32.mrb[0].mxu0
    %v1554 = vadd.f32 0.0, %v1553
    %1555 = vdwg.mxu0
    %v1556 = vadd.f32 %v1421, %v1538
    %v1557 = vadd.f32 %v1422, %v1540
    %v1558 = vadd.f32 %v1423, %v1542
    %v1559 = vadd.f32 %v1424, %v1544
    %v1560 = vadd.f32 %v1425, %v1548
    %v1561 = vadd.f32 %v1426, %v1550
    %v1562 = vadd.f32 %v1427, %v1552
    %v1563 = vadd.f32 %v1428, %v1554
    %v1564 = vrot.slane %v647, 3
    %v1565 = vrot.slane %v648, 3
    %v1566 = vrot.slane %v649, 3
    %v1567 = vrot.slane %v650, 3
    %vm1568 = vcmp.lt.s32.totalorder %v666, 5
    %v1569 = vsel %vm1568, %v1566, %v1567
    %v1570 = vsel %vm1568, %v1565, %v1566
    %v1571 = vsel %vm1568, %v1564, %v1565
    %v1572 = vsel %vm1568, %v1567, %v1564
    %s1573 = scalar_lea.vmem %s0, 288
    %v1574 = vld [vmem:[%s1573] sm:$0xff]
    %v1575 = vld [vmem:[%s1573 + $0x8] sm:$0xff]
    %v1576 = vld [vmem:[%s1573 + $0x10] sm:$0xff]
    %v1577 = vld [vmem:[%s1573 + $0x18] sm:$0xff]
    %v1578 = vmul.f32 %v1571, %v1574
    %v1579 = vmul.f32 %v1570, %v1575
    %v1580 = vmul.f32 %v1569, %v1576
    %v1581 = vmul.f32 %v1572, %v1577
    %v1582 = vpack.c.bf16 %v1579, %v1578
    %v1583 = vpack.c.bf16 %v1581, %v1580
    %v1584 = vld [vmem:[%s4 + $0x200] sm:$0xff]
    %v1585 = vld [vmem:[%s4 + $0x208] sm:$0xff]
    %v1586 = vld [vmem:[%s4 + $0x210] sm:$0xff]
    %v1587 = vld [vmem:[%s4 + $0x218] sm:$0xff]
    %v1588 = vld [vmem:[%s4 + $0x220] sm:$0xff]
    %v1589 = vld [vmem:[%s4 + $0x228] sm:$0xff]
    %v1590 = vld [vmem:[%s4 + $0x230] sm:$0xff]
    %v1591 = vld [vmem:[%s4 + $0x238] sm:$0xff]
    %v1600 = vunpack.c.l.b16 %v1584
    %v1601 = vunpack.c.h.b16 %v1584
    %v1602 = vunpack.c.l.b16 %v1585
    %v1603 = vunpack.c.h.b16 %v1585
    %v1604 = vunpack.c.l.b16 %v1586
    %v1605 = vunpack.c.h.b16 %v1586
    %v1606 = vunpack.c.l.b16 %v1587
    %v1607 = vunpack.c.h.b16 %v1587
    %v1608 = vunpack.c.l.b16 %v1588
    %v1609 = vunpack.c.h.b16 %v1588
    %v1610 = vunpack.c.l.b16 %v1589
    %v1611 = vunpack.c.h.b16 %v1589
    %v1612 = vunpack.c.l.b16 %v1590
    %v1613 = vunpack.c.h.b16 %v1590
    %v1614 = vunpack.c.l.b16 %v1591
    %v1615 = vunpack.c.h.b16 %v1591
    %v1616 = vpack.c.b16 %v1602, %v1600
    %v1617 = vpack.c.b16 %v1603, %v1601
    %v1618 = vpack.c.b16 %v1606, %v1604
    %v1619 = vpack.c.b16 %v1607, %v1605
    %v1620 = vpack.c.b16 %v1610, %v1608
    %v1621 = vpack.c.b16 %v1611, %v1609
    %v1622 = vpack.c.b16 %v1614, %v1612
    %v1623 = vpack.c.b16 %v1615, %v1613
    %v1633 = vsel %vm43, %v1582, 0
    %v1636 = vsel %vm43, %v1583, 0
    %1638 = vmatprep.subr.bf16.mxu0 %v1617
    %1639 = vmatpush1.bf16.msra.mxu0 %v1616
    %1640 = vmatprep.subr.bf16.mxu0 %v1619
    %1641 = vmatpush1.bf16.msra.mxu0 %v1618
    %1642 = vmatprep.subr.bf16.mxu0 %v1621
    %1643 = vmatpush1.bf16.msra.mxu0 %v1620
    %1644 = vmatprep.subr.bf16.mxu0 %v1623
    %1645 = vmatpush1.bf16.msra.mxu0 %v1622
    %1646 = vmatprep.subr.bf16.mxu0 0
    %1647 = vmatpush1.bf16.msra.mxu0 0
    %1648 = vmatprep.subr.bf16.mxu0 0
    %1649 = vmatpush1.bf16.msra.mxu0 0
    %1650 = vmatprep.subr.bf16.mxu0 0
    %1651 = vmatpush1.bf16.msra.mxu0 0
    %1652 = vmatprep.subr.bf16.mxu0 0
    %1653 = vmatpush1.bf16.msra.mxu0 0
    %1654 = vmatprep.subr.bf16.mxu0 0
    %1655 = vmatpush1.bf16.msra.mxu0 0
    %1656 = vmatprep.subr.bf16.mxu0 0
    %1657 = vmatpush1.bf16.msra.mxu0 0
    %1658 = vmatprep.subr.bf16.mxu0 0
    %1659 = vmatpush1.bf16.msra.mxu0 0
    %1660 = vmatprep.subr.bf16.mxu0 0
    %1661 = vmatpush1.bf16.msra.mxu0 0
    %1662 = vmatprep.subr.bf16.mxu0 0
    %1663 = vmatpush1.bf16.msra.mxu0 0
    %1664 = vmatprep.subr.bf16.mxu0 0
    %1665 = vmatpush1.bf16.msra.mxu0 0
    %1666 = vmatprep.subr.bf16.mxu0 0
    %1667 = vmatpush1.bf16.msra.mxu0 0
    %1668 = vmatprep.subr.bf16.mxu0 0
    %1669 = vmatpush1.bf16.msra.mxu0 0
    %1670 = vmatprep.mubr.bf16.mxu0 0
    %1671 = vmatmul.mubr.bf16.gmra.mrb[0].mxu0 %v1633
    %v1672 = vpop.f32.mrb[0].mxu0
    %v1673 = vadd.f32 0.0, %v1672
    %v1674 = vpop.f32.mrb[0].mxu0
    %v1675 = vadd.f32 0.0, %v1674
    %v1676 = vpop.f32.mrb[0].mxu0
    %v1677 = vadd.f32 0.0, %v1676
    %v1678 = vpop.f32.mrb[0].mxu0
    %v1679 = vadd.f32 0.0, %v1678
    %1680 = vmatprep.mubr.bf16.mxu0 0
    %1681 = vmatmul.mubr.bf16.gmra.mrb[0].mxu0 %v1636
    %v1682 = vpop.f32.mrb[0].mxu0
    %v1683 = vadd.f32 0.0, %v1682
    %v1684 = vpop.f32.mrb[0].mxu0
    %v1685 = vadd.f32 0.0, %v1684
    %v1686 = vpop.f32.mrb[0].mxu0
    %v1687 = vadd.f32 0.0, %v1686
    %v1688 = vpop.f32.mrb[0].mxu0
    %v1689 = vadd.f32 0.0, %v1688
    %1690 = vdwg.mxu0
    %v1691 = vadd.f32 %v1556, %v1673
    %v1692 = vadd.f32 %v1557, %v1675
    %v1693 = vadd.f32 %v1558, %v1677
    %v1694 = vadd.f32 %v1559, %v1679
    %v1695 = vadd.f32 %v1560, %v1683
    %v1696 = vadd.f32 %v1561, %v1685
    %v1697 = vadd.f32 %v1562, %v1687
    %v1698 = vadd.f32 %v1563, %v1689
    %s1699 = scalar_lea.vmem %s0, 320
    %v1700 = vld [vmem:[%s1699] sm:$0xff]
    %v1701 = vld [vmem:[%s1699 + $0x8] sm:$0xff]
    %v1702 = vld [vmem:[%s1699 + $0x10] sm:$0xff]
    %v1703 = vld [vmem:[%s1699 + $0x18] sm:$0xff]
    %v1704 = vmul.f32 %v670, %v1700
    %v1705 = vmul.f32 %v669, %v1701
    %v1706 = vmul.f32 %v668, %v1702
    %v1707 = vmul.f32 %v671, %v1703
    %v1708 = vpack.c.bf16 %v1705, %v1704
    %v1709 = vpack.c.bf16 %v1707, %v1706
    %v1710 = vld [vmem:[%s4 + $0x240] sm:$0xff]
    %v1711 = vld [vmem:[%s4 + $0x248] sm:$0xff]
    %v1712 = vld [vmem:[%s4 + $0x250] sm:$0xff]
    %v1713 = vld [vmem:[%s4 + $0x258] sm:$0xff]
    %v1714 = vld [vmem:[%s4 + $0x260] sm:$0xff]
    %v1715 = vld [vmem:[%s4 + $0x268] sm:$0xff]
    %v1716 = vld [vmem:[%s4 + $0x270] sm:$0xff]
    %v1717 = vld [vmem:[%s4 + $0x278] sm:$0xff]
    %v1726 = vunpack.c.l.b16 %v1710
    %v1727 = vunpack.c.h.b16 %v1710
    %v1728 = vunpack.c.l.b16 %v1711
    %v1729 = vunpack.c.h.b16 %v1711
    %v1730 = vunpack.c.l.b16 %v1712
    %v1731 = vunpack.c.h.b16 %v1712
    %v1732 = vunpack.c.l.b16 %v1713
    %v1733 = vunpack.c.h.b16 %v1713
    %v1734 = vunpack.c.l.b16 %v1714
    %v1735 = vunpack.c.h.b16 %v1714
    %v1736 = vunpack.c.l.b16 %v1715
    %v1737 = vunpack.c.h.b16 %v1715
    %v1738 = vunpack.c.l.b16 %v1716
    %v1739 = vunpack.c.h.b16 %v1716
    %v1740 = vunpack.c.l.b16 %v1717
    %v1741 = vunpack.c.h.b16 %v1717
    %v1742 = vpack.c.b16 %v1728, %v1726
    %v1743 = vpack.c.b16 %v1729, %v1727
    %v1744 = vpack.c.b16 %v1732, %v1730
    %v1745 = vpack.c.b16 %v1733, %v1731
    %v1746 = vpack.c.b16 %v1736, %v1734
    %v1747 = vpack.c.b16 %v1737, %v1735
    %v1748 = vpack.c.b16 %v1740, %v1738
    %v1749 = vpack.c.b16 %v1741, %v1739
    %v1759 = vsel %vm43, %v1708, 0
    %v1762 = vsel %vm43, %v1709, 0
    %1764 = vmatprep.subr.bf16.mxu0 %v1743
    %1765 = vmatpush1.bf16.msra.mxu0 %v1742
    %1766 = vmatprep.subr.bf16.mxu0 %v1745
    %1767 = vmatpush1.bf16.msra.mxu0 %v1744
    %1768 = vmatprep.subr.bf16.mxu0 %v1747
    %1769 = vmatpush1.bf16.msra.mxu0 %v1746
    %1770 = vmatprep.subr.bf16.mxu0 %v1749
    %1771 = vmatpush1.bf16.msra.mxu0 %v1748
    %1772 = vmatprep.subr.bf16.mxu0 0
    %1773 = vmatpush1.bf16.msra.mxu0 0
    %1774 = vmatprep.subr.bf16.mxu0 0
    %1775 = vmatpush1.bf16.msra.mxu0 0
    %1776 = vmatprep.subr.bf16.mxu0 0
    %1777 = vmatpush1.bf16.msra.mxu0 0
    %1778 = vmatprep.subr.bf16.mxu0 0
    %1779 = vmatpush1.bf16.msra.mxu0 0
    %1780 = vmatprep.subr.bf16.mxu0 0
    %1781 = vmatpush1.bf16.msra.mxu0 0
    %1782 = vmatprep.subr.bf16.mxu0 0
    %1783 = vmatpush1.bf16.msra.mxu0 0
    %1784 = vmatprep.subr.bf16.mxu0 0
    %1785 = vmatpush1.bf16.msra.mxu0 0
    %1786 = vmatprep.subr.bf16.mxu0 0
    %1787 = vmatpush1.bf16.msra.mxu0 0
    %1788 = vmatprep.subr.bf16.mxu0 0
    %1789 = vmatpush1.bf16.msra.mxu0 0
    %1790 = vmatprep.subr.bf16.mxu0 0
    %1791 = vmatpush1.bf16.msra.mxu0 0
    %1792 = vmatprep.subr.bf16.mxu0 0
    %1793 = vmatpush1.bf16.msra.mxu0 0
    %1794 = vmatprep.subr.bf16.mxu0 0
    %1795 = vmatpush1.bf16.msra.mxu0 0
    %1796 = vmatprep.mubr.bf16.mxu0 0
    %1797 = vmatmul.mubr.bf16.gmra.mrb[0].mxu0 %v1759
    %v1798 = vpop.f32.mrb[0].mxu0
    %v1799 = vadd.f32 0.0, %v1798
    %v1800 = vpop.f32.mrb[0].mxu0
    %v1801 = vadd.f32 0.0, %v1800
    %v1802 = vpop.f32.mrb[0].mxu0
    %v1803 = vadd.f32 0.0, %v1802
    %v1804 = vpop.f32.mrb[0].mxu0
    %v1805 = vadd.f32 0.0, %v1804
    %1806 = vmatprep.mubr.bf16.mxu0 0
    %1807 = vmatmul.mubr.bf16.gmra.mrb[0].mxu0 %v1762
    %v1808 = vpop.f32.mrb[0].mxu0
    %v1809 = vadd.f32 0.0, %v1808
    %v1810 = vpop.f32.mrb[0].mxu0
    %v1811 = vadd.f32 0.0, %v1810
    %v1812 = vpop.f32.mrb[0].mxu0
    %v1813 = vadd.f32 0.0, %v1812
    %v1814 = vpop.f32.mrb[0].mxu0
    %v1815 = vadd.f32 0.0, %v1814
    %1816 = vdwg.mxu0
    %v1817 = vadd.f32 %v1691, %v1799
    %v1818 = vadd.f32 %v1692, %v1801
    %v1819 = vadd.f32 %v1693, %v1803
    %v1820 = vadd.f32 %v1694, %v1805
    %v1821 = vadd.f32 %v1695, %v1809
    %v1822 = vadd.f32 %v1696, %v1811
    %v1823 = vadd.f32 %v1697, %v1813
    %v1824 = vadd.f32 %v1698, %v1815
    %v1825 = vld [vmem:[%s3] ss:$4 sm:$0x3]
    %v1827 = vlaneseq
    %v1828 = vshrl.u32 %v1827, 7
    %v1829 = vsub.s32 0, %v1828
    %v1830 = vrot.slane %v1825, %v1829
    %v1831 = vlaneseq
    %v1832 = vshrl.u32 %v1831, 7
    %v1833 = vsub.s32 1, %v1832
    %v1834 = vrot.slane %v1825, %v1833
    %v1837 = vadd.f32 %v1817, %v1830
    %v1838 = vadd.f32 %v1818, %v1834
    %v1839 = vadd.f32 %v1819, %v1830
    %v1840 = vadd.f32 %v1820, %v1834
    %v1841 = vadd.f32 %v1821, %v1830
    %v1842 = vadd.f32 %v1822, %v1834
    %v1843 = vadd.f32 %v1823, %v1830
    %v1844 = vadd.f32 %v1824, %v1834
    %v1845 = vmul.f32 %v1837, %v1837
    %v1846 = vmul.f32 %v1838, %v1838
    %v1847 = vmul.f32 %v1839, %v1839
    %v1848 = vmul.f32 %v1840, %v1840
    %v1849 = vmul.f32 %v1841, %v1841
    %v1850 = vmul.f32 %v1842, %v1842
    %v1851 = vmul.f32 %v1843, %v1843
    %v1852 = vmul.f32 %v1844, %v1844
    %v1853 = vmul.f32 %v1837, %v1845
    %v1854 = vmul.f32 %v1838, %v1846
    %v1855 = vmul.f32 %v1839, %v1847
    %v1856 = vmul.f32 %v1840, %v1848
    %v1857 = vmul.f32 %v1841, %v1849
    %v1858 = vmul.f32 %v1842, %v1850
    %v1859 = vmul.f32 %v1843, %v1851
    %v1860 = vmul.f32 %v1844, %v1852
    %v1861 = vmul.f32 %v1853, 0.044715
    %v1862 = vmul.f32 %v1854, 0.044715
    %v1863 = vmul.f32 %v1855, 0.044715
    %v1864 = vmul.f32 %v1856, 0.044715
    %v1865 = vmul.f32 %v1857, 0.044715
    %v1866 = vmul.f32 %v1858, 0.044715
    %v1867 = vmul.f32 %v1859, 0.044715
    %v1868 = vmul.f32 %v1860, 0.044715
    %v1869 = vadd.f32 %v1837, %v1861
    %v1870 = vadd.f32 %v1838, %v1862
    %v1871 = vadd.f32 %v1839, %v1863
    %v1872 = vadd.f32 %v1840, %v1864
    %v1873 = vadd.f32 %v1841, %v1865
    %v1874 = vadd.f32 %v1842, %v1866
    %v1875 = vadd.f32 %v1843, %v1867
    %v1876 = vadd.f32 %v1844, %v1868
    %v1877 = vmul.f32 %v1869, 0.7978846
    %v1878 = vmul.f32 %v1870, 0.7978846
    %v1879 = vmul.f32 %v1871, 0.7978846
    %v1880 = vmul.f32 %v1872, 0.7978846
    %v1881 = vmul.f32 %v1873, 0.7978846
    %v1882 = vmul.f32 %v1874, 0.7978846
    %v1883 = vmul.f32 %v1875, 0.7978846
    %v1884 = vmul.f32 %v1876, 0.7978846
    %v1885 = vtanh.pop %v1877
    %v1886 = vtanh.pop %v1878
    %v1887 = vtanh.pop %v1879
    %v1888 = vtanh.pop %v1880
    %v1889 = vtanh.pop %v1881
    %v1890 = vtanh.pop %v1882
    %v1891 = vtanh.pop %v1883
    %v1892 = vtanh.pop %v1884
    %v1893 = vadd.f32 %v1885, 1.0
    %v1894 = vadd.f32 %v1886, 1.0
    %v1895 = vadd.f32 %v1887, 1.0
    %v1896 = vadd.f32 %v1888, 1.0
    %v1897 = vadd.f32 %v1889, 1.0
    %v1898 = vadd.f32 %v1890, 1.0
    %v1899 = vadd.f32 %v1891, 1.0
    %v1900 = vadd.f32 %v1892, 1.0
    %v1901 = vmul.f32 %v1893, 0.5
    %v1902 = vmul.f32 %v1894, 0.5
    %v1903 = vmul.f32 %v1895, 0.5
    %v1904 = vmul.f32 %v1896, 0.5
    %v1905 = vmul.f32 %v1897, 0.5
    %v1906 = vmul.f32 %v1898, 0.5
    %v1907 = vmul.f32 %v1899, 0.5
    %v1908 = vmul.f32 %v1900, 0.5
    %v1909 = vmul.f32 %v1837, %v1901
    %v1910 = vmul.f32 %v1838, %v1902
    %v1911 = vmul.f32 %v1839, %v1903
    %v1912 = vmul.f32 %v1840, %v1904
    %v1913 = vmul.f32 %v1841, %v1905
    %v1914 = vmul.f32 %v1842, %v1906
    %v1915 = vmul.f32 %v1843, %v1907
    %v1916 = vmul.f32 %v1844, %v1908
    %v1917 = vpack.c.bf16 %v1911, %v1909
    %v1918 = vpack.c.bf16 %v1912, %v1910
    %v1919 = vpack.c.bf16 %v1915, %v1913
    %v1920 = vpack.c.bf16 %v1916, %v1914
    %v1921 = vld [vmem:[%s5] sm:$0xf]
    %v1922 = vld [vmem:[%s5 + $0x4] sm:$0xf]
    %v1923 = vld [vmem:[%s5 + $0x8] sm:$0xf]
    %v1924 = vld [vmem:[%s5 + $0xc] sm:$0xf]
    %v1925 = vld [vmem:[%s5 + $0x10] sm:$0xf]
    %v1926 = vld [vmem:[%s5 + $0x14] sm:$0xf]
    %v1927 = vld [vmem:[%s5 + $0x18] sm:$0xf]
    %v1928 = vld [vmem:[%s5 + $0x1c] sm:$0xf]
    %v1929 = vld [vmem:[%s5 + $0x20] sm:$0xf]
    %v1930 = vld [vmem:[%s5 + $0x24] sm:$0xf]
    %v1931 = vld [vmem:[%s5 + $0x28] sm:$0xf]
    %v1932 = vld [vmem:[%s5 + $0x2c] sm:$0xf]
    %v1933 = vld [vmem:[%s5 + $0x30] sm:$0xf]
    %v1934 = vld [vmem:[%s5 + $0x34] sm:$0xf]
    %v1935 = vld [vmem:[%s5 + $0x38] sm:$0xf]
    %v1936 = vld [vmem:[%s5 + $0x3c] sm:$0xf]
    %v1937 = vld [vmem:[%s5 + $0x40] sm:$0xf]
    %v1938 = vld [vmem:[%s5 + $0x44] sm:$0xf]
    %v1939 = vld [vmem:[%s5 + $0x48] sm:$0xf]
    %v1940 = vld [vmem:[%s5 + $0x4c] sm:$0xf]
    %v1941 = vld [vmem:[%s5 + $0x50] sm:$0xf]
    %v1942 = vld [vmem:[%s5 + $0x54] sm:$0xf]
    %v1943 = vld [vmem:[%s5 + $0x58] sm:$0xf]
    %v1944 = vld [vmem:[%s5 + $0x5c] sm:$0xf]
    %v1945 = vld [vmem:[%s5 + $0x60] sm:$0xf]
    %v1946 = vld [vmem:[%s5 + $0x64] sm:$0xf]
    %v1947 = vld [vmem:[%s5 + $0x68] sm:$0xf]
    %v1948 = vld [vmem:[%s5 + $0x6c] sm:$0xf]
    %v1949 = vld [vmem:[%s5 + $0x70] sm:$0xf]
    %v1950 = vld [vmem:[%s5 + $0x74] sm:$0xf]
    %v1951 = vld [vmem:[%s5 + $0x78] sm:$0xf]
    %v1952 = vld [vmem:[%s5 + $0x7c] sm:$0xf]
    %v1953 = vld [vmem:[%s2 + $0x4] sm:$0x1]
    %v1954 = vlaneseq
    %v1955 = vshrl.u32 %v1954, 7
    %v1956 = vsub.s32 0, %v1955
    %v1957 = vrot.slane %v1953, %v1956
    %v1990 = vunpack.c.l.b16 %v1921
    %v1991 = vunpack.c.l.b16 %v1922
    %v1992 = vunpack.c.l.b16 %v1923
    %v1993 = vunpack.c.l.b16 %v1924
    %v1994 = vunpack.c.l.b16 %v1925
    %v1995 = vunpack.c.l.b16 %v1926
    %v1996 = vunpack.c.l.b16 %v1927
    %v1997 = vunpack.c.l.b16 %v1928
    %v1998 = vunpack.c.l.b16 %v1929
    %v1999 = vunpack.c.l.b16 %v1930
    %v2000 = vunpack.c.l.b16 %v1931
    %v2001 = vunpack.c.l.b16 %v1932
    %v2002 = vunpack.c.l.b16 %v1933
    %v2003 = vunpack.c.l.b16 %v1934
    %v2004 = vunpack.c.l.b16 %v1935
    %v2005 = vunpack.c.l.b16 %v1936
    %v2006 = vunpack.c.l.b16 %v1937
    %v2007 = vunpack.c.l.b16 %v1938
    %v2008 = vunpack.c.l.b16 %v1939
    %v2009 = vunpack.c.l.b16 %v1940
    %v2010 = vunpack.c.l.b16 %v1941
    %v2011 = vunpack.c.l.b16 %v1942
    %v2012 = vunpack.c.l.b16 %v1943
    %v2013 = vunpack.c.l.b16 %v1944
    %v2014 = vunpack.c.l.b16 %v1945
    %v2015 = vunpack.c.l.b16 %v1946
    %v2016 = vunpack.c.l.b16 %v1947
    %v2017 = vunpack.c.l.b16 %v1948
    %v2018 = vunpack.c.l.b16 %v1949
    %v2019 = vunpack.c.l.b16 %v1950
    %v2020 = vunpack.c.l.b16 %v1951
    %v2021 = vunpack.c.l.b16 %v1952
    %v2022 = vpack.c.b16 %v1991, %v1990
    %v2023 = vpack.c.b16 %v1993, %v1992
    %v2024 = vpack.c.b16 %v1995, %v1994
    %v2025 = vpack.c.b16 %v1997, %v1996
    %v2026 = vpack.c.b16 %v1999, %v1998
    %v2027 = vpack.c.b16 %v2001, %v2000
    %v2028 = vpack.c.b16 %v2003, %v2002
    %v2029 = vpack.c.b16 %v2005, %v2004
    %v2030 = vpack.c.b16 %v2007, %v2006
    %v2031 = vpack.c.b16 %v2009, %v2008
    %v2032 = vpack.c.b16 %v2011, %v2010
    %v2033 = vpack.c.b16 %v2013, %v2012
    %v2034 = vpack.c.b16 %v2015, %v2014
    %v2035 = vpack.c.b16 %v2017, %v2016
    %v2036 = vpack.c.b16 %v2019, %v2018
    %v2037 = vpack.c.b16 %v2021, %v2020
    %2054 = vmatprep.subr.bf16.mxu0 0
    %2055 = vmatpush1.bf16.msra.mxu0 %v2022
    %2056 = vmatprep.subr.bf16.mxu0 0
    %2057 = vmatpush1.bf16.msra.mxu0 %v2023
    %2058 = vmatprep.subr.bf16.mxu0 0
    %2059 = vmatpush1.bf16.msra.mxu0 %v2024
    %2060 = vmatprep.subr.bf16.mxu0 0
    %2061 = vmatpush1.bf16.msra.mxu0 %v2025
    %2062 = vmatprep.subr.bf16.mxu0 0
    %2063 = vmatpush1.bf16.msra.mxu0 %v2026
    %2064 = vmatprep.subr.bf16.mxu0 0
    %2065 = vmatpush1.bf16.msra.mxu0 %v2027
    %2066 = vmatprep.subr.bf16.mxu0 0
    %2067 = vmatpush1.bf16.msra.mxu0 %v2028
    %2068 = vmatprep.subr.bf16.mxu0 0
    %2069 = vmatpush1.bf16.msra.mxu0 %v2029
    %2070 = vmatprep.subr.bf16.mxu0 0
    %2071 = vmatpush1.bf16.msra.mxu0 %v2030
    %2072 = vmatprep.subr.bf16.mxu0 0
    %2073 = vmatpush1.bf16.msra.mxu0 %v2031
    %2074 = vmatprep.subr.bf16.mxu0 0
    %2075 = vmatpush1.bf16.msra.mxu0 %v2032
    %2076 = vmatprep.subr.bf16.mxu0 0
    %2077 = vmatpush1.bf16.msra.mxu0 %v2033
    %2078 = vmatprep.subr.bf16.mxu0 0
    %2079 = vmatpush1.bf16.msra.mxu0 %v2034
    %2080 = vmatprep.subr.bf16.mxu0 0
    %2081 = vmatpush1.bf16.msra.mxu0 %v2035
    %2082 = vmatprep.subr.bf16.mxu0 0
    %2083 = vmatpush1.bf16.msra.mxu0 %v2036
    %2084 = vmatprep.subr.bf16.mxu0 0
    %2085 = vmatpush1.bf16.msra.mxu0 %v2037
    %2086 = vmatprep.mubr.bf16.mxu0 %v1918
    %2087 = vmatmul.mubr.bf16.gmra.mrb[0].mxu0 %v1917
    %v2088 = vpop.f32.mrb[0].mxu0
    %v2089 = vadd.f32 %v1957, %v2088
    %v2090 = vpop.f32.mrb[0].mxu0
    %v2091 = vpop.f32.mrb[0].mxu0
    %v2092 = vadd.f32 %v1957, %v2091
    %v2093 = vpop.f32.mrb[0].mxu0
    %2094 = vmatprep.mubr.bf16.mxu0 %v1920
    %2095 = vmatmul.mubr.bf16.gmra.mrb[0].mxu0 %v1919
    %v2096 = vpop.f32.mrb[0].mxu0
    %v2097 = vadd.f32 %v1957, %v2096
    %v2098 = vpop.f32.mrb[0].mxu0
    %v2099 = vpop.f32.mrb[0].mxu0
    %v2100 = vadd.f32 %v1957, %v2099
    %v2101 = vpop.f32.mrb[0].mxu0
    %2102 = vdwg.mxu0
    %v2103 = vadd.f32 %v577, %v2089
    %v2104 = vadd.f32 %v578, %v2092
    %v2105 = vadd.f32 %v579, %v2097
    %v2106 = vadd.f32 %v580, %v2100
    %v2107 = vmul.f32 %v2103, %v33
    %v2108 = vmul.f32 %v2104, %v34
    %v2109 = vmul.f32 %v2105, %v35
    %v2110 = vmul.f32 %v2106, %v36
    %v2111 = vld [vmem:[%s2 + $0x5] sm:$0x1]
    %v2112 = vld [vmem:[%s2 + $0x6] sm:$0x1]
    %v2113 = vsel %vm43, %v2107, 0.0
    %2114 = vadd.xlane.f32.xlu0 %v2113
    %v2115 = vpop.xlane.xlu0 %2114
    %v2116 = vsel %vm43, %v2108, 0.0
    %2117 = vadd.xlane.f32.xlu0 %v2116
    %v2118 = vpop.xlane.xlu0 %2117
    %v2119 = vsel %vm43, %v2109, 0.0
    %2120 = vadd.xlane.f32.xlu0 %v2119
    %v2121 = vpop.xlane.xlu0 %2120
    %v2122 = vsel %vm43, %v2110, 0.0
    %2123 = vadd.xlane.f32.xlu0 %v2122
    %v2124 = vpop.xlane.xlu0 %2123
    %v2125 = vmul.f32 %v2115, %v56
    %v2126 = vmul.f32 %v2118, %v56
    %v2127 = vmul.f32 %v2121, %v56
    %v2128 = vmul.f32 %v2124, %v56
    %v2129 = vsub.f32 %v2107, %v2125
    %v2130 = vsub.f32 %v2108, %v2126
    %v2131 = vsub.f32 %v2109, %v2127
    %v2132 = vsub.f32 %v2110, %v2128
    %v2133 = vmul.f32 %v2129, %v2129
    %v2134 = vmul.f32 %v2130, %v2130
    %v2135 = vmul.f32 %v2131, %v2131
    %v2136 = vmul.f32 %v2132, %v2132
    %v2137 = vsel %vm43, %v2133, 0.0
    %2138 = vadd.xlane.f32.xlu0 %v2137
    %v2139 = vpop.xlane.xlu0 %2138
    %v2140 = vsel %vm43, %v2134, 0.0
    %2141 = vadd.xlane.f32.xlu0 %v2140
    %v2142 = vpop.xlane.xlu0 %2141
    %v2143 = vsel %vm43, %v2135, 0.0
    %2144 = vadd.xlane.f32.xlu0 %v2143
    %v2145 = vpop.xlane.xlu0 %2144
    %v2146 = vsel %vm43, %v2136, 0.0
    %2147 = vadd.xlane.f32.xlu0 %v2146
    %v2148 = vpop.xlane.xlu0 %2147
    %v2149 = vmul.f32 %v2139, %v56
    %v2150 = vmul.f32 %v2142, %v56
    %v2151 = vmul.f32 %v2145, %v56
    %v2152 = vmul.f32 %v2148, %v56
    %v2153 = vadd.f32 %v2149, 1e-05
    %v2154 = vadd.f32 %v2150, 1e-05
    %v2155 = vadd.f32 %v2151, 1e-05
    %v2156 = vadd.f32 %v2152, 1e-05
    %v2157 = vrsqrt.pop %v2153
    %v2158 = vrsqrt.pop %v2154
    %v2159 = vrsqrt.pop %v2155
    %v2160 = vrsqrt.pop %v2156
    %v2161 = vmul.f32 %v2129, %v2157
    %v2162 = vmul.f32 %v2130, %v2158
    %v2163 = vmul.f32 %v2131, %v2159
    %v2164 = vmul.f32 %v2132, %v2160
    %v2165 = vlaneseq
    %v2166 = vshrl.u32 %v2165, 7
    %v2167 = vsub.s32 0, %v2166
    %v2168 = vrot.slane %v2111, %v2167
    %v2169 = vmul.f32 %v2161, %v2168
    %v2170 = vmul.f32 %v2162, %v2168
    %v2171 = vmul.f32 %v2163, %v2168
    %v2172 = vmul.f32 %v2164, %v2168
    %v2173 = vlaneseq
    %v2174 = vshrl.u32 %v2173, 7
    %v2175 = vsub.s32 0, %v2174
    %v2176 = vrot.slane %v2112, %v2175
    %v2177 = vadd.f32 %v2169, %v2176
    %v2178 = vadd.f32 %v2170, %v2176
    %v2179 = vadd.f32 %v2171, %v2176
    %v2180 = vadd.f32 %v2172, %v2176
    %v2181 = vpack.c.bf16 %v2178, %v2177
    %v2182 = vpack.c.bf16 %v2180, %v2179
    %v2183 = vld [vmem:[%s4 + $0x280] sm:$0xff]
    %v2184 = vld [vmem:[%s4 + $0x288] sm:$0xff]
    %v2185 = vld [vmem:[%s4 + $0x290] sm:$0xff]
    %v2186 = vld [vmem:[%s4 + $0x298] sm:$0xff]
    %v2187 = vld [vmem:[%s4 + $0x2a0] sm:$0xff]
    %v2188 = vld [vmem:[%s4 + $0x2a8] sm:$0xff]
    %v2189 = vld [vmem:[%s4 + $0x2b0] sm:$0xff]
    %v2190 = vld [vmem:[%s4 + $0x2b8] sm:$0xff]
    %v2199 = vunpack.c.l.b16 %v2183
    %v2200 = vunpack.c.h.b16 %v2183
    %v2201 = vunpack.c.l.b16 %v2184
    %v2202 = vunpack.c.h.b16 %v2184
    %v2203 = vunpack.c.l.b16 %v2185
    %v2204 = vunpack.c.h.b16 %v2185
    %v2205 = vunpack.c.l.b16 %v2186
    %v2206 = vunpack.c.h.b16 %v2186
    %v2207 = vunpack.c.l.b16 %v2187
    %v2208 = vunpack.c.h.b16 %v2187
    %v2209 = vunpack.c.l.b16 %v2188
    %v2210 = vunpack.c.h.b16 %v2188
    %v2211 = vunpack.c.l.b16 %v2189
    %v2212 = vunpack.c.h.b16 %v2189
    %v2213 = vunpack.c.l.b16 %v2190
    %v2214 = vunpack.c.h.b16 %v2190
    %v2215 = vpack.c.b16 %v2201, %v2199
    %v2216 = vpack.c.b16 %v2202, %v2200
    %v2217 = vpack.c.b16 %v2205, %v2203
    %v2218 = vpack.c.b16 %v2206, %v2204
    %v2219 = vpack.c.b16 %v2209, %v2207
    %v2220 = vpack.c.b16 %v2210, %v2208
    %v2221 = vpack.c.b16 %v2213, %v2211
    %v2222 = vpack.c.b16 %v2214, %v2212
    %v2232 = vsel %vm43, %v2181, 0
    %v2235 = vsel %vm43, %v2182, 0
    %2237 = vmatprep.subr.bf16.mxu0 %v2216
    %2238 = vmatpush1.bf16.msra.mxu0 %v2215
    %2239 = vmatprep.subr.bf16.mxu0 %v2218
    %2240 = vmatpush1.bf16.msra.mxu0 %v2217
    %2241 = vmatprep.subr.bf16.mxu0 %v2220
    %2242 = vmatpush1.bf16.msra.mxu0 %v2219
    %2243 = vmatprep.subr.bf16.mxu0 %v2222
    %2244 = vmatpush1.bf16.msra.mxu0 %v2221
    %2245 = vmatprep.subr.bf16.mxu0 0
    %2246 = vmatpush1.bf16.msra.mxu0 0
    %2247 = vmatprep.subr.bf16.mxu0 0
    %2248 = vmatpush1.bf16.msra.mxu0 0
    %2249 = vmatprep.subr.bf16.mxu0 0
    %2250 = vmatpush1.bf16.msra.mxu0 0
    %2251 = vmatprep.subr.bf16.mxu0 0
    %2252 = vmatpush1.bf16.msra.mxu0 0
    %2253 = vmatprep.subr.bf16.mxu0 0
    %2254 = vmatpush1.bf16.msra.mxu0 0
    %2255 = vmatprep.subr.bf16.mxu0 0
    %2256 = vmatpush1.bf16.msra.mxu0 0
    %2257 = vmatprep.subr.bf16.mxu0 0
    %2258 = vmatpush1.bf16.msra.mxu0 0
    %2259 = vmatprep.subr.bf16.mxu0 0
    %2260 = vmatpush1.bf16.msra.mxu0 0
    %2261 = vmatprep.subr.bf16.mxu0 0
    %2262 = vmatpush1.bf16.msra.mxu0 0
    %2263 = vmatprep.subr.bf16.mxu0 0
    %2264 = vmatpush1.bf16.msra.mxu0 0
    %2265 = vmatprep.subr.bf16.mxu0 0
    %2266 = vmatpush1.bf16.msra.mxu0 0
    %2267 = vmatprep.subr.bf16.mxu0 0
    %2268 = vmatpush1.bf16.msra.mxu0 0
    %2269 = vmatprep.mubr.bf16.mxu0 0
    %2270 = vmatmul.mubr.bf16.gmra.mrb[0].mxu0 %v2232
    %v2271 = vpop.f32.mrb[0].mxu0
    %v2272 = vadd.f32 0.0, %v2271
    %v2273 = vpop.f32.mrb[0].mxu0
    %v2274 = vadd.f32 0.0, %v2273
    %v2275 = vpop.f32.mrb[0].mxu0
    %v2276 = vadd.f32 0.0, %v2275
    %v2277 = vpop.f32.mrb[0].mxu0
    %v2278 = vadd.f32 0.0, %v2277
    %2279 = vmatprep.mubr.bf16.mxu0 0
    %2280 = vmatmul.mubr.bf16.gmra.mrb[0].mxu0 %v2235
    %v2281 = vpop.f32.mrb[0].mxu0
    %v2282 = vadd.f32 0.0, %v2281
    %v2283 = vpop.f32.mrb[0].mxu0
    %v2284 = vadd.f32 0.0, %v2283
    %v2285 = vpop.f32.mrb[0].mxu0
    %v2286 = vadd.f32 0.0, %v2285
    %v2287 = vpop.f32.mrb[0].mxu0
    %v2288 = vadd.f32 0.0, %v2287
    %2289 = vdwg.mxu0
    %v2290 = vpack.c.bf16 %v2276, %v2272
    %v2291 = vpack.c.bf16 %v2278, %v2274
    %v2292 = vpack.c.bf16 %v2286, %v2282
    %v2293 = vpack.c.bf16 %v2288, %v2284
    %2296 = vrot.lane.b32.xlu0 %v2290, 64
    %v2297 = vpop.permute.xlu0 %2296
    %2298 = vrot.lane.b32.xlu0 %v2292, 64
    %v2299 = vpop.permute.xlu0 %2298
    %v2301 = vsel %vm232, %v2290, 0
    %v2304 = vsel %vm232, %v2292, 0
    %v2307 = vsel %vm232, %v2297, 0
    %v2310 = vsel %vm232, %v2299, 0
    %2312 = vmatprep.subr.bf16.mxu0 0
    %2313 = vmatpush1.bf16.xpose.msra.mxu0 %v2307
    %2314 = vmatprep.subr.bf16.mxu0 0
    %2315 = vmatpush1.bf16.xpose.msra.mxu0 %v2310
    %2316 = vmatprep.subr.bf16.mxu0 0
    %2317 = vmatpush1.bf16.xpose.msra.mxu0 0
    %2318 = vmatprep.subr.bf16.mxu0 0
    %2319 = vmatpush1.bf16.xpose.msra.mxu0 0
    %2320 = vmatprep.subr.bf16.mxu0 0
    %2321 = vmatpush1.bf16.xpose.msra.mxu0 0
    %2322 = vmatprep.subr.bf16.mxu0 0
    %2323 = vmatpush1.bf16.xpose.msra.mxu0 0
    %2324 = vmatprep.subr.bf16.mxu0 0
    %2325 = vmatpush1.bf16.xpose.msra.mxu0 0
    %2326 = vmatprep.subr.bf16.mxu0 0
    %2327 = vmatpush1.bf16.xpose.msra.mxu0 0
    %2328 = vmatprep.subr.bf16.mxu0 0
    %2329 = vmatpush1.bf16.xpose.msra.mxu0 0
    %2330 = vmatprep.subr.bf16.mxu0 0
    %2331 = vmatpush1.bf16.xpose.msra.mxu0 0
    %2332 = vmatprep.subr.bf16.mxu0 0
    %2333 = vmatpush1.bf16.xpose.msra.mxu0 0
    %2334 = vmatprep.subr.bf16.mxu0 0
    %2335 = vmatpush1.bf16.xpose.msra.mxu0 0
    %2336 = vmatprep.subr.bf16.mxu0 0
    %2337 = vmatpush1.bf16.xpose.msra.mxu0 0
    %2338 = vmatprep.subr.bf16.mxu0 0
    %2339 = vmatpush1.bf16.xpose.msra.mxu0 0
    %2340 = vmatprep.subr.bf16.mxu0 0
    %2341 = vmatpush1.bf16.xpose.msra.mxu0 0
    %2342 = vmatprep.subr.bf16.mxu0 0
    %2343 = vmatpush1.bf16.xpose.msra.mxu0 0
    %2344 = vmatprep.mubr.bf16.mxu0 0
    %2345 = vmatmul.mubr.bf16.gmra.mrb[0].mxu0 %v2301
    %v2346 = vpop.f32.mrb[0].mxu0
    %v2347 = vadd.f32 %v37, %v2346
    %v2348 = vpop.f32.mrb[0].mxu0
    %v2349 = vpop.f32.mrb[0].mxu0
    %v2350 = vadd.f32 %v38, %v2349
    %v2351 = vpop.f32.mrb[0].mxu0
    %2352 = vmatprep.mubr.bf16.mxu0 0
    %2353 = vmatmul.mubr.bf16.gmra.mrb[0].mxu0 %v2304
    %v2354 = vpop.f32.mrb[0].mxu0
    %v2355 = vadd.f32 %v39, %v2354
    %v2356 = vpop.f32.mrb[0].mxu0
    %v2357 = vpop.f32.mrb[0].mxu0
    %v2358 = vadd.f32 %v40, %v2357
    %v2359 = vpop.f32.mrb[0].mxu0
    %2360 = vdwg.mxu0
    %v2361 = vsel %vm232, %v2347, -inf
    %2362 = vmax.xlane.f32.xlu0 %v2361
    %v2363 = vpop.xlane.xlu0 %2362
    %v2364 = vsel %vm232, %v2350, -inf
    %2365 = vmax.xlane.f32.xlu0 %v2364
    %v2366 = vpop.xlane.xlu0 %2365
    %v2367 = vsel %vm232, %v2355, -inf
    %2368 = vmax.xlane.f32.xlu0 %v2367
    %v2369 = vpop.xlane.xlu0 %2368
    %v2370 = vsel %vm232, %v2358, -inf
    %2371 = vmax.xlane.f32.xlu0 %v2370
    %v2372 = vpop.xlane.xlu0 %2371
    %v2373 = vsub.f32 %v2347, %v2363
    %v2374 = vsub.f32 %v2350, %v2366
    %v2375 = vsub.f32 %v2355, %v2369
    %v2376 = vsub.f32 %v2358, %v2372
    %v2377 = vmul.f32 %v2373, 1.442695
    %v2378 = vpow.pop %v2377
    %v2379 = vmul.f32 %v2374, 1.442695
    %v2380 = vpow.pop %v2379
    %v2381 = vmul.f32 %v2375, 1.442695
    %v2382 = vpow.pop %v2381
    %v2383 = vmul.f32 %v2376, 1.442695
    %v2384 = vpow.pop %v2383
    %v2385 = vsel %vm232, %v2378, 0.0
    %2386 = vadd.xlane.f32.xlu0 %v2385
    %v2387 = vpop.xlane.xlu0 %2386
    %v2388 = vsel %vm232, %v2380, 0.0
    %2389 = vadd.xlane.f32.xlu0 %v2388
    %v2390 = vpop.xlane.xlu0 %2389
    %v2391 = vsel %vm232, %v2382, 0.0
    %2392 = vadd.xlane.f32.xlu0 %v2391
    %v2393 = vpop.xlane.xlu0 %2392
    %v2394 = vsel %vm232, %v2384, 0.0
    %2395 = vadd.xlane.f32.xlu0 %v2394
    %v2396 = vpop.xlane.xlu0 %2395
    %v2397 = vrcp.pop %v2387
    %v2398 = vrcp.pop %v2390
    %v2399 = vrcp.pop %v2393
    %v2400 = vrcp.pop %v2396
    %v2401 = vmul.f32 %v2378, %v2397
    %v2402 = vmul.f32 %v2380, %v2398
    %v2403 = vmul.f32 %v2382, %v2399
    %v2404 = vmul.f32 %v2384, %v2400
    %v2405 = vpack.c.bf16 %v2402, %v2401
    %v2406 = vpack.c.bf16 %v2404, %v2403
    %2407 = vrot.lane.b32.xlu0 %v2290, 96
    %v2408 = vpop.permute.xlu0 %2407
    %2409 = vrot.lane.b32.xlu0 %v2292, 96
    %v2410 = vpop.permute.xlu0 %2409
    %2411 = vrot.lane.b32.xlu0 %v2290, 32
    %v2412 = vpop.permute.xlu0 %2411
    %2413 = vrot.lane.b32.xlu0 %v2292, 32
    %v2414 = vpop.permute.xlu0 %2413
    %v2416 = vsel %vm232, %v2408, 0
    %v2419 = vsel %vm232, %v2410, 0
    %v2422 = vsel %vm232, %v2412, 0
    %v2425 = vsel %vm232, %v2414, 0
    %2427 = vmatprep.subr.bf16.mxu0 0
    %2428 = vmatpush1.bf16.xpose.msra.mxu0 %v2422
    %2429 = vmatprep.subr.bf16.mxu0 0
    %2430 = vmatpush1.bf16.xpose.msra.mxu0 %v2425
    %2431 = vmatprep.subr.bf16.mxu0 0
    %2432 = vmatpush1.bf16.xpose.msra.mxu0 0
    %2433 = vmatprep.subr.bf16.mxu0 0
    %2434 = vmatpush1.bf16.xpose.msra.mxu0 0
    %2435 = vmatprep.subr.bf16.mxu0 0
    %2436 = vmatpush1.bf16.xpose.msra.mxu0 0
    %2437 = vmatprep.subr.bf16.mxu0 0
    %2438 = vmatpush1.bf16.xpose.msra.mxu0 0
    %2439 = vmatprep.subr.bf16.mxu0 0
    %2440 = vmatpush1.bf16.xpose.msra.mxu0 0
    %2441 = vmatprep.subr.bf16.mxu0 0
    %2442 = vmatpush1.bf16.xpose.msra.mxu0 0
    %2443 = vmatprep.subr.bf16.mxu0 0
    %2444 = vmatpush1.bf16.xpose.msra.mxu0 0
    %2445 = vmatprep.subr.bf16.mxu0 0
    %2446 = vmatpush1.bf16.xpose.msra.mxu0 0
    %2447 = vmatprep.subr.bf16.mxu0 0
    %2448 = vmatpush1.bf16.xpose.msra.mxu0 0
    %2449 = vmatprep.subr.bf16.mxu0 0
    %2450 = vmatpush1.bf16.xpose.msra.mxu0 0
    %2451 = vmatprep.subr.bf16.mxu0 0
    %2452 = vmatpush1.bf16.xpose.msra.mxu0 0
    %2453 = vmatprep.subr.bf16.mxu0 0
    %2454 = vmatpush1.bf16.xpose.msra.mxu0 0
    %2455 = vmatprep.subr.bf16.mxu0 0
    %2456 = vmatpush1.bf16.xpose.msra.mxu0 0
    %2457 = vmatprep.subr.bf16.mxu0 0
    %2458 = vmatpush1.bf16.xpose.msra.mxu0 0
    %2459 = vmatprep.mubr.bf16.mxu0 0
    %2460 = vmatmul.mubr.bf16.gmra.mrb[0].mxu0 %v2416
    %v2461 = vpop.f32.mrb[0].mxu0
    %v2462 = vadd.f32 %v37, %v2461
    %v2463 = vpop.f32.mrb[0].mxu0
    %v2464 = vpop.f32.mrb[0].mxu0
    %v2465 = vadd.f32 %v38, %v2464
    %v2466 = vpop.f32.mrb[0].mxu0
    %2467 = vmatprep.mubr.bf16.mxu0 0
    %2468 = vmatmul.mubr.bf16.gmra.mrb[0].mxu0 %v2419
    %v2469 = vpop.f32.mrb[0].mxu0
    %v2470 = vadd.f32 %v39, %v2469
    %v2471 = vpop.f32.mrb[0].mxu0
    %v2472 = vpop.f32.mrb[0].mxu0
    %v2473 = vadd.f32 %v40, %v2472
    %v2474 = vpop.f32.mrb[0].mxu0
    %2475 = vdwg.mxu0
    %v2476 = vsel %vm232, %v2462, -inf
    %2477 = vmax.xlane.f32.xlu0 %v2476
    %v2478 = vpop.xlane.xlu0 %2477
    %v2479 = vsel %vm232, %v2465, -inf
    %2480 = vmax.xlane.f32.xlu0 %v2479
    %v2481 = vpop.xlane.xlu0 %2480
    %v2482 = vsel %vm232, %v2470, -inf
    %2483 = vmax.xlane.f32.xlu0 %v2482
    %v2484 = vpop.xlane.xlu0 %2483
    %v2485 = vsel %vm232, %v2473, -inf
    %2486 = vmax.xlane.f32.xlu0 %v2485
    %v2487 = vpop.xlane.xlu0 %2486
    %v2488 = vsub.f32 %v2462, %v2478
    %v2489 = vsub.f32 %v2465, %v2481
    %v2490 = vsub.f32 %v2470, %v2484
    %v2491 = vsub.f32 %v2473, %v2487
    %v2492 = vmul.f32 %v2488, 1.442695
    %v2493 = vpow.pop %v2492
    %v2494 = vmul.f32 %v2489, 1.442695
    %v2495 = vpow.pop %v2494
    %v2496 = vmul.f32 %v2490, 1.442695
    %v2497 = vpow.pop %v2496
    %v2498 = vmul.f32 %v2491, 1.442695
    %v2499 = vpow.pop %v2498
    %v2500 = vsel %vm232, %v2493, 0.0
    %2501 = vadd.xlane.f32.xlu0 %v2500
    %v2502 = vpop.xlane.xlu0 %2501
    %v2503 = vsel %vm232, %v2495, 0.0
    %2504 = vadd.xlane.f32.xlu0 %v2503
    %v2505 = vpop.xlane.xlu0 %2504
    %v2506 = vsel %vm232, %v2497, 0.0
    %2507 = vadd.xlane.f32.xlu0 %v2506
    %v2508 = vpop.xlane.xlu0 %2507
    %v2509 = vsel %vm232, %v2499, 0.0
    %2510 = vadd.xlane.f32.xlu0 %v2509
    %v2511 = vpop.xlane.xlu0 %2510
    %v2512 = vrcp.pop %v2502
    %v2513 = vrcp.pop %v2505
    %v2514 = vrcp.pop %v2508
    %v2515 = vrcp.pop %v2511
    %v2516 = vmul.f32 %v2493, %v2512
    %v2517 = vmul.f32 %v2495, %v2513
    %v2518 = vmul.f32 %v2497, %v2514
    %v2519 = vmul.f32 %v2499, %v2515
    %v2520 = vpack.c.bf16 %v2517, %v2516
    %v2521 = vpack.c.bf16 %v2519, %v2518
    %2524 = vrot.lane.b32.xlu0 %v2291, 64
    %v2525 = vpop.permute.xlu0 %2524
    %2526 = vrot.lane.b32.xlu0 %v2293, 64
    %v2527 = vpop.permute.xlu0 %2526
    %v2531 = vsel %vm232, %v2520, 0
    %v2534 = vsel %vm232, %v2521, 0
    %2536 = vmatprep.subr.bf16.mxu0 0
    %2537 = vmatpush1.bf16.msra.mxu0 %v2525
    %2538 = vmatprep.subr.bf16.mxu0 0
    %2539 = vmatpush1.bf16.msra.mxu0 %v2527
    %2540 = vmatprep.subr.bf16.mxu0 0
    %2541 = vmatpush1.bf16.msra.mxu0 0
    %2542 = vmatprep.subr.bf16.mxu0 0
    %2543 = vmatpush1.bf16.msra.mxu0 0
    %2544 = vmatprep.subr.bf16.mxu0 0
    %2545 = vmatpush1.bf16.msra.mxu0 0
    %2546 = vmatprep.subr.bf16.mxu0 0
    %2547 = vmatpush1.bf16.msra.mxu0 0
    %2548 = vmatprep.subr.bf16.mxu0 0
    %2549 = vmatpush1.bf16.msra.mxu0 0
    %2550 = vmatprep.subr.bf16.mxu0 0
    %2551 = vmatpush1.bf16.msra.mxu0 0
    %2552 = vmatprep.subr.bf16.mxu0 0
    %2553 = vmatpush1.bf16.msra.mxu0 0
    %2554 = vmatprep.subr.bf16.mxu0 0
    %2555 = vmatpush1.bf16.msra.mxu0 0
    %2556 = vmatprep.subr.bf16.mxu0 0
    %2557 = vmatpush1.bf16.msra.mxu0 0
    %2558 = vmatprep.subr.bf16.mxu0 0
    %2559 = vmatpush1.bf16.msra.mxu0 0
    %2560 = vmatprep.subr.bf16.mxu0 0
    %2561 = vmatpush1.bf16.msra.mxu0 0
    %2562 = vmatprep.subr.bf16.mxu0 0
    %2563 = vmatpush1.bf16.msra.mxu0 0
    %2564 = vmatprep.subr.bf16.mxu0 0
    %2565 = vmatpush1.bf16.msra.mxu0 0
    %2566 = vmatprep.subr.bf16.mxu0 0
    %2567 = vmatpush1.bf16.msra.mxu0 0
    %2568 = vmatprep.mubr.bf16.mxu0 0
    %2569 = vmatmul.mubr.bf16.gmra.mrb[0].mxu0 %v2531
    %v2570 = vpop.f32.mrb[0].mxu0
    %v2571 = vadd.f32 0.0, %v2570
    %v2572 = vpop.f32.mrb[0].mxu0
    %v2573 = vpop.f32.mrb[0].mxu0
    %v2574 = vadd.f32 0.0, %v2573
    %v2575 = vpop.f32.mrb[0].mxu0
    %2576 = vmatprep.mubr.bf16.mxu0 0
    %2577 = vmatmul.mubr.bf16.gmra.mrb[0].mxu0 %v2534
    %v2578 = vpop.f32.mrb[0].mxu0
    %v2579 = vadd.f32 0.0, %v2578
    %v2580 = vpop.f32.mrb[0].mxu0
    %v2581 = vpop.f32.mrb[0].mxu0
    %v2582 = vadd.f32 0.0, %v2581
    %v2583 = vpop.f32.mrb[0].mxu0
    %2584 = vdwg.mxu0
    %v2586 = vsel %vm232, %v2405, 0
    %v2589 = vsel %vm232, %v2406, 0
    %2591 = vmatprep.subr.bf16.mxu0 0
    %2592 = vmatpush1.bf16.msra.mxu0 %v2291
    %2593 = vmatprep.subr.bf16.mxu0 0
    %2594 = vmatpush1.bf16.msra.mxu0 %v2293
    %2595 = vmatprep.subr.bf16.mxu0 0
    %2596 = vmatpush1.bf16.msra.mxu0 0
    %2597 = vmatprep.subr.bf16.mxu0 0
    %2598 = vmatpush1.bf16.msra.mxu0 0
    %2599 = vmatprep.subr.bf16.mxu0 0
    %2600 = vmatpush1.bf16.msra.mxu0 0
    %2601 = vmatprep.subr.bf16.mxu0 0
    %2602 = vmatpush1.bf16.msra.mxu0 0
    %2603 = vmatprep.subr.bf16.mxu0 0
    %2604 = vmatpush1.bf16.msra.mxu0 0
    %2605 = vmatprep.subr.bf16.mxu0 0
    %2606 = vmatpush1.bf16.msra.mxu0 0
    %2607 = vmatprep.subr.bf16.mxu0 0
    %2608 = vmatpush1.bf16.msra.mxu0 0
    %2609 = vmatprep.subr.bf16.mxu0 0
    %2610 = vmatpush1.bf16.msra.mxu0 0
    %2611 = vmatprep.subr.bf16.mxu0 0
    %2612 = vmatpush1.bf16.msra.mxu0 0
    %2613 = vmatprep.subr.bf16.mxu0 0
    %2614 = vmatpush1.bf16.msra.mxu0 0
    %2615 = vmatprep.subr.bf16.mxu0 0
    %2616 = vmatpush1.bf16.msra.mxu0 0
    %2617 = vmatprep.subr.bf16.mxu0 0
    %2618 = vmatpush1.bf16.msra.mxu0 0
    %2619 = vmatprep.subr.bf16.mxu0 0
    %2620 = vmatpush1.bf16.msra.mxu0 0
    %2621 = vmatprep.subr.bf16.mxu0 0
    %2622 = vmatpush1.bf16.msra.mxu0 0
    %2623 = vmatprep.mubr.bf16.mxu0 0
    %2624 = vmatmul.mubr.bf16.gmra.mrb[0].mxu0 %v2586
    %v2625 = vpop.f32.mrb[0].mxu0
    %v2626 = vadd.f32 %v2571, %v2625
    %v2627 = vpop.f32.mrb[0].mxu0
    %v2628 = vpop.f32.mrb[0].mxu0
    %v2629 = vadd.f32 %v2574, %v2628
    %v2630 = vpop.f32.mrb[0].mxu0
    %2631 = vmatprep.mubr.bf16.mxu0 0
    %2632 = vmatmul.mubr.bf16.gmra.mrb[0].mxu0 %v2589
    %v2633 = vpop.f32.mrb[0].mxu0
    %v2634 = vadd.f32 %v2579, %v2633
    %v2635 = vpop.f32.mrb[0].mxu0
    %v2636 = vpop.f32.mrb[0].mxu0
    %v2637 = vadd.f32 %v2582, %v2636
    %v2638 = vpop.f32.mrb[0].mxu0
    %2639 = vdwg.mxu0
    %v2640 = vadd.f32 %v2107, %v2626
    %v2641 = vadd.f32 %v2108, %v2629
    %v2642 = vadd.f32 %v2109, %v2634
    %v2643 = vadd.f32 %v2110, %v2637
    %v2644 = vmul.f32 %v2640, %v33
    %v2645 = vmul.f32 %v2641, %v34
    %v2646 = vmul.f32 %v2642, %v35
    %v2647 = vmul.f32 %v2643, %v36
    %v2648 = vld [vmem:[%s2 + $0x7] sm:$0x1]
    %v2649 = vld [vmem:[%s2 + $0x8] sm:$0x1]
    %v2650 = vsel %vm43, %v2644, 0.0
    %2651 = vadd.xlane.f32.xlu0 %v2650
    %v2652 = vpop.xlane.xlu0 %2651
    %v2653 = vsel %vm43, %v2645, 0.0
    %2654 = vadd.xlane.f32.xlu0 %v2653
    %v2655 = vpop.xlane.xlu0 %2654
    %v2656 = vsel %vm43, %v2646, 0.0
    %2657 = vadd.xlane.f32.xlu0 %v2656
    %v2658 = vpop.xlane.xlu0 %2657
    %v2659 = vsel %vm43, %v2647, 0.0
    %2660 = vadd.xlane.f32.xlu0 %v2659
    %v2661 = vpop.xlane.xlu0 %2660
    %v2662 = vmul.f32 %v2652, %v56
    %v2663 = vmul.f32 %v2655, %v56
    %v2664 = vmul.f32 %v2658, %v56
    %v2665 = vmul.f32 %v2661, %v56
    %v2666 = vsub.f32 %v2644, %v2662
    %v2667 = vsub.f32 %v2645, %v2663
    %v2668 = vsub.f32 %v2646, %v2664
    %v2669 = vsub.f32 %v2647, %v2665
    %v2670 = vmul.f32 %v2666, %v2666
    %v2671 = vmul.f32 %v2667, %v2667
    %v2672 = vmul.f32 %v2668, %v2668
    %v2673 = vmul.f32 %v2669, %v2669
    %v2674 = vsel %vm43, %v2670, 0.0
    %2675 = vadd.xlane.f32.xlu0 %v2674
    %v2676 = vpop.xlane.xlu0 %2675
    %v2677 = vsel %vm43, %v2671, 0.0
    %2678 = vadd.xlane.f32.xlu0 %v2677
    %v2679 = vpop.xlane.xlu0 %2678
    %v2680 = vsel %vm43, %v2672, 0.0
    %2681 = vadd.xlane.f32.xlu0 %v2680
    %v2682 = vpop.xlane.xlu0 %2681
    %v2683 = vsel %vm43, %v2673, 0.0
    %2684 = vadd.xlane.f32.xlu0 %v2683
    %v2685 = vpop.xlane.xlu0 %2684
    %v2686 = vmul.f32 %v2676, %v56
    %v2687 = vmul.f32 %v2679, %v56
    %v2688 = vmul.f32 %v2682, %v56
    %v2689 = vmul.f32 %v2685, %v56
    %v2690 = vadd.f32 %v2686, 1e-05
    %v2691 = vadd.f32 %v2687, 1e-05
    %v2692 = vadd.f32 %v2688, 1e-05
    %v2693 = vadd.f32 %v2689, 1e-05
    %v2694 = vrsqrt.pop %v2690
    %v2695 = vrsqrt.pop %v2691
    %v2696 = vrsqrt.pop %v2692
    %v2697 = vrsqrt.pop %v2693
    %v2698 = vmul.f32 %v2666, %v2694
    %v2699 = vmul.f32 %v2667, %v2695
    %v2700 = vmul.f32 %v2668, %v2696
    %v2701 = vmul.f32 %v2669, %v2697
    %v2702 = vlaneseq
    %v2703 = vshrl.u32 %v2702, 7
    %v2704 = vsub.s32 0, %v2703
    %v2705 = vrot.slane %v2648, %v2704
    %v2706 = vmul.f32 %v2698, %v2705
    %v2707 = vmul.f32 %v2699, %v2705
    %v2708 = vmul.f32 %v2700, %v2705
    %v2709 = vmul.f32 %v2701, %v2705
    %v2710 = vlaneseq
    %v2711 = vshrl.u32 %v2710, 7
    %v2712 = vsub.s32 0, %v2711
    %v2713 = vrot.slane %v2649, %v2712
    %v2714 = vadd.f32 %v2706, %v2713
    %v2715 = vadd.f32 %v2707, %v2713
    %v2716 = vadd.f32 %v2708, %v2713
    %v2717 = vadd.f32 %v2709, %v2713
    %v2718 = vpack.c.bf16 %v2715, %v2714
    %v2719 = vpack.c.bf16 %v2717, %v2716
    %v2720 = vld [vmem:[%s4 + $0x3c0] sm:$0xff]
    %v2721 = vld [vmem:[%s4 + $0x3c8] sm:$0xff]
    %v2722 = vld [vmem:[%s4 + $0x3d0] sm:$0xff]
    %v2723 = vld [vmem:[%s4 + $0x3d8] sm:$0xff]
    %v2724 = vld [vmem:[%s4 + $0x3e0] sm:$0xff]
    %v2725 = vld [vmem:[%s4 + $0x3e8] sm:$0xff]
    %v2726 = vld [vmem:[%s4 + $0x3f0] sm:$0xff]
    %v2727 = vld [vmem:[%s4 + $0x3f8] sm:$0xff]
    %v2728 = vrot.slane %v2714, 4
    %v2729 = vrot.slane %v2715, 4
    %v2730 = vrot.slane %v2716, 4
    %v2731 = vrot.slane %v2717, 4
    %v2732 = vsel %vm667, %v2730, %v2731
    %v2733 = vsel %vm667, %v2729, %v2730
    %v2734 = vsel %vm667, %v2728, %v2729
    %v2735 = vsel %vm667, %v2731, %v2728
    %v2736 = vmul.f32 %v2735, %v673
    %v2737 = vmul.f32 %v2734, %v674
    %v2738 = vmul.f32 %v2733, %v675
    %v2739 = vmul.f32 %v2732, %v676
    %v2740 = vpack.c.bf16 %v2737, %v2736
    %v2741 = vpack.c.bf16 %v2739, %v2738
    %v2742 = vld [vmem:[%s4 + $0x2c0] sm:$0xff]
    %v2743 = vld [vmem:[%s4 + $0x2c8] sm:$0xff]
    %v2744 = vld [vmem:[%s4 + $0x2d0] sm:$0xff]
    %v2745 = vld [vmem:[%s4 + $0x2d8] sm:$0xff]
    %v2746 = vld [vmem:[%s4 + $0x2e0] sm:$0xff]
    %v2747 = vld [vmem:[%s4 + $0x2e8] sm:$0xff]
    %v2748 = vld [vmem:[%s4 + $0x2f0] sm:$0xff]
    %v2749 = vld [vmem:[%s4 + $0x2f8] sm:$0xff]
    %v2758 = vunpack.c.l.b16 %v2742
    %v2759 = vunpack.c.h.b16 %v2742
    %v2760 = vunpack.c.l.b16 %v2743
    %v2761 = vunpack.c.h.b16 %v2743
    %v2762 = vunpack.c.l.b16 %v2744
    %v2763 = vunpack.c.h.b16 %v2744
    %v2764 = vunpack.c.l.b16 %v2745
    %v2765 = vunpack.c.h.b16 %v2745
    %v2766 = vunpack.c.l.b16 %v2746
    %v2767 = vunpack.c.h.b16 %v2746
    %v2768 = vunpack.c.l.b16 %v2747
    %v2769 = vunpack.c.h.b16 %v2747
    %v2770 = vunpack.c.l.b16 %v2748
    %v2771 = vunpack.c.h.b16 %v2748
    %v2772 = vunpack.c.l.b16 %v2749
    %v2773 = vunpack.c.h.b16 %v2749
    %v2774 = vpack.c.b16 %v2760, %v2758
    %v2775 = vpack.c.b16 %v2761, %v2759
    %v2776 = vpack.c.b16 %v2764, %v2762
    %v2777 = vpack.c.b16 %v2765, %v2763
    %v2778 = vpack.c.b16 %v2768, %v2766
    %v2779 = vpack.c.b16 %v2769, %v2767
    %v2780 = vpack.c.b16 %v2772, %v2770
    %v2781 = vpack.c.b16 %v2773, %v2771
    %v2791 = vsel %vm43, %v2740, 0
    %v2794 = vsel %vm43, %v2741, 0
    %2796 = vmatprep.subr.bf16.mxu0 %v2775
    %2797 = vmatpush1.bf16.msra.mxu0 %v2774
    %2798 = vmatprep.subr.bf16.mxu0 %v2777
    %2799 = vmatpush1.bf16.msra.mxu0 %v2776
    %2800 = vmatprep.subr.bf16.mxu0 %v2779
    %2801 = vmatpush1.bf16.msra.mxu0 %v2778
    %2802 = vmatprep.subr.bf16.mxu0 %v2781
    %2803 = vmatpush1.bf16.msra.mxu0 %v2780
    %2804 = vmatprep.subr.bf16.mxu0 0
    %2805 = vmatpush1.bf16.msra.mxu0 0
    %2806 = vmatprep.subr.bf16.mxu0 0
    %2807 = vmatpush1.bf16.msra.mxu0 0
    %2808 = vmatprep.subr.bf16.mxu0 0
    %2809 = vmatpush1.bf16.msra.mxu0 0
    %2810 = vmatprep.subr.bf16.mxu0 0
    %2811 = vmatpush1.bf16.msra.mxu0 0
    %2812 = vmatprep.subr.bf16.mxu0 0
    %2813 = vmatpush1.bf16.msra.mxu0 0
    %2814 = vmatprep.subr.bf16.mxu0 0
    %2815 = vmatpush1.bf16.msra.mxu0 0
    %2816 = vmatprep.subr.bf16.mxu0 0
    %2817 = vmatpush1.bf16.msra.mxu0 0
    %2818 = vmatprep.subr.bf16.mxu0 0
    %2819 = vmatpush1.bf16.msra.mxu0 0
    %2820 = vmatprep.subr.bf16.mxu0 0
    %2821 = vmatpush1.bf16.msra.mxu0 0
    %2822 = vmatprep.subr.bf16.mxu0 0
    %2823 = vmatpush1.bf16.msra.mxu0 0
    %2824 = vmatprep.subr.bf16.mxu0 0
    %2825 = vmatpush1.bf16.msra.mxu0 0
    %2826 = vmatprep.subr.bf16.mxu0 0
    %2827 = vmatpush1.bf16.msra.mxu0 0
    %2828 = vmatprep.mubr.bf16.mxu0 0
    %2829 = vmatmul.mubr.bf16.gmra.mrb[0].mxu0 %v2791
    %v2830 = vpop.f32.mrb[0].mxu0
    %v2831 = vadd.f32 0.0, %v2830
    %v2832 = vpop.f32.mrb[0].mxu0
    %v2833 = vadd.f32 0.0, %v2832
    %v2834 = vpop.f32.mrb[0].mxu0
    %v2835 = vadd.f32 0.0, %v2834
    %v2836 = vpop.f32.mrb[0].mxu0
    %v2837 = vadd.f32 0.0, %v2836
    %2838 = vmatprep.mubr.bf16.mxu0 0
    %2839 = vmatmul.mubr.bf16.gmra.mrb[0].mxu0 %v2794
    %v2840 = vpop.f32.mrb[0].mxu0
    %v2841 = vadd.f32 0.0, %v2840
    %v2842 = vpop.f32.mrb[0].mxu0
    %v2843 = vadd.f32 0.0, %v2842
    %v2844 = vpop.f32.mrb[0].mxu0
    %v2845 = vadd.f32 0.0, %v2844
    %v2846 = vpop.f32.mrb[0].mxu0
    %v2847 = vadd.f32 0.0, %v2846
    %2848 = vdwg.mxu0
    %v2857 = vunpack.c.l.b16 %v2720
    %v2858 = vunpack.c.h.b16 %v2720
    %v2859 = vunpack.c.l.b16 %v2721
    %v2860 = vunpack.c.h.b16 %v2721
    %v2861 = vunpack.c.l.b16 %v2722
    %v2862 = vunpack.c.h.b16 %v2722
    %v2863 = vunpack.c.l.b16 %v2723
    %v2864 = vunpack.c.h.b16 %v2723
    %v2865 = vunpack.c.l.b16 %v2724
    %v2866 = vunpack.c.h.b16 %v2724
    %v2867 = vunpack.c.l.b16 %v2725
    %v2868 = vunpack.c.h.b16 %v2725
    %v2869 = vunpack.c.l.b16 %v2726
    %v2870 = vunpack.c.h.b16 %v2726
    %v2871 = vunpack.c.l.b16 %v2727
    %v2872 = vunpack.c.h.b16 %v2727
    %v2873 = vpack.c.b16 %v2859, %v2857
    %v2874 = vpack.c.b16 %v2860, %v2858
    %v2875 = vpack.c.b16 %v2863, %v2861
    %v2876 = vpack.c.b16 %v2864, %v2862
    %v2877 = vpack.c.b16 %v2867, %v2865
    %v2878 = vpack.c.b16 %v2868, %v2866
    %v2879 = vpack.c.b16 %v2871, %v2869
    %v2880 = vpack.c.b16 %v2872, %v2870
    %v2890 = vsel %vm43, %v2718, 0
    %v2893 = vsel %vm43, %v2719, 0
    %2895 = vmatprep.subr.bf16.mxu0 %v2874
    %2896 = vmatpush1.bf16.msra.mxu0 %v2873
    %2897 = vmatprep.subr.bf16.mxu0 %v2876
    %2898 = vmatpush1.bf16.msra.mxu0 %v2875
    %2899 = vmatprep.subr.bf16.mxu0 %v2878
    %2900 = vmatpush1.bf16.msra.mxu0 %v2877
    %2901 = vmatprep.subr.bf16.mxu0 %v2880
    %2902 = vmatpush1.bf16.msra.mxu0 %v2879
    %2903 = vmatprep.subr.bf16.mxu0 0
    %2904 = vmatpush1.bf16.msra.mxu0 0
    %2905 = vmatprep.subr.bf16.mxu0 0
    %2906 = vmatpush1.bf16.msra.mxu0 0
    %2907 = vmatprep.subr.bf16.mxu0 0
    %2908 = vmatpush1.bf16.msra.mxu0 0
    %2909 = vmatprep.subr.bf16.mxu0 0
    %2910 = vmatpush1.bf16.msra.mxu0 0
    %2911 = vmatprep.subr.bf16.mxu0 0
    %2912 = vmatpush1.bf16.msra.mxu0 0
    %2913 = vmatprep.subr.bf16.mxu0 0
    %2914 = vmatpush1.bf16.msra.mxu0 0
    %2915 = vmatprep.subr.bf16.mxu0 0
    %2916 = vmatpush1.bf16.msra.mxu0 0
    %2917 = vmatprep.subr.bf16.mxu0 0
    %2918 = vmatpush1.bf16.msra.mxu0 0
    %2919 = vmatprep.subr.bf16.mxu0 0
    %2920 = vmatpush1.bf16.msra.mxu0 0
    %2921 = vmatprep.subr.bf16.mxu0 0
    %2922 = vmatpush1.bf16.msra.mxu0 0
    %2923 = vmatprep.subr.bf16.mxu0 0
    %2924 = vmatpush1.bf16.msra.mxu0 0
    %2925 = vmatprep.subr.bf16.mxu0 0
    %2926 = vmatpush1.bf16.msra.mxu0 0
    %2927 = vmatprep.mubr.bf16.mxu0 0
    %2928 = vmatmul.mubr.bf16.gmra.mrb[0].mxu0 %v2890
    %v2929 = vpop.f32.mrb[0].mxu0
    %v2930 = vadd.f32 %v2831, %v2929
    %v2931 = vpop.f32.mrb[0].mxu0
    %v2932 = vadd.f32 %v2833, %v2931
    %v2933 = vpop.f32.mrb[0].mxu0
    %v2934 = vadd.f32 %v2835, %v2933
    %v2935 = vpop.f32.mrb[0].mxu0
    %v2936 = vadd.f32 %v2837, %v2935
    %2937 = vmatprep.mubr.bf16.mxu0 0
    %2938 = vmatmul.mubr.bf16.gmra.mrb[0].mxu0 %v2893
    %v2939 = vpop.f32.mrb[0].mxu0
    %v2940 = vadd.f32 %v2841, %v2939
    %v2941 = vpop.f32.mrb[0].mxu0
    %v2942 = vadd.f32 %v2843, %v2941
    %v2943 = vpop.f32.mrb[0].mxu0
    %v2944 = vadd.f32 %v2845, %v2943
    %v2945 = vpop.f32.mrb[0].mxu0
    %v2946 = vadd.f32 %v2847, %v2945
    %2947 = vdwg.mxu0
    %v2948 = vrot.slane %v2714, 5
    %v2949 = vrot.slane %v2715, 5
    %v2950 = vrot.slane %v2716, 5
    %v2951 = vrot.slane %v2717, 5
    %v2952 = vsel %vm893, %v2950, %v2951
    %v2953 = vsel %vm893, %v2949, %v2950
    %v2954 = vsel %vm893, %v2948, %v2949
    %v2955 = vsel %vm893, %v2951, %v2948
    %v2956 = vmul.f32 %v2955, %v899
    %v2957 = vmul.f32 %v2954, %v900
    %v2958 = vmul.f32 %v2953, %v901
    %v2959 = vmul.f32 %v2952, %v902
    %v2960 = vpack.c.bf16 %v2957, %v2956
    %v2961 = vpack.c.bf16 %v2959, %v2958
    %v2962 = vld [vmem:[%s4 + $0x300] sm:$0xff]
    %v2963 = vld [vmem:[%s4 + $0x308] sm:$0xff]
    %v2964 = vld [vmem:[%s4 + $0x310] sm:$0xff]
    %v2965 = vld [vmem:[%s4 + $0x318] sm:$0xff]
    %v2966 = vld [vmem:[%s4 + $0x320] sm:$0xff]
    %v2967 = vld [vmem:[%s4 + $0x328] sm:$0xff]
    %v2968 = vld [vmem:[%s4 + $0x330] sm:$0xff]
    %v2969 = vld [vmem:[%s4 + $0x338] sm:$0xff]
    %v2978 = vunpack.c.l.b16 %v2962
    %v2979 = vunpack.c.h.b16 %v2962
    %v2980 = vunpack.c.l.b16 %v2963
    %v2981 = vunpack.c.h.b16 %v2963
    %v2982 = vunpack.c.l.b16 %v2964
    %v2983 = vunpack.c.h.b16 %v2964
    %v2984 = vunpack.c.l.b16 %v2965
    %v2985 = vunpack.c.h.b16 %v2965
    %v2986 = vunpack.c.l.b16 %v2966
    %v2987 = vunpack.c.h.b16 %v2966
    %v2988 = vunpack.c.l.b16 %v2967
    %v2989 = vunpack.c.h.b16 %v2967
    %v2990 = vunpack.c.l.b16 %v2968
    %v2991 = vunpack.c.h.b16 %v2968
    %v2992 = vunpack.c.l.b16 %v2969
    %v2993 = vunpack.c.h.b16 %v2969
    %v2994 = vpack.c.b16 %v2980, %v2978
    %v2995 = vpack.c.b16 %v2981, %v2979
    %v2996 = vpack.c.b16 %v2984, %v2982
    %v2997 = vpack.c.b16 %v2985, %v2983
    %v2998 = vpack.c.b16 %v2988, %v2986
    %v2999 = vpack.c.b16 %v2989, %v2987
    %v3000 = vpack.c.b16 %v2992, %v2990
    %v3001 = vpack.c.b16 %v2993, %v2991
    %v3011 = vsel %vm43, %v2960, 0
    %v3014 = vsel %vm43, %v2961, 0
    %3016 = vmatprep.subr.bf16.mxu0 %v2995
    %3017 = vmatpush1.bf16.msra.mxu0 %v2994
    %3018 = vmatprep.subr.bf16.mxu0 %v2997
    %3019 = vmatpush1.bf16.msra.mxu0 %v2996
    %3020 = vmatprep.subr.bf16.mxu0 %v2999
    %3021 = vmatpush1.bf16.msra.mxu0 %v2998
    %3022 = vmatprep.subr.bf16.mxu0 %v3001
    %3023 = vmatpush1.bf16.msra.mxu0 %v3000
    %3024 = vmatprep.subr.bf16.mxu0 0
    %3025 = vmatpush1.bf16.msra.mxu0 0
    %3026 = vmatprep.subr.bf16.mxu0 0
    %3027 = vmatpush1.bf16.msra.mxu0 0
    %3028 = vmatprep.subr.bf16.mxu0 0
    %3029 = vmatpush1.bf16.msra.mxu0 0
    %3030 = vmatprep.subr.bf16.mxu0 0
    %3031 = vmatpush1.bf16.msra.mxu0 0
    %3032 = vmatprep.subr.bf16.mxu0 0
    %3033 = vmatpush1.bf16.msra.mxu0 0
    %3034 = vmatprep.subr.bf16.mxu0 0
    %3035 = vmatpush1.bf16.msra.mxu0 0
    %3036 = vmatprep.subr.bf16.mxu0 0
    %3037 = vmatpush1.bf16.msra.mxu0 0
    %3038 = vmatprep.subr.bf16.mxu0 0
    %3039 = vmatpush1.bf16.msra.mxu0 0
    %3040 = vmatprep.subr.bf16.mxu0 0
    %3041 = vmatpush1.bf16.msra.mxu0 0
    %3042 = vmatprep.subr.bf16.mxu0 0
    %3043 = vmatpush1.bf16.msra.mxu0 0
    %3044 = vmatprep.subr.bf16.mxu0 0
    %3045 = vmatpush1.bf16.msra.mxu0 0
    %3046 = vmatprep.subr.bf16.mxu0 0
    %3047 = vmatpush1.bf16.msra.mxu0 0
    %3048 = vmatprep.mubr.bf16.mxu0 0
    %3049 = vmatmul.mubr.bf16.gmra.mrb[0].mxu0 %v3011
    %v3050 = vpop.f32.mrb[0].mxu0
    %v3051 = vadd.f32 0.0, %v3050
    %v3052 = vpop.f32.mrb[0].mxu0
    %v3053 = vadd.f32 0.0, %v3052
    %v3054 = vpop.f32.mrb[0].mxu0
    %v3055 = vadd.f32 0.0, %v3054
    %v3056 = vpop.f32.mrb[0].mxu0
    %v3057 = vadd.f32 0.0, %v3056
    %3058 = vmatprep.mubr.bf16.mxu0 0
    %3059 = vmatmul.mubr.bf16.gmra.mrb[0].mxu0 %v3014
    %v3060 = vpop.f32.mrb[0].mxu0
    %v3061 = vadd.f32 0.0, %v3060
    %v3062 = vpop.f32.mrb[0].mxu0
    %v3063 = vadd.f32 0.0, %v3062
    %v3064 = vpop.f32.mrb[0].mxu0
    %v3065 = vadd.f32 0.0, %v3064
    %v3066 = vpop.f32.mrb[0].mxu0
    %v3067 = vadd.f32 0.0, %v3066
    %3068 = vdwg.mxu0
    %v3069 = vadd.f32 %v2930, %v3051
    %v3070 = vadd.f32 %v2932, %v3053
    %v3071 = vadd.f32 %v2934, %v3055
    %v3072 = vadd.f32 %v2936, %v3057
    %v3073 = vadd.f32 %v2940, %v3061
    %v3074 = vadd.f32 %v2942, %v3063
    %v3075 = vadd.f32 %v2944, %v3065
    %v3076 = vadd.f32 %v2946, %v3067
    %v3077 = vrot.slane %v2714, 6
    %v3078 = vrot.slane %v2715, 6
    %v3079 = vrot.slane %v2716, 6
    %v3080 = vrot.slane %v2717, 6
    %v3081 = vsel %vm1028, %v3079, %v3080
    %v3082 = vsel %vm1028, %v3078, %v3079
    %v3083 = vsel %vm1028, %v3077, %v3078
    %v3084 = vsel %vm1028, %v3080, %v3077
    %v3085 = vmul.f32 %v3084, %v1034
    %v3086 = vmul.f32 %v3083, %v1035
    %v3087 = vmul.f32 %v3082, %v1036
    %v3088 = vmul.f32 %v3081, %v1037
    %v3089 = vpack.c.bf16 %v3086, %v3085
    %v3090 = vpack.c.bf16 %v3088, %v3087
    %v3091 = vld [vmem:[%s4 + $0x340] sm:$0xff]
    %v3092 = vld [vmem:[%s4 + $0x348] sm:$0xff]
    %v3093 = vld [vmem:[%s4 + $0x350] sm:$0xff]
    %v3094 = vld [vmem:[%s4 + $0x358] sm:$0xff]
    %v3095 = vld [vmem:[%s4 + $0x360] sm:$0xff]
    %v3096 = vld [vmem:[%s4 + $0x368] sm:$0xff]
    %v3097 = vld [vmem:[%s4 + $0x370] sm:$0xff]
    %v3098 = vld [vmem:[%s4 + $0x378] sm:$0xff]
    %v3107 = vunpack.c.l.b16 %v3091
    %v3108 = vunpack.c.h.b16 %v3091
    %v3109 = vunpack.c.l.b16 %v3092
    %v3110 = vunpack.c.h.b16 %v3092
    %v3111 = vunpack.c.l.b16 %v3093
    %v3112 = vunpack.c.h.b16 %v3093
    %v3113 = vunpack.c.l.b16 %v3094
    %v3114 = vunpack.c.h.b16 %v3094
    %v3115 = vunpack.c.l.b16 %v3095
    %v3116 = vunpack.c.h.b16 %v3095
    %v3117 = vunpack.c.l.b16 %v3096
    %v3118 = vunpack.c.h.b16 %v3096
    %v3119 = vunpack.c.l.b16 %v3097
    %v3120 = vunpack.c.h.b16 %v3097
    %v3121 = vunpack.c.l.b16 %v3098
    %v3122 = vunpack.c.h.b16 %v3098
    %v3123 = vpack.c.b16 %v3109, %v3107
    %v3124 = vpack.c.b16 %v3110, %v3108
    %v3125 = vpack.c.b16 %v3113, %v3111
    %v3126 = vpack.c.b16 %v3114, %v3112
    %v3127 = vpack.c.b16 %v3117, %v3115
    %v3128 = vpack.c.b16 %v3118, %v3116
    %v3129 = vpack.c.b16 %v3121, %v3119
    %v3130 = vpack.c.b16 %v3122, %v3120
    %v3140 = vsel %vm43, %v3089, 0
    %v3143 = vsel %vm43, %v3090, 0
    %3145 = vmatprep.subr.bf16.mxu0 %v3124
    %3146 = vmatpush1.bf16.msra.mxu0 %v3123
    %3147 = vmatprep.subr.bf16.mxu0 %v3126
    %3148 = vmatpush1.bf16.msra.mxu0 %v3125
    %3149 = vmatprep.subr.bf16.mxu0 %v3128
    %3150 = vmatpush1.bf16.msra.mxu0 %v3127
    %3151 = vmatprep.subr.bf16.mxu0 %v3130
    %3152 = vmatpush1.bf16.msra.mxu0 %v3129
    %3153 = vmatprep.subr.bf16.mxu0 0
    %3154 = vmatpush1.bf16.msra.mxu0 0
    %3155 = vmatprep.subr.bf16.mxu0 0
    %3156 = vmatpush1.bf16.msra.mxu0 0
    %3157 = vmatprep.subr.bf16.mxu0 0
    %3158 = vmatpush1.bf16.msra.mxu0 0
    %3159 = vmatprep.subr.bf16.mxu0 0
    %3160 = vmatpush1.bf16.msra.mxu0 0
    %3161 = vmatprep.subr.bf16.mxu0 0
    %3162 = vmatpush1.bf16.msra.mxu0 0
    %3163 = vmatprep.subr.bf16.mxu0 0
    %3164 = vmatpush1.bf16.msra.mxu0 0
    %3165 = vmatprep.subr.bf16.mxu0 0
    %3166 = vmatpush1.bf16.msra.mxu0 0
    %3167 = vmatprep.subr.bf16.mxu0 0
    %3168 = vmatpush1.bf16.msra.mxu0 0
    %3169 = vmatprep.subr.bf16.mxu0 0
    %3170 = vmatpush1.bf16.msra.mxu0 0
    %3171 = vmatprep.subr.bf16.mxu0 0
    %3172 = vmatpush1.bf16.msra.mxu0 0
    %3173 = vmatprep.subr.bf16.mxu0 0
    %3174 = vmatpush1.bf16.msra.mxu0 0
    %3175 = vmatprep.subr.bf16.mxu0 0
    %3176 = vmatpush1.bf16.msra.mxu0 0
    %3177 = vmatprep.mubr.bf16.mxu0 0
    %3178 = vmatmul.mubr.bf16.gmra.mrb[0].mxu0 %v3140
    %v3179 = vpop.f32.mrb[0].mxu0
    %v3180 = vadd.f32 0.0, %v3179
    %v3181 = vpop.f32.mrb[0].mxu0
    %v3182 = vadd.f32 0.0, %v3181
    %v3183 = vpop.f32.mrb[0].mxu0
    %v3184 = vadd.f32 0.0, %v3183
    %v3185 = vpop.f32.mrb[0].mxu0
    %v3186 = vadd.f32 0.0, %v3185
    %3187 = vmatprep.mubr.bf16.mxu0 0
    %3188 = vmatmul.mubr.bf16.gmra.mrb[0].mxu0 %v3143
    %v3189 = vpop.f32.mrb[0].mxu0
    %v3190 = vadd.f32 0.0, %v3189
    %v3191 = vpop.f32.mrb[0].mxu0
    %v3192 = vadd.f32 0.0, %v3191
    %v3193 = vpop.f32.mrb[0].mxu0
    %v3194 = vadd.f32 0.0, %v3193
    %v3195 = vpop.f32.mrb[0].mxu0
    %v3196 = vadd.f32 0.0, %v3195
    %3197 = vdwg.mxu0
    %v3198 = vadd.f32 %v3069, %v3180
    %v3199 = vadd.f32 %v3070, %v3182
    %v3200 = vadd.f32 %v3071, %v3184
    %v3201 = vadd.f32 %v3072, %v3186
    %v3202 = vadd.f32 %v3073, %v3190
    %v3203 = vadd.f32 %v3074, %v3192
    %v3204 = vadd.f32 %v3075, %v3194
    %v3205 = vadd.f32 %v3076, %v3196
    %v3206 = vrot.slane %v2714, 7
    %v3207 = vrot.slane %v2715, 7
    %v3208 = vrot.slane %v2716, 7
    %v3209 = vrot.slane %v2717, 7
    %v3210 = vsel %vm1163, %v3208, %v3209
    %v3211 = vsel %vm1163, %v3207, %v3208
    %v3212 = vsel %vm1163, %v3206, %v3207
    %v3213 = vsel %vm1163, %v3209, %v3206
    %v3214 = vmul.f32 %v3213, %v1169
    %v3215 = vmul.f32 %v3212, %v1170
    %v3216 = vmul.f32 %v3211, %v1171
    %v3217 = vmul.f32 %v3210, %v1172
    %v3218 = vpack.c.bf16 %v3215, %v3214
    %v3219 = vpack.c.bf16 %v3217, %v3216
    %v3220 = vld [vmem:[%s4 + $0x380] sm:$0xff]
    %v3221 = vld [vmem:[%s4 + $0x388] sm:$0xff]
    %v3222 = vld [vmem:[%s4 + $0x390] sm:$0xff]
    %v3223 = vld [vmem:[%s4 + $0x398] sm:$0xff]
    %v3224 = vld [vmem:[%s4 + $0x3a0] sm:$0xff]
    %v3225 = vld [vmem:[%s4 + $0x3a8] sm:$0xff]
    %v3226 = vld [vmem:[%s4 + $0x3b0] sm:$0xff]
    %v3227 = vld [vmem:[%s4 + $0x3b8] sm:$0xff]
    %v3236 = vunpack.c.l.b16 %v3220
    %v3237 = vunpack.c.h.b16 %v3220
    %v3238 = vunpack.c.l.b16 %v3221
    %v3239 = vunpack.c.h.b16 %v3221
    %v3240 = vunpack.c.l.b16 %v3222
    %v3241 = vunpack.c.h.b16 %v3222
    %v3242 = vunpack.c.l.b16 %v3223
    %v3243 = vunpack.c.h.b16 %v3223
    %v3244 = vunpack.c.l.b16 %v3224
    %v3245 = vunpack.c.h.b16 %v3224
    %v3246 = vunpack.c.l.b16 %v3225
    %v3247 = vunpack.c.h.b16 %v3225
    %v3248 = vunpack.c.l.b16 %v3226
    %v3249 = vunpack.c.h.b16 %v3226
    %v3250 = vunpack.c.l.b16 %v3227
    %v3251 = vunpack.c.h.b16 %v3227
    %v3252 = vpack.c.b16 %v3238, %v3236
    %v3253 = vpack.c.b16 %v3239, %v3237
    %v3254 = vpack.c.b16 %v3242, %v3240
    %v3255 = vpack.c.b16 %v3243, %v3241
    %v3256 = vpack.c.b16 %v3246, %v3244
    %v3257 = vpack.c.b16 %v3247, %v3245
    %v3258 = vpack.c.b16 %v3250, %v3248
    %v3259 = vpack.c.b16 %v3251, %v3249
    %v3269 = vsel %vm43, %v3218, 0
    %v3272 = vsel %vm43, %v3219, 0
    %3274 = vmatprep.subr.bf16.mxu0 %v3253
    %3275 = vmatpush1.bf16.msra.mxu0 %v3252
    %3276 = vmatprep.subr.bf16.mxu0 %v3255
    %3277 = vmatpush1.bf16.msra.mxu0 %v3254
    %3278 = vmatprep.subr.bf16.mxu0 %v3257
    %3279 = vmatpush1.bf16.msra.mxu0 %v3256
    %3280 = vmatprep.subr.bf16.mxu0 %v3259
    %3281 = vmatpush1.bf16.msra.mxu0 %v3258
    %3282 = vmatprep.subr.bf16.mxu0 0
    %3283 = vmatpush1.bf16.msra.mxu0 0
    %3284 = vmatprep.subr.bf16.mxu0 0
    %3285 = vmatpush1.bf16.msra.mxu0 0
    %3286 = vmatprep.subr.bf16.mxu0 0
    %3287 = vmatpush1.bf16.msra.mxu0 0
    %3288 = vmatprep.subr.bf16.mxu0 0
    %3289 = vmatpush1.bf16.msra.mxu0 0
    %3290 = vmatprep.subr.bf16.mxu0 0
    %3291 = vmatpush1.bf16.msra.mxu0 0
    %3292 = vmatprep.subr.bf16.mxu0 0
    %3293 = vmatpush1.bf16.msra.mxu0 0
    %3294 = vmatprep.subr.bf16.mxu0 0
    %3295 = vmatpush1.bf16.msra.mxu0 0
    %3296 = vmatprep.subr.bf16.mxu0 0
    %3297 = vmatpush1.bf16.msra.mxu0 0
    %3298 = vmatprep.subr.bf16.mxu0 0
    %3299 = vmatpush1.bf16.msra.mxu0 0
    %3300 = vmatprep.subr.bf16.mxu0 0
    %3301 = vmatpush1.bf16.msra.mxu0 0
    %3302 = vmatprep.subr.bf16.mxu0 0
    %3303 = vmatpush1.bf16.msra.mxu0 0
    %3304 = vmatprep.subr.bf16.mxu0 0
    %3305 = vmatpush1.bf16.msra.mxu0 0
    %3306 = vmatprep.mubr.bf16.mxu0 0
    %3307 = vmatmul.mubr.bf16.gmra.mrb[0].mxu0 %v3269
    %v3308 = vpop.f32.mrb[0].mxu0
    %v3309 = vadd.f32 0.0, %v3308
    %v3310 = vpop.f32.mrb[0].mxu0
    %v3311 = vadd.f32 0.0, %v3310
    %v3312 = vpop.f32.mrb[0].mxu0
    %v3313 = vadd.f32 0.0, %v3312
    %v3314 = vpop.f32.mrb[0].mxu0
    %v3315 = vadd.f32 0.0, %v3314
    %3316 = vmatprep.mubr.bf16.mxu0 0
    %3317 = vmatmul.mubr.bf16.gmra.mrb[0].mxu0 %v3272
    %v3318 = vpop.f32.mrb[0].mxu0
    %v3319 = vadd.f32 0.0, %v3318
    %v3320 = vpop.f32.mrb[0].mxu0
    %v3321 = vadd.f32 0.0, %v3320
    %v3322 = vpop.f32.mrb[0].mxu0
    %v3323 = vadd.f32 0.0, %v3322
    %v3324 = vpop.f32.mrb[0].mxu0
    %v3325 = vadd.f32 0.0, %v3324
    %3326 = vdwg.mxu0
    %v3327 = vadd.f32 %v3198, %v3309
    %v3328 = vadd.f32 %v3199, %v3311
    %v3329 = vadd.f32 %v3200, %v3313
    %v3330 = vadd.f32 %v3201, %v3315
    %v3331 = vadd.f32 %v3202, %v3319
    %v3332 = vadd.f32 %v3203, %v3321
    %v3333 = vadd.f32 %v3204, %v3323
    %v3334 = vadd.f32 %v3205, %v3325
    %v3335 = vrot.slane %v2714, 1
    %v3336 = vrot.slane %v2715, 1
    %v3337 = vrot.slane %v2716, 1
    %v3338 = vrot.slane %v2717, 1
    %v3339 = vsel %vm1298, %v3337, %v3338
    %v3340 = vsel %vm1298, %v3336, %v3337
    %v3341 = vsel %vm1298, %v3335, %v3336
    %v3342 = vsel %vm1298, %v3338, %v3335
    %v3343 = vmul.f32 %v3341, %v1304
    %v3344 = vmul.f32 %v3340, %v1305
    %v3345 = vmul.f32 %v3339, %v1306
    %v3346 = vmul.f32 %v3342, %v1307
    %v3347 = vpack.c.bf16 %v3344, %v3343
    %v3348 = vpack.c.bf16 %v3346, %v3345
    %v3349 = vld [vmem:[%s4 + $0x400] sm:$0xff]
    %v3350 = vld [vmem:[%s4 + $0x408] sm:$0xff]
    %v3351 = vld [vmem:[%s4 + $0x410] sm:$0xff]
    %v3352 = vld [vmem:[%s4 + $0x418] sm:$0xff]
    %v3353 = vld [vmem:[%s4 + $0x420] sm:$0xff]
    %v3354 = vld [vmem:[%s4 + $0x428] sm:$0xff]
    %v3355 = vld [vmem:[%s4 + $0x430] sm:$0xff]
    %v3356 = vld [vmem:[%s4 + $0x438] sm:$0xff]
    %v3365 = vunpack.c.l.b16 %v3349
    %v3366 = vunpack.c.h.b16 %v3349
    %v3367 = vunpack.c.l.b16 %v3350
    %v3368 = vunpack.c.h.b16 %v3350
    %v3369 = vunpack.c.l.b16 %v3351
    %v3370 = vunpack.c.h.b16 %v3351
    %v3371 = vunpack.c.l.b16 %v3352
    %v3372 = vunpack.c.h.b16 %v3352
    %v3373 = vunpack.c.l.b16 %v3353
    %v3374 = vunpack.c.h.b16 %v3353
    %v3375 = vunpack.c.l.b16 %v3354
    %v3376 = vunpack.c.h.b16 %v3354
    %v3377 = vunpack.c.l.b16 %v3355
    %v3378 = vunpack.c.h.b16 %v3355
    %v3379 = vunpack.c.l.b16 %v3356
    %v3380 = vunpack.c.h.b16 %v3356
    %v3381 = vpack.c.b16 %v3367, %v3365
    %v3382 = vpack.c.b16 %v3368, %v3366
    %v3383 = vpack.c.b16 %v3371, %v3369
    %v3384 = vpack.c.b16 %v3372, %v3370
    %v3385 = vpack.c.b16 %v3375, %v3373
    %v3386 = vpack.c.b16 %v3376, %v3374
    %v3387 = vpack.c.b16 %v3379, %v3377
    %v3388 = vpack.c.b16 %v3380, %v3378
    %v3398 = vsel %vm43, %v3347, 0
    %v3401 = vsel %vm43, %v3348, 0
    %3403 = vmatprep.subr.bf16.mxu0 %v3382
    %3404 = vmatpush1.bf16.msra.mxu0 %v3381
    %3405 = vmatprep.subr.bf16.mxu0 %v3384
    %3406 = vmatpush1.bf16.msra.mxu0 %v3383
    %3407 = vmatprep.subr.bf16.mxu0 %v3386
    %3408 = vmatpush1.bf16.msra.mxu0 %v3385
    %3409 = vmatprep.subr.bf16.mxu0 %v3388
    %3410 = vmatpush1.bf16.msra.mxu0 %v3387
    %3411 = vmatprep.subr.bf16.mxu0 0
    %3412 = vmatpush1.bf16.msra.mxu0 0
    %3413 = vmatprep.subr.bf16.mxu0 0
    %3414 = vmatpush1.bf16.msra.mxu0 0
    %3415 = vmatprep.subr.bf16.mxu0 0
    %3416 = vmatpush1.bf16.msra.mxu0 0
    %3417 = vmatprep.subr.bf16.mxu0 0
    %3418 = vmatpush1.bf16.msra.mxu0 0
    %3419 = vmatprep.subr.bf16.mxu0 0
    %3420 = vmatpush1.bf16.msra.mxu0 0
    %3421 = vmatprep.subr.bf16.mxu0 0
    %3422 = vmatpush1.bf16.msra.mxu0 0
    %3423 = vmatprep.subr.bf16.mxu0 0
    %3424 = vmatpush1.bf16.msra.mxu0 0
    %3425 = vmatprep.subr.bf16.mxu0 0
    %3426 = vmatpush1.bf16.msra.mxu0 0
    %3427 = vmatprep.subr.bf16.mxu0 0
    %3428 = vmatpush1.bf16.msra.mxu0 0
    %3429 = vmatprep.subr.bf16.mxu0 0
    %3430 = vmatpush1.bf16.msra.mxu0 0
    %3431 = vmatprep.subr.bf16.mxu0 0
    %3432 = vmatpush1.bf16.msra.mxu0 0
    %3433 = vmatprep.subr.bf16.mxu0 0
    %3434 = vmatpush1.bf16.msra.mxu0 0
    %3435 = vmatprep.mubr.bf16.mxu0 0
    %3436 = vmatmul.mubr.bf16.gmra.mrb[0].mxu0 %v3398
    %v3437 = vpop.f32.mrb[0].mxu0
    %v3438 = vadd.f32 0.0, %v3437
    %v3439 = vpop.f32.mrb[0].mxu0
    %v3440 = vadd.f32 0.0, %v3439
    %v3441 = vpop.f32.mrb[0].mxu0
    %v3442 = vadd.f32 0.0, %v3441
    %v3443 = vpop.f32.mrb[0].mxu0
    %v3444 = vadd.f32 0.0, %v3443
    %3445 = vmatprep.mubr.bf16.mxu0 0
    %3446 = vmatmul.mubr.bf16.gmra.mrb[0].mxu0 %v3401
    %v3447 = vpop.f32.mrb[0].mxu0
    %v3448 = vadd.f32 0.0, %v3447
    %v3449 = vpop.f32.mrb[0].mxu0
    %v3450 = vadd.f32 0.0, %v3449
    %v3451 = vpop.f32.mrb[0].mxu0
    %v3452 = vadd.f32 0.0, %v3451
    %v3453 = vpop.f32.mrb[0].mxu0
    %v3454 = vadd.f32 0.0, %v3453
    %3455 = vdwg.mxu0
    %v3456 = vadd.f32 %v3327, %v3438
    %v3457 = vadd.f32 %v3328, %v3440
    %v3458 = vadd.f32 %v3329, %v3442
    %v3459 = vadd.f32 %v3330, %v3444
    %v3460 = vadd.f32 %v3331, %v3448
    %v3461 = vadd.f32 %v3332, %v3450
    %v3462 = vadd.f32 %v3333, %v3452
    %v3463 = vadd.f32 %v3334, %v3454
    %v3464 = vrot.slane %v2714, 2
    %v3465 = vrot.slane %v2715, 2
    %v3466 = vrot.slane %v2716, 2
    %v3467 = vrot.slane %v2717, 2
    %v3468 = vsel %vm1433, %v3466, %v3467
    %v3469 = vsel %vm1433, %v3465, %v3466
    %v3470 = vsel %vm1433, %v3464, %v3465
    %v3471 = vsel %vm1433, %v3467, %v3464
    %v3472 = vmul.f32 %v3470, %v1439
    %v3473 = vmul.f32 %v3469, %v1440
    %v3474 = vmul.f32 %v3468, %v1441
    %v3475 = vmul.f32 %v3471, %v1442
    %v3476 = vpack.c.bf16 %v3473, %v3472
    %v3477 = vpack.c.bf16 %v3475, %v3474
    %v3478 = vld [vmem:[%s4 + $0x440] sm:$0xff]
    %v3479 = vld [vmem:[%s4 + $0x448] sm:$0xff]
    %v3480 = vld [vmem:[%s4 + $0x450] sm:$0xff]
    %v3481 = vld [vmem:[%s4 + $0x458] sm:$0xff]
    %v3482 = vld [vmem:[%s4 + $0x460] sm:$0xff]
    %v3483 = vld [vmem:[%s4 + $0x468] sm:$0xff]
    %v3484 = vld [vmem:[%s4 + $0x470] sm:$0xff]
    %v3485 = vld [vmem:[%s4 + $0x478] sm:$0xff]
    %v3494 = vunpack.c.l.b16 %v3478
    %v3495 = vunpack.c.h.b16 %v3478
    %v3496 = vunpack.c.l.b16 %v3479
    %v3497 = vunpack.c.h.b16 %v3479
    %v3498 = vunpack.c.l.b16 %v3480
    %v3499 = vunpack.c.h.b16 %v3480
    %v3500 = vunpack.c.l.b16 %v3481
    %v3501 = vunpack.c.h.b16 %v3481
    %v3502 = vunpack.c.l.b16 %v3482
    %v3503 = vunpack.c.h.b16 %v3482
    %v3504 = vunpack.c.l.b16 %v3483
    %v3505 = vunpack.c.h.b16 %v3483
    %v3506 = vunpack.c.l.b16 %v3484
    %v3507 = vunpack.c.h.b16 %v3484
    %v3508 = vunpack.c.l.b16 %v3485
    %v3509 = vunpack.c.h.b16 %v3485
    %v3510 = vpack.c.b16 %v3496, %v3494
    %v3511 = vpack.c.b16 %v3497, %v3495
    %v3512 = vpack.c.b16 %v3500, %v3498
    %v3513 = vpack.c.b16 %v3501, %v3499
    %v3514 = vpack.c.b16 %v3504, %v3502
    %v3515 = vpack.c.b16 %v3505, %v3503
    %v3516 = vpack.c.b16 %v3508, %v3506
    %v3517 = vpack.c.b16 %v3509, %v3507
    %v3527 = vsel %vm43, %v3476, 0
    %v3530 = vsel %vm43, %v3477, 0
    %3532 = vmatprep.subr.bf16.mxu0 %v3511
    %3533 = vmatpush1.bf16.msra.mxu0 %v3510
    %3534 = vmatprep.subr.bf16.mxu0 %v3513
    %3535 = vmatpush1.bf16.msra.mxu0 %v3512
    %3536 = vmatprep.subr.bf16.mxu0 %v3515
    %3537 = vmatpush1.bf16.msra.mxu0 %v3514
    %3538 = vmatprep.subr.bf16.mxu0 %v3517
    %3539 = vmatpush1.bf16.msra.mxu0 %v3516
    %3540 = vmatprep.subr.bf16.mxu0 0
    %3541 = vmatpush1.bf16.msra.mxu0 0
    %3542 = vmatprep.subr.bf16.mxu0 0
    %3543 = vmatpush1.bf16.msra.mxu0 0
    %3544 = vmatprep.subr.bf16.mxu0 0
    %3545 = vmatpush1.bf16.msra.mxu0 0
    %3546 = vmatprep.subr.bf16.mxu0 0
    %3547 = vmatpush1.bf16.msra.mxu0 0
    %3548 = vmatprep.subr.bf16.mxu0 0
    %3549 = vmatpush1.bf16.msra.mxu0 0
    %3550 = vmatprep.subr.bf16.mxu0 0
    %3551 = vmatpush1.bf16.msra.mxu0 0
    %3552 = vmatprep.subr.bf16.mxu0 0
    %3553 = vmatpush1.bf16.msra.mxu0 0
    %3554 = vmatprep.subr.bf16.mxu0 0
    %3555 = vmatpush1.bf16.msra.mxu0 0
    %3556 = vmatprep.subr.bf16.mxu0 0
    %3557 = vmatpush1.bf16.msra.mxu0 0
    %3558 = vmatprep.subr.bf16.mxu0 0
    %3559 = vmatpush1.bf16.msra.mxu0 0
    %3560 = vmatprep.subr.bf16.mxu0 0
    %3561 = vmatpush1.bf16.msra.mxu0 0
    %3562 = vmatprep.subr.bf16.mxu0 0
    %3563 = vmatpush1.bf16.msra.mxu0 0
    %3564 = vmatprep.mubr.bf16.mxu0 0
    %3565 = vmatmul.mubr.bf16.gmra.mrb[0].mxu0 %v3527
    %v3566 = vpop.f32.mrb[0].mxu0
    %v3567 = vadd.f32 0.0, %v3566
    %v3568 = vpop.f32.mrb[0].mxu0
    %v3569 = vadd.f32 0.0, %v3568
    %v3570 = vpop.f32.mrb[0].mxu0
    %v3571 = vadd.f32 0.0, %v3570
    %v3572 = vpop.f32.mrb[0].mxu0
    %v3573 = vadd.f32 0.0, %v3572
    %3574 = vmatprep.mubr.bf16.mxu0 0
    %3575 = vmatmul.mubr.bf16.gmra.mrb[0].mxu0 %v3530
    %v3576 = vpop.f32.mrb[0].mxu0
    %v3577 = vadd.f32 0.0, %v3576
    %v3578 = vpop.f32.mrb[0].mxu0
    %v3579 = vadd.f32 0.0, %v3578
    %v3580 = vpop.f32.mrb[0].mxu0
    %v3581 = vadd.f32 0.0, %v3580
    %v3582 = vpop.f32.mrb[0].mxu0
    %v3583 = vadd.f32 0.0, %v3582
    %3584 = vdwg.mxu0
    %v3585 = vadd.f32 %v3456, %v3567
    %v3586 = vadd.f32 %v3457, %v3569
    %v3587 = vadd.f32 %v3458, %v3571
    %v3588 = vadd.f32 %v3459, %v3573
    %v3589 = vadd.f32 %v3460, %v3577
    %v3590 = vadd.f32 %v3461, %v3579
    %v3591 = vadd.f32 %v3462, %v3581
    %v3592 = vadd.f32 %v3463, %v3583
    %v3593 = vrot.slane %v2714, 3
    %v3594 = vrot.slane %v2715, 3
    %v3595 = vrot.slane %v2716, 3
    %v3596 = vrot.slane %v2717, 3
    %v3597 = vsel %vm1568, %v3595, %v3596
    %v3598 = vsel %vm1568, %v3594, %v3595
    %v3599 = vsel %vm1568, %v3593, %v3594
    %v3600 = vsel %vm1568, %v3596, %v3593
    %v3601 = vmul.f32 %v3599, %v1574
    %v3602 = vmul.f32 %v3598, %v1575
    %v3603 = vmul.f32 %v3597, %v1576
    %v3604 = vmul.f32 %v3600, %v1577
    %v3605 = vpack.c.bf16 %v3602, %v3601
    %v3606 = vpack.c.bf16 %v3604, %v3603
    %v3607 = vld [vmem:[%s4 + $0x480] sm:$0xff]
    %v3608 = vld [vmem:[%s4 + $0x488] sm:$0xff]
    %v3609 = vld [vmem:[%s4 + $0x490] sm:$0xff]
    %v3610 = vld [vmem:[%s4 + $0x498] sm:$0xff]
    %v3611 = vld [vmem:[%s4 + $0x4a0] sm:$0xff]
    %v3612 = vld [vmem:[%s4 + $0x4a8] sm:$0xff]
    %v3613 = vld [vmem:[%s4 + $0x4b0] sm:$0xff]
    %v3614 = vld [vmem:[%s4 + $0x4b8] sm:$0xff]
    %v3623 = vunpack.c.l.b16 %v3607
    %v3624 = vunpack.c.h.b16 %v3607
    %v3625 = vunpack.c.l.b16 %v3608
    %v3626 = vunpack.c.h.b16 %v3608
    %v3627 = vunpack.c.l.b16 %v3609
    %v3628 = vunpack.c.h.b16 %v3609
    %v3629 = vunpack.c.l.b16 %v3610
    %v3630 = vunpack.c.h.b16 %v3610
    %v3631 = vunpack.c.l.b16 %v3611
    %v3632 = vunpack.c.h.b16 %v3611
    %v3633 = vunpack.c.l.b16 %v3612
    %v3634 = vunpack.c.h.b16 %v3612
    %v3635 = vunpack.c.l.b16 %v3613
    %v3636 = vunpack.c.h.b16 %v3613
    %v3637 = vunpack.c.l.b16 %v3614
    %v3638 = vunpack.c.h.b16 %v3614
    %v3639 = vpack.c.b16 %v3625, %v3623
    %v3640 = vpack.c.b16 %v3626, %v3624
    %v3641 = vpack.c.b16 %v3629, %v3627
    %v3642 = vpack.c.b16 %v3630, %v3628
    %v3643 = vpack.c.b16 %v3633, %v3631
    %v3644 = vpack.c.b16 %v3634, %v3632
    %v3645 = vpack.c.b16 %v3637, %v3635
    %v3646 = vpack.c.b16 %v3638, %v3636
    %v3656 = vsel %vm43, %v3605, 0
    %v3659 = vsel %vm43, %v3606, 0
    %3661 = vmatprep.subr.bf16.mxu0 %v3640
    %3662 = vmatpush1.bf16.msra.mxu0 %v3639
    %3663 = vmatprep.subr.bf16.mxu0 %v3642
    %3664 = vmatpush1.bf16.msra.mxu0 %v3641
    %3665 = vmatprep.subr.bf16.mxu0 %v3644
    %3666 = vmatpush1.bf16.msra.mxu0 %v3643
    %3667 = vmatprep.subr.bf16.mxu0 %v3646
    %3668 = vmatpush1.bf16.msra.mxu0 %v3645
    %3669 = vmatprep.subr.bf16.mxu0 0
    %3670 = vmatpush1.bf16.msra.mxu0 0
    %3671 = vmatprep.subr.bf16.mxu0 0
    %3672 = vmatpush1.bf16.msra.mxu0 0
    %3673 = vmatprep.subr.bf16.mxu0 0
    %3674 = vmatpush1.bf16.msra.mxu0 0
    %3675 = vmatprep.subr.bf16.mxu0 0
    %3676 = vmatpush1.bf16.msra.mxu0 0
    %3677 = vmatprep.subr.bf16.mxu0 0
    %3678 = vmatpush1.bf16.msra.mxu0 0
    %3679 = vmatprep.subr.bf16.mxu0 0
    %3680 = vmatpush1.bf16.msra.mxu0 0
    %3681 = vmatprep.subr.bf16.mxu0 0
    %3682 = vmatpush1.bf16.msra.mxu0 0
    %3683 = vmatprep.subr.bf16.mxu0 0
    %3684 = vmatpush1.bf16.msra.mxu0 0
    %3685 = vmatprep.subr.bf16.mxu0 0
    %3686 = vmatpush1.bf16.msra.mxu0 0
    %3687 = vmatprep.subr.bf16.mxu0 0
    %3688 = vmatpush1.bf16.msra.mxu0 0
    %3689 = vmatprep.subr.bf16.mxu0 0
    %3690 = vmatpush1.bf16.msra.mxu0 0
    %3691 = vmatprep.subr.bf16.mxu0 0
    %3692 = vmatpush1.bf16.msra.mxu0 0
    %3693 = vmatprep.mubr.bf16.mxu0 0
    %3694 = vmatmul.mubr.bf16.gmra.mrb[0].mxu0 %v3656
    %v3695 = vpop.f32.mrb[0].mxu0
    %v3696 = vadd.f32 0.0, %v3695
    %v3697 = vpop.f32.mrb[0].mxu0
    %v3698 = vadd.f32 0.0, %v3697
    %v3699 = vpop.f32.mrb[0].mxu0
    %v3700 = vadd.f32 0.0, %v3699
    %v3701 = vpop.f32.mrb[0].mxu0
    %v3702 = vadd.f32 0.0, %v3701
    %3703 = vmatprep.mubr.bf16.mxu0 0
    %3704 = vmatmul.mubr.bf16.gmra.mrb[0].mxu0 %v3659
    %v3705 = vpop.f32.mrb[0].mxu0
    %v3706 = vadd.f32 0.0, %v3705
    %v3707 = vpop.f32.mrb[0].mxu0
    %v3708 = vadd.f32 0.0, %v3707
    %v3709 = vpop.f32.mrb[0].mxu0
    %v3710 = vadd.f32 0.0, %v3709
    %v3711 = vpop.f32.mrb[0].mxu0
    %v3712 = vadd.f32 0.0, %v3711
    %3713 = vdwg.mxu0
    %v3714 = vadd.f32 %v3585, %v3696
    %v3715 = vadd.f32 %v3586, %v3698
    %v3716 = vadd.f32 %v3587, %v3700
    %v3717 = vadd.f32 %v3588, %v3702
    %v3718 = vadd.f32 %v3589, %v3706
    %v3719 = vadd.f32 %v3590, %v3708
    %v3720 = vadd.f32 %v3591, %v3710
    %v3721 = vadd.f32 %v3592, %v3712
    %v3722 = vmul.f32 %v2734, %v1700
    %v3723 = vmul.f32 %v2733, %v1701
    %v3724 = vmul.f32 %v2732, %v1702
    %v3725 = vmul.f32 %v2735, %v1703
    %v3726 = vpack.c.bf16 %v3723, %v3722
    %v3727 = vpack.c.bf16 %v3725, %v3724
    %v3728 = vld [vmem:[%s4 + $0x4c0] sm:$0xff]
    %v3729 = vld [vmem:[%s4 + $0x4c8] sm:$0xff]
    %v3730 = vld [vmem:[%s4 + $0x4d0] sm:$0xff]
    %v3731 = vld [vmem:[%s4 + $0x4d8] sm:$0xff]
    %v3732 = vld [vmem:[%s4 + $0x4e0] sm:$0xff]
    %v3733 = vld [vmem:[%s4 + $0x4e8] sm:$0xff]
    %v3734 = vld [vmem:[%s4 + $0x4f0] sm:$0xff]
    %v3735 = vld [vmem:[%s4 + $0x4f8] sm:$0xff]
    %v3744 = vunpack.c.l.b16 %v3728
    %v3745 = vunpack.c.h.b16 %v3728
    %v3746 = vunpack.c.l.b16 %v3729
    %v3747 = vunpack.c.h.b16 %v3729
    %v3748 = vunpack.c.l.b16 %v3730
    %v3749 = vunpack.c.h.b16 %v3730
    %v3750 = vunpack.c.l.b16 %v3731
    %v3751 = vunpack.c.h.b16 %v3731
    %v3752 = vunpack.c.l.b16 %v3732
    %v3753 = vunpack.c.h.b16 %v3732
    %v3754 = vunpack.c.l.b16 %v3733
    %v3755 = vunpack.c.h.b16 %v3733
    %v3756 = vunpack.c.l.b16 %v3734
    %v3757 = vunpack.c.h.b16 %v3734
    %v3758 = vunpack.c.l.b16 %v3735
    %v3759 = vunpack.c.h.b16 %v3735
    %v3760 = vpack.c.b16 %v3746, %v3744
    %v3761 = vpack.c.b16 %v3747, %v3745
    %v3762 = vpack.c.b16 %v3750, %v3748
    %v3763 = vpack.c.b16 %v3751, %v3749
    %v3764 = vpack.c.b16 %v3754, %v3752
    %v3765 = vpack.c.b16 %v3755, %v3753
    %v3766 = vpack.c.b16 %v3758, %v3756
    %v3767 = vpack.c.b16 %v3759, %v3757
    %v3777 = vsel %vm43, %v3726, 0
    %v3780 = vsel %vm43, %v3727, 0
    %3782 = vmatprep.subr.bf16.mxu0 %v3761
    %3783 = vmatpush1.bf16.msra.mxu0 %v3760
    %3784 = vmatprep.subr.bf16.mxu0 %v3763
    %3785 = vmatpush1.bf16.msra.mxu0 %v3762
    %3786 = vmatprep.subr.bf16.mxu0 %v3765
    %3787 = vmatpush1.bf16.msra.mxu0 %v3764
    %3788 = vmatprep.subr.bf16.mxu0 %v3767
    %3789 = vmatpush1.bf16.msra.mxu0 %v3766
    %3790 = vmatprep.subr.bf16.mxu0 0
    %3791 = vmatpush1.bf16.msra.mxu0 0
    %3792 = vmatprep.subr.bf16.mxu0 0
    %3793 = vmatpush1.bf16.msra.mxu0 0
    %3794 = vmatprep.subr.bf16.mxu0 0
    %3795 = vmatpush1.bf16.msra.mxu0 0
    %3796 = vmatprep.subr.bf16.mxu0 0
    %3797 = vmatpush1.bf16.msra.mxu0 0
    %3798 = vmatprep.subr.bf16.mxu0 0
    %3799 = vmatpush1.bf16.msra.mxu0 0
    %3800 = vmatprep.subr.bf16.mxu0 0
    %3801 = vmatpush1.bf16.msra.mxu0 0
    %3802 = vmatprep.subr.bf16.mxu0 0
    %3803 = vmatpush1.bf16.msra.mxu0 0
    %3804 = vmatprep.subr.bf16.mxu0 0
    %3805 = vmatpush1.bf16.msra.mxu0 0
    %3806 = vmatprep.subr.bf16.mxu0 0
    %3807 = vmatpush1.bf16.msra.mxu0 0
    %3808 = vmatprep.subr.bf16.mxu0 0
    %3809 = vmatpush1.bf16.msra.mxu0 0
    %3810 = vmatprep.subr.bf16.mxu0 0
    %3811 = vmatpush1.bf16.msra.mxu0 0
    %3812 = vmatprep.subr.bf16.mxu0 0
    %3813 = vmatpush1.bf16.msra.mxu0 0
    %3814 = vmatprep.mubr.bf16.mxu0 0
    %3815 = vmatmul.mubr.bf16.gmra.mrb[0].mxu0 %v3777
    %v3816 = vpop.f32.mrb[0].mxu0
    %v3817 = vadd.f32 0.0, %v3816
    %v3818 = vpop.f32.mrb[0].mxu0
    %v3819 = vadd.f32 0.0, %v3818
    %v3820 = vpop.f32.mrb[0].mxu0
    %v3821 = vadd.f32 0.0, %v3820
    %v3822 = vpop.f32.mrb[0].mxu0
    %v3823 = vadd.f32 0.0, %v3822
    %3824 = vmatprep.mubr.bf16.mxu0 0
    %3825 = vmatmul.mubr.bf16.gmra.mrb[0].mxu0 %v3780
    %v3826 = vpop.f32.mrb[0].mxu0
    %v3827 = vadd.f32 0.0, %v3826
    %v3828 = vpop.f32.mrb[0].mxu0
    %v3829 = vadd.f32 0.0, %v3828
    %v3830 = vpop.f32.mrb[0].mxu0
    %v3831 = vadd.f32 0.0, %v3830
    %v3832 = vpop.f32.mrb[0].mxu0
    %v3833 = vadd.f32 0.0, %v3832
    %3834 = vdwg.mxu0
    %v3835 = vadd.f32 %v3714, %v3817
    %v3836 = vadd.f32 %v3715, %v3819
    %v3837 = vadd.f32 %v3716, %v3821
    %v3838 = vadd.f32 %v3717, %v3823
    %v3839 = vadd.f32 %v3718, %v3827
    %v3840 = vadd.f32 %v3719, %v3829
    %v3841 = vadd.f32 %v3720, %v3831
    %v3842 = vadd.f32 %v3721, %v3833
    %s3843 = scalar_lea.vmem %s3, 1
    %v3844 = vld [vmem:[%s3843] ss:$4 sm:$0x3]
    %v3846 = vlaneseq
    %v3847 = vshrl.u32 %v3846, 7
    %v3848 = vsub.s32 0, %v3847
    %v3849 = vrot.slane %v3844, %v3848
    %v3850 = vlaneseq
    %v3851 = vshrl.u32 %v3850, 7
    %v3852 = vsub.s32 1, %v3851
    %v3853 = vrot.slane %v3844, %v3852
    %v3856 = vadd.f32 %v3835, %v3849
    %v3857 = vadd.f32 %v3836, %v3853
    %v3858 = vadd.f32 %v3837, %v3849
    %v3859 = vadd.f32 %v3838, %v3853
    %v3860 = vadd.f32 %v3839, %v3849
    %v3861 = vadd.f32 %v3840, %v3853
    %v3862 = vadd.f32 %v3841, %v3849
    %v3863 = vadd.f32 %v3842, %v3853
    %v3864 = vmul.f32 %v3856, %v3856
    %v3865 = vmul.f32 %v3857, %v3857
    %v3866 = vmul.f32 %v3858, %v3858
    %v3867 = vmul.f32 %v3859, %v3859
    %v3868 = vmul.f32 %v3860, %v3860
    %v3869 = vmul.f32 %v3861, %v3861
    %v3870 = vmul.f32 %v3862, %v3862
    %v3871 = vmul.f32 %v3863, %v3863
    %v3872 = vmul.f32 %v3856, %v3864
    %v3873 = vmul.f32 %v3857, %v3865
    %v3874 = vmul.f32 %v3858, %v3866
    %v3875 = vmul.f32 %v3859, %v3867
    %v3876 = vmul.f32 %v3860, %v3868
    %v3877 = vmul.f32 %v3861, %v3869
    %v3878 = vmul.f32 %v3862, %v3870
    %v3879 = vmul.f32 %v3863, %v3871
    %v3880 = vmul.f32 %v3872, 0.044715
    %v3881 = vmul.f32 %v3873, 0.044715
    %v3882 = vmul.f32 %v3874, 0.044715
    %v3883 = vmul.f32 %v3875, 0.044715
    %v3884 = vmul.f32 %v3876, 0.044715
    %v3885 = vmul.f32 %v3877, 0.044715
    %v3886 = vmul.f32 %v3878, 0.044715
    %v3887 = vmul.f32 %v3879, 0.044715
    %v3888 = vadd.f32 %v3856, %v3880
    %v3889 = vadd.f32 %v3857, %v3881
    %v3890 = vadd.f32 %v3858, %v3882
    %v3891 = vadd.f32 %v3859, %v3883
    %v3892 = vadd.f32 %v3860, %v3884
    %v3893 = vadd.f32 %v3861, %v3885
    %v3894 = vadd.f32 %v3862, %v3886
    %v3895 = vadd.f32 %v3863, %v3887
    %v3896 = vmul.f32 %v3888, 0.7978846
    %v3897 = vmul.f32 %v3889, 0.7978846
    %v3898 = vmul.f32 %v3890, 0.7978846
    %v3899 = vmul.f32 %v3891, 0.7978846
    %v3900 = vmul.f32 %v3892, 0.7978846
    %v3901 = vmul.f32 %v3893, 0.7978846
    %v3902 = vmul.f32 %v3894, 0.7978846
    %v3903 = vmul.f32 %v3895, 0.7978846
    %v3904 = vtanh.pop %v3896
    %v3905 = vtanh.pop %v3897
    %v3906 = vtanh.pop %v3898
    %v3907 = vtanh.pop %v3899
    %v3908 = vtanh.pop %v3900
    %v3909 = vtanh.pop %v3901
    %v3910 = vtanh.pop %v3902
    %v3911 = vtanh.pop %v3903
    %v3912 = vadd.f32 %v3904, 1.0
    %v3913 = vadd.f32 %v3905, 1.0
    %v3914 = vadd.f32 %v3906, 1.0
    %v3915 = vadd.f32 %v3907, 1.0
    %v3916 = vadd.f32 %v3908, 1.0
    %v3917 = vadd.f32 %v3909, 1.0
    %v3918 = vadd.f32 %v3910, 1.0
    %v3919 = vadd.f32 %v3911, 1.0
    %v3920 = vmul.f32 %v3912, 0.5
    %v3921 = vmul.f32 %v3913, 0.5
    %v3922 = vmul.f32 %v3914, 0.5
    %v3923 = vmul.f32 %v3915, 0.5
    %v3924 = vmul.f32 %v3916, 0.5
    %v3925 = vmul.f32 %v3917, 0.5
    %v3926 = vmul.f32 %v3918, 0.5
    %v3927 = vmul.f32 %v3919, 0.5
    %v3928 = vmul.f32 %v3856, %v3920
    %v3929 = vmul.f32 %v3857, %v3921
    %v3930 = vmul.f32 %v3858, %v3922
    %v3931 = vmul.f32 %v3859, %v3923
    %v3932 = vmul.f32 %v3860, %v3924
    %v3933 = vmul.f32 %v3861, %v3925
    %v3934 = vmul.f32 %v3862, %v3926
    %v3935 = vmul.f32 %v3863, %v3927
    %v3936 = vpack.c.bf16 %v3930, %v3928
    %v3937 = vpack.c.bf16 %v3931, %v3929
    %v3938 = vpack.c.bf16 %v3934, %v3932
    %v3939 = vpack.c.bf16 %v3935, %v3933
    %s3940 = scalar_lea.vmem %s5, 128
    %v3941 = vld [vmem:[%s3940] sm:$0xf]
    %v3942 = vld [vmem:[%s3940 + $0x4] sm:$0xf]
    %v3943 = vld [vmem:[%s3940 + $0x8] sm:$0xf]
    %v3944 = vld [vmem:[%s3940 + $0xc] sm:$0xf]
    %v3945 = vld [vmem:[%s3940 + $0x10] sm:$0xf]
    %v3946 = vld [vmem:[%s3940 + $0x14] sm:$0xf]
    %v3947 = vld [vmem:[%s3940 + $0x18] sm:$0xf]
    %v3948 = vld [vmem:[%s3940 + $0x1c] sm:$0xf]
    %v3949 = vld [vmem:[%s3940 + $0x20] sm:$0xf]
    %v3950 = vld [vmem:[%s3940 + $0x24] sm:$0xf]
    %v3951 = vld [vmem:[%s3940 + $0x28] sm:$0xf]
    %v3952 = vld [vmem:[%s3940 + $0x2c] sm:$0xf]
    %v3953 = vld [vmem:[%s3940 + $0x30] sm:$0xf]
    %v3954 = vld [vmem:[%s3940 + $0x34] sm:$0xf]
    %v3955 = vld [vmem:[%s3940 + $0x38] sm:$0xf]
    %v3956 = vld [vmem:[%s3940 + $0x3c] sm:$0xf]
    %v3957 = vld [vmem:[%s3940 + $0x40] sm:$0xf]
    %v3958 = vld [vmem:[%s3940 + $0x44] sm:$0xf]
    %v3959 = vld [vmem:[%s3940 + $0x48] sm:$0xf]
    %v3960 = vld [vmem:[%s3940 + $0x4c] sm:$0xf]
    %v3961 = vld [vmem:[%s3940 + $0x50] sm:$0xf]
    %v3962 = vld [vmem:[%s3940 + $0x54] sm:$0xf]
    %v3963 = vld [vmem:[%s3940 + $0x58] sm:$0xf]
    %v3964 = vld [vmem:[%s3940 + $0x5c] sm:$0xf]
    %v3965 = vld [vmem:[%s3940 + $0x60] sm:$0xf]
    %v3966 = vld [vmem:[%s3940 + $0x64] sm:$0xf]
    %v3967 = vld [vmem:[%s3940 + $0x68] sm:$0xf]
    %v3968 = vld [vmem:[%s3940 + $0x6c] sm:$0xf]
    %v3969 = vld [vmem:[%s3940 + $0x70] sm:$0xf]
    %v3970 = vld [vmem:[%s3940 + $0x74] sm:$0xf]
    %v3971 = vld [vmem:[%s3940 + $0x78] sm:$0xf]
    %v3972 = vld [vmem:[%s3940 + $0x7c] sm:$0xf]
    %v3973 = vld [vmem:[%s2 + $0x9] sm:$0x1]
    %v3974 = vlaneseq
    %v3975 = vshrl.u32 %v3974, 7
    %v3976 = vsub.s32 0, %v3975
    %v3977 = vrot.slane %v3973, %v3976
    %v4010 = vunpack.c.l.b16 %v3941
    %v4011 = vunpack.c.l.b16 %v3942
    %v4012 = vunpack.c.l.b16 %v3943
    %v4013 = vunpack.c.l.b16 %v3944
    %v4014 = vunpack.c.l.b16 %v3945
    %v4015 = vunpack.c.l.b16 %v3946
    %v4016 = vunpack.c.l.b16 %v3947
    %v4017 = vunpack.c.l.b16 %v3948
    %v4018 = vunpack.c.l.b16 %v3949
    %v4019 = vunpack.c.l.b16 %v3950
    %v4020 = vunpack.c.l.b16 %v3951
    %v4021 = vunpack.c.l.b16 %v3952
    %v4022 = vunpack.c.l.b16 %v3953
    %v4023 = vunpack.c.l.b16 %v3954
    %v4024 = vunpack.c.l.b16 %v3955
    %v4025 = vunpack.c.l.b16 %v3956
    %v4026 = vunpack.c.l.b16 %v3957
    %v4027 = vunpack.c.l.b16 %v3958
    %v4028 = vunpack.c.l.b16 %v3959
    %v4029 = vunpack.c.l.b16 %v3960
    %v4030 = vunpack.c.l.b16 %v3961
    %v4031 = vunpack.c.l.b16 %v3962
    %v4032 = vunpack.c.l.b16 %v3963
    %v4033 = vunpack.c.l.b16 %v3964
    %v4034 = vunpack.c.l.b16 %v3965
    %v4035 = vunpack.c.l.b16 %v3966
    %v4036 = vunpack.c.l.b16 %v3967
    %v4037 = vunpack.c.l.b16 %v3968
    %v4038 = vunpack.c.l.b16 %v3969
    %v4039 = vunpack.c.l.b16 %v3970
    %v4040 = vunpack.c.l.b16 %v3971
    %v4041 = vunpack.c.l.b16 %v3972
    %v4042 = vpack.c.b16 %v4011, %v4010
    %v4043 = vpack.c.b16 %v4013, %v4012
    %v4044 = vpack.c.b16 %v4015, %v4014
    %v4045 = vpack.c.b16 %v4017, %v4016
    %v4046 = vpack.c.b16 %v4019, %v4018
    %v4047 = vpack.c.b16 %v4021, %v4020
    %v4048 = vpack.c.b16 %v4023, %v4022
    %v4049 = vpack.c.b16 %v4025, %v4024
    %v4050 = vpack.c.b16 %v4027, %v4026
    %v4051 = vpack.c.b16 %v4029, %v4028
    %v4052 = vpack.c.b16 %v4031, %v4030
    %v4053 = vpack.c.b16 %v4033, %v4032
    %v4054 = vpack.c.b16 %v4035, %v4034
    %v4055 = vpack.c.b16 %v4037, %v4036
    %v4056 = vpack.c.b16 %v4039, %v4038
    %v4057 = vpack.c.b16 %v4041, %v4040
    %4074 = vmatprep.subr.bf16.mxu0 0
    %4075 = vmatpush1.bf16.msra.mxu0 %v4042
    %4076 = vmatprep.subr.bf16.mxu0 0
    %4077 = vmatpush1.bf16.msra.mxu0 %v4043
    %4078 = vmatprep.subr.bf16.mxu0 0
    %4079 = vmatpush1.bf16.msra.mxu0 %v4044
    %4080 = vmatprep.subr.bf16.mxu0 0
    %4081 = vmatpush1.bf16.msra.mxu0 %v4045
    %4082 = vmatprep.subr.bf16.mxu0 0
    %4083 = vmatpush1.bf16.msra.mxu0 %v4046
    %4084 = vmatprep.subr.bf16.mxu0 0
    %4085 = vmatpush1.bf16.msra.mxu0 %v4047
    %4086 = vmatprep.subr.bf16.mxu0 0
    %4087 = vmatpush1.bf16.msra.mxu0 %v4048
    %4088 = vmatprep.subr.bf16.mxu0 0
    %4089 = vmatpush1.bf16.msra.mxu0 %v4049
    %4090 = vmatprep.subr.bf16.mxu0 0
    %4091 = vmatpush1.bf16.msra.mxu0 %v4050
    %4092 = vmatprep.subr.bf16.mxu0 0
    %4093 = vmatpush1.bf16.msra.mxu0 %v4051
    %4094 = vmatprep.subr.bf16.mxu0 0
    %4095 = vmatpush1.bf16.msra.mxu0 %v4052
    %4096 = vmatprep.subr.bf16.mxu0 0
    %4097 = vmatpush1.bf16.msra.mxu0 %v4053
    %4098 = vmatprep.subr.bf16.mxu0 0
    %4099 = vmatpush1.bf16.msra.mxu0 %v4054
    %4100 = vmatprep.subr.bf16.mxu0 0
    %4101 = vmatpush1.bf16.msra.mxu0 %v4055
    %4102 = vmatprep.subr.bf16.mxu0 0
    %4103 = vmatpush1.bf16.msra.mxu0 %v4056
    %4104 = vmatprep.subr.bf16.mxu0 0
    %4105 = vmatpush1.bf16.msra.mxu0 %v4057
    %4106 = vmatprep.mubr.bf16.mxu0 %v3937
    %4107 = vmatmul.mubr.bf16.gmra.mrb[0].mxu0 %v3936
    %v4108 = vpop.f32.mrb[0].mxu0
    %v4109 = vadd.f32 %v3977, %v4108
    %v4110 = vpop.f32.mrb[0].mxu0
    %v4111 = vpop.f32.mrb[0].mxu0
    %v4112 = vadd.f32 %v3977, %v4111
    %v4113 = vpop.f32.mrb[0].mxu0
    %4114 = vmatprep.mubr.bf16.mxu0 %v3939
    %4115 = vmatmul.mubr.bf16.gmra.mrb[0].mxu0 %v3938
    %v4116 = vpop.f32.mrb[0].mxu0
    %v4117 = vadd.f32 %v3977, %v4116
    %v4118 = vpop.f32.mrb[0].mxu0
    %v4119 = vpop.f32.mrb[0].mxu0
    %v4120 = vadd.f32 %v3977, %v4119
    %v4121 = vpop.f32.mrb[0].mxu0
    %4122 = vdwg.mxu0
    %v4123 = vadd.f32 %v2644, %v4109
    %v4124 = vadd.f32 %v2645, %v4112
    %v4125 = vadd.f32 %v2646, %v4117
    %v4126 = vadd.f32 %v2647, %v4120
    %v4127 = vmul.f32 %v4123, %v33
    %v4128 = vmul.f32 %v4124, %v34
    %v4129 = vmul.f32 %v4125, %v35
    %v4130 = vmul.f32 %v4126, %v36
    %v4131 = vld [vmem:[%s2 + $0xa] sm:$0x1]
    %v4132 = vld [vmem:[%s2 + $0xb] sm:$0x1]
    %v4133 = vsel %vm43, %v4127, 0.0
    %4134 = vadd.xlane.f32.xlu0 %v4133
    %v4135 = vpop.xlane.xlu0 %4134
    %v4136 = vsel %vm43, %v4128, 0.0
    %4137 = vadd.xlane.f32.xlu0 %v4136
    %v4138 = vpop.xlane.xlu0 %4137
    %v4139 = vsel %vm43, %v4129, 0.0
    %4140 = vadd.xlane.f32.xlu0 %v4139
    %v4141 = vpop.xlane.xlu0 %4140
    %v4142 = vsel %vm43, %v4130, 0.0
    %4143 = vadd.xlane.f32.xlu0 %v4142
    %v4144 = vpop.xlane.xlu0 %4143
    %v4145 = vmul.f32 %v4135, %v56
    %v4146 = vmul.f32 %v4138, %v56
    %v4147 = vmul.f32 %v4141, %v56
    %v4148 = vmul.f32 %v4144, %v56
    %v4149 = vsub.f32 %v4127, %v4145
    %v4150 = vsub.f32 %v4128, %v4146
    %v4151 = vsub.f32 %v4129, %v4147
    %v4152 = vsub.f32 %v4130, %v4148
    %v4153 = vmul.f32 %v4149, %v4149
    %v4154 = vmul.f32 %v4150, %v4150
    %v4155 = vmul.f32 %v4151, %v4151
    %v4156 = vmul.f32 %v4152, %v4152
    %v4157 = vsel %vm43, %v4153, 0.0
    %4158 = vadd.xlane.f32.xlu0 %v4157
    %v4159 = vpop.xlane.xlu0 %4158
    %v4160 = vsel %vm43, %v4154, 0.0
    %4161 = vadd.xlane.f32.xlu0 %v4160
    %v4162 = vpop.xlane.xlu0 %4161
    %v4163 = vsel %vm43, %v4155, 0.0
    %4164 = vadd.xlane.f32.xlu0 %v4163
    %v4165 = vpop.xlane.xlu0 %4164
    %v4166 = vsel %vm43, %v4156, 0.0
    %4167 = vadd.xlane.f32.xlu0 %v4166
    %v4168 = vpop.xlane.xlu0 %4167
    %v4169 = vmul.f32 %v4159, %v56
    %v4170 = vmul.f32 %v4162, %v56
    %v4171 = vmul.f32 %v4165, %v56
    %v4172 = vmul.f32 %v4168, %v56
    %v4173 = vadd.f32 %v4169, 1e-05
    %v4174 = vadd.f32 %v4170, 1e-05
    %v4175 = vadd.f32 %v4171, 1e-05
    %v4176 = vadd.f32 %v4172, 1e-05
    %v4177 = vrsqrt.pop %v4173
    %v4178 = vrsqrt.pop %v4174
    %v4179 = vrsqrt.pop %v4175
    %v4180 = vrsqrt.pop %v4176
    %v4181 = vmul.f32 %v4149, %v4177
    %v4182 = vmul.f32 %v4150, %v4178
    %v4183 = vmul.f32 %v4151, %v4179
    %v4184 = vmul.f32 %v4152, %v4180
    %v4185 = vlaneseq
    %v4186 = vshrl.u32 %v4185, 7
    %v4187 = vsub.s32 0, %v4186
    %v4188 = vrot.slane %v4131, %v4187
    %v4189 = vmul.f32 %v4181, %v4188
    %v4190 = vmul.f32 %v4182, %v4188
    %v4191 = vmul.f32 %v4183, %v4188
    %v4192 = vmul.f32 %v4184, %v4188
    %v4193 = vlaneseq
    %v4194 = vshrl.u32 %v4193, 7
    %v4195 = vsub.s32 0, %v4194
    %v4196 = vrot.slane %v4132, %v4195
    %v4197 = vadd.f32 %v4189, %v4196
    %v4198 = vadd.f32 %v4190, %v4196
    %v4199 = vadd.f32 %v4191, %v4196
    %v4200 = vadd.f32 %v4192, %v4196
    %v4201 = vmul.f32 %v4197, %v33
    %v4202 = vmul.f32 %v4198, %v34
    %v4203 = vmul.f32 %v4199, %v35
    %v4204 = vmul.f32 %v4200, %v36
    %v4205 = vpack.c.bf16 %v4202, %v4201
    %v4206 = vpack.c.bf16 %v4204, %v4203
    %v4207 = vld [vmem:[%s6] sm:$0xf]
    %v4208 = vld [vmem:[%s6 + $0x4] sm:$0xf]
    %v4209 = vld [vmem:[%s6 + $0x8] sm:$0xf]
    %v4210 = vld [vmem:[%s6 + $0xc] sm:$0xf]
    %v4211 = vld [vmem:[%s6 + $0x10] sm:$0xf]
    %v4212 = vld [vmem:[%s6 + $0x14] sm:$0xf]
    %v4213 = vld [vmem:[%s6 + $0x18] sm:$0xf]
    %v4214 = vld [vmem:[%s6 + $0x1c] sm:$0xf]
    %v4215 = vld [vmem:[%s3 + $0x2] sm:$0x1]
    %v4216 = vlaneseq
    %v4217 = vshrl.u32 %v4216, 7
    %v4218 = vsub.s32 0, %v4217
    %v4219 = vrot.slane %v4215, %v4218
    %v4228 = vunpack.c.l.b16 %v4207
    %v4229 = vunpack.c.l.b16 %v4208
    %v4230 = vunpack.c.l.b16 %v4209
    %v4231 = vunpack.c.l.b16 %v4210
    %v4232 = vunpack.c.l.b16 %v4211
    %v4233 = vunpack.c.l.b16 %v4212
    %v4234 = vunpack.c.l.b16 %v4213
    %v4235 = vunpack.c.l.b16 %v4214
    %v4236 = vpack.c.b16 %v4229, %v4228
    %v4237 = vpack.c.b16 %v4231, %v4230
    %v4238 = vpack.c.b16 %v4233, %v4232
    %v4239 = vpack.c.b16 %v4235, %v4234
    %v4245 = vsel %vm43, %v4205, 0
    %v4248 = vsel %vm43, %v4206, 0
    %4250 = vmatprep.subr.bf16.mxu0 0
    %4251 = vmatpush1.bf16.msra.mxu0 %v4236
    %4252 = vmatprep.subr.bf16.mxu0 0
    %4253 = vmatpush1.bf16.msra.mxu0 %v4237
    %4254 = vmatprep.subr.bf16.mxu0 0
    %4255 = vmatpush1.bf16.msra.mxu0 %v4238
    %4256 = vmatprep.subr.bf16.mxu0 0
    %4257 = vmatpush1.bf16.msra.mxu0 %v4239
    %4258 = vmatprep.subr.bf16.mxu0 0
    %4259 = vmatpush1.bf16.msra.mxu0 0
    %4260 = vmatprep.subr.bf16.mxu0 0
    %4261 = vmatpush1.bf16.msra.mxu0 0
    %4262 = vmatprep.subr.bf16.mxu0 0
    %4263 = vmatpush1.bf16.msra.mxu0 0
    %4264 = vmatprep.subr.bf16.mxu0 0
    %4265 = vmatpush1.bf16.msra.mxu0 0
    %4266 = vmatprep.subr.bf16.mxu0 0
    %4267 = vmatpush1.bf16.msra.mxu0 0
    %4268 = vmatprep.subr.bf16.mxu0 0
    %4269 = vmatpush1.bf16.msra.mxu0 0
    %4270 = vmatprep.subr.bf16.mxu0 0
    %4271 = vmatpush1.bf16.msra.mxu0 0
    %4272 = vmatprep.subr.bf16.mxu0 0
    %4273 = vmatpush1.bf16.msra.mxu0 0
    %4274 = vmatprep.subr.bf16.mxu0 0
    %4275 = vmatpush1.bf16.msra.mxu0 0
    %4276 = vmatprep.subr.bf16.mxu0 0
    %4277 = vmatpush1.bf16.msra.mxu0 0
    %4278 = vmatprep.subr.bf16.mxu0 0
    %4279 = vmatpush1.bf16.msra.mxu0 0
    %4280 = vmatprep.subr.bf16.mxu0 0
    %4281 = vmatpush1.bf16.msra.mxu0 0
    %4282 = vmatprep.mubr.bf16.mxu0 0
    %4283 = vmatmul.mubr.bf16.gmra.mrb[0].mxu0 %v4245
    %v4284 = vpop.f32.mrb[0].mxu0
    %v4285 = vadd.f32 %v4219, %v4284
    %v4286 = vpop.f32.mrb[0].mxu0
    %v4287 = vpop.f32.mrb[0].mxu0
    %v4288 = vadd.f32 %v4219, %v4287
    %v4289 = vpop.f32.mrb[0].mxu0
    %4290 = vmatprep.mubr.bf16.mxu0 0
    %4291 = vmatmul.mubr.bf16.gmra.mrb[0].mxu0 %v4248
    %v4292 = vpop.f32.mrb[0].mxu0
    %v4293 = vadd.f32 %v4219, %v4292
    %v4294 = vpop.f32.mrb[0].mxu0
    %v4295 = vpop.f32.mrb[0].mxu0
    %v4296 = vadd.f32 %v4219, %v4295
    %v4297 = vpop.f32.mrb[0].mxu0
    %4298 = vdwg.mxu0
    %4299 = vst [vmem:[#allocation2] sm:$0xff] %v4285
    %4300 = vst [vmem:[#allocation2 + $0x8] sm:$0xff] %v4288
    %4301 = vst [vmem:[#allocation2 + $0x10] sm:$0xff] %v4293
    %4302 = vst [vmem:[#allocation2 + $0x18] sm:$0xff] %v4296
    // Predicated region
    $region30: #{_melody_encoder_impl.1} parent=1 // pred_check
      _
    $region31: #{_melody_encoder_impl.1} parent=1 // pred_check_branch
      %4304 = sbr.rel (0) target = $region33
    $region32: #{_melody_encoder_impl.1} parent=1 // pred_region
      %s4306 = ssub.s32 512, 512
      %4307 = vsyncadd [#allocation3], %s4306
      %s4308 = sshll.u32 [#allocation2], 4
      %s4309 = int_to_ptr.vmem [resolvable:$true] %s4308
      %4314 = dma.vmem_to_hbm [thread:$0]  %s4309, 512, %s7, [#allocation3], 128, 128, 8
    $region33: #{_melody_encoder_impl.1} parent=1 // pred_fallthru
      _
    // Predicated region
    $region34: #{_melody_encoder_impl.1} parent=1 // pred_check
      _
    $region35: #{_melody_encoder_impl.1} parent=1 // pred_check_branch
      %4316 = sbr.rel (0) target = $region37
    $region36: #{_melody_encoder_impl.1} parent=1 // pred_region
      %4317 = dma.done [#allocation3], 512
    $region37: #{_melody_encoder_impl.1} parent=1 // pred_fallthru
      _
    %4318 = vsyncpa [#allocation3], 1

</llo_original>
